<compile_context>
chip_gen: v7x
topology: tpu7x:2x2x1
jax: 0.10.0
libtpu: 0.0.40
codegen_flags: <defaults>
</compile_context>

<pallas_src>
import functools

import jax
import jax.numpy as jnp
from jax.experimental import pallas as pl
from jax.experimental.pallas import tpu as pltpu

EPS = 1e-5            # nn.LayerNorm default eps
N_OUT_PAD = 128       # logits padded to a lane-dense 128-wide slab

# Padded per-layer output widths (all multiples of 128 -> lane dense).
PAD_WIDTHS = (512, 256, 128, 128, 128, 128)
# True (un-padded) LayerNorm widths for layers 0..4 (divisors for mean/var).
TRUE_LN_WIDTHS = (512, 256, 128, 64, 32)
# 128-aligned offsets of each layer's bias/gamma/beta in the packed slab.
OFFSETS = (0, 512, 768, 896, 1024, 1152)
VEC_TOTAL = 1280


def _mlp_kernel(x_ref, w1, w2, w3, w4, w5, w6, vec_ref, out_ref, *,
                compute_dtype):
    """Fused 6-layer MLP over one batch tile.

    x_ref   : (tile_b, input_dim) bf16
    w1..w6  : resident bf16 weights, stored [in, out] (padded to lane-dense)
    vec_ref : (3, VEC_TOTAL) f32 slab — row 0 bias, row 1 gamma, row 2 beta
    out_ref : (tile_b, 128) f32 lane-dense output slab
    """
    w_refs = (w1, w2, w3, w4, w5, w6)
    h_mm = x_ref[...]                       # bf16 activation fed to the MXU

    for i in range(6):
        off = OFFSETS[i]
        width = PAD_WIDTHS[i]

        # Linear: bf16 MXU matmul with f32 accumulation, f32 bias add.
        y = jnp.dot(h_mm, w_refs[i][...], preferred_element_type=jnp.float32)
        h = y + vec_ref[0:1, off:off + width]            # f32 (tile_b, width)

        if i < 5:
            # LayerNorm: two independent f32 lane reductions (mu, E[h^2]);
            # padded lanes of h are exactly zero so sums are unaffected and
            # the true width is the correct divisor.
            inv_n = 1.0 / float(TRUE_LN_WIDTHS[i])
            mu = jnp.sum(h, axis=-1, keepdims=True) * inv_n
            m2 = jnp.sum(h * h, axis=-1, keepdims=True) * inv_n
            var = m2 - mu * mu                            # f32 accumulation
            rsq = jax.lax.rsqrt(var + EPS)

            d = (h - mu) * rsq                            # f32 normalize
            # Affine + ReLU in compute_dtype (bf16 on v6e/v7x, f32 on v5e).
            # gamma=0 / beta=0 in padded lanes keeps them exactly zero.
            g = vec_ref[1:2, off:off + width].astype(compute_dtype)
            b = vec_ref[2:3, off:off + width].astype(compute_dtype)
            a = d.astype(compute_dtype) * g + b
            # Dropout layers are identity in eval mode.
            h_mm = jnp.maximum(a, 0).astype(jnp.bfloat16)  # next MXU input
        else:
            out_ref[...] = h.astype(out_ref.dtype)  # unmasked (tile_b,128) vst


def _tpu_config():
    """Generation-aware (tile cap, min parallel steps, vmem limit, bf16 VPU)."""
    try:
        kind = jax.devices()[0].device_kind.lower()
    except Exception:  # pragma: no cover - defensive
        kind = ""
    if "v7" in kind:
        # 64 MiB physical VMEM, 2 TensorCores -> keep >=2 parallel steps.
        return dict(cap=2048, min_steps=2, vmem=48 << 20, bf16_elementwise=True)
    if "v6" in kind:
        return dict(cap=4096, min_steps=1, vmem=96 << 20, bf16_elementwise=True)
    if "v5" in kind:
        # v5e / v5p: 128 MiB VMEM but no bf16 VPU/EUP -> f32 elementwise.
        return dict(cap=4096, min_steps=1, vmem=96 << 20, bf16_elementwise=False)
    # Unknown / older generation: conservative defaults.
    return dict(cap=1024, min_steps=1, vmem=None, bf16_elementwise=False)


def _choose_tile_b(batch, cap, min_steps):
    """Largest 128-multiple tile <= cap that divides `batch` and leaves at
    least `min_steps` grid steps; falls back to a single full-batch tile."""
    cap = min(cap, batch)
    t = (cap // 128) * 128
    while t >= 128:
        if batch % t == 0 and batch // t >= min_steps:
            return t
        t -= 128
    return batch


def classification_model_forward(x, params, n_out, *, tile_b=None):
    """x: [B, input_dim] float array; params: dict from init_params();
    n_out: static Python int (= num_modules + 1)."""
    B, input_dim = x.shape
    cfg = _tpu_config()
    if tile_b is None:
        tile_b = _choose_tile_b(B, cfg["cap"], cfg["min_steps"])
    assert B % tile_b == 0

    weights = [params[f"w{k}"] for k in range(1, 7)]
    vec = params["vec"]

    # Halve streamed input HBM bytes: the kernel feeds the MXU bf16 anyway.
    x_bf16 = x.astype(jnp.bfloat16)

    in_specs = [pl.BlockSpec((tile_b, input_dim), lambda i: (i, 0))]
    in_specs += [pl.BlockSpec(w.shape, lambda i: (0, 0)) for w in weights]
    in_specs += [pl.BlockSpec(vec.shape, lambda i: (0, 0))]
    # Note: weight / vec blocks are grid-invariant (constant index_map) so the
    # pipeline never re-fetches them after the first step.

    kernel = functools.partial(
        _mlp_kernel,
        compute_dtype=jnp.bfloat16 if cfg["bf16_elementwise"] else jnp.float32)

    # Advisory cost estimate so XLA schedules surrounding ops sensibly.
    flops = 2 * B * sum(int(w.shape[0]) * int(w.shape[1]) for w in weights)
    bytes_accessed = (x_bf16.size * 2 + B * N_OUT_PAD * 4
                      + sum(w.size * 2 for w in weights) + vec.size * 4)
    cost = pl.CostEstimate(flops=int(flops), transcendentals=int(5 * B),
                           bytes_accessed=int(bytes_accessed))

    cp_kwargs = dict(dimension_semantics=("parallel",))
    if cfg["vmem"] is not None:
        cp_kwargs["vmem_limit_bytes"] = int(cfg["vmem"])

    out_padded = pl.pallas_call(
        kernel,
        out_shape=jax.ShapeDtypeStruct((B, N_OUT_PAD), jnp.float32),
        grid_spec=pltpu.PrefetchScalarGridSpec(
            num_scalar_prefetch=0,
            grid=(B // tile_b,),
            in_specs=in_specs,
            out_specs=pl.BlockSpec((tile_b, N_OUT_PAD), lambda i: (i, 0)),
        ),
        compiler_params=pltpu.CompilerParams(**cp_kwargs),
        cost_estimate=cost,
    )(x_bf16, *weights, vec)

    return out_padded[:, :n_out]


def init_params(key, input_dim, num_modules):
    """Deterministic synthetic init mirroring the PyTorch module's structure.

    Weights stored pre-transposed as [in, out] in bf16, zero-padded so every
    hidden width is a multiple of 128 (lane-dense).  Biases / LayerNorm
    gamma / beta are packed into an f32 [3, VEC_TOTAL] slab at 128-aligned
    offsets; padded regions hold bias=0, gamma=0, beta=0 so padded lanes stay
    exactly zero through the network.
    """
    n_out = num_modules + 1
    assert n_out <= N_OUT_PAD
    true_in = (input_dim, 512, 256, 128, 64, 32)
    true_out = (512, 256, 128, 64, 32, n_out)
    pad_in = (input_dim,) + PAD_WIDTHS[:-1]

    params = {}
    vec = jnp.zeros((3, VEC_TOTAL), jnp.float32)

    for i in range(6):
        key, kw, kb = jax.random.split(key, 3)
        w = 0.02 * jax.random.normal(kw, (true_in[i], true_out[i]),
                                     dtype=jnp.float32)
        b = 0.02 * jax.random.normal(kb, (true_out[i],), dtype=jnp.float32)
        w = jnp.pad(w, ((0, pad_in[i] - true_in[i]),
                        (0, PAD_WIDTHS[i] - true_out[i])))
        b = jnp.pad(b, (0, PAD_WIDTHS[i] - true_out[i]))
        params[f"w{i + 1}"] = w.astype(jnp.bfloat16)

        off = OFFSETS[i]
        vec = vec.at[0, off:off + PAD_WIDTHS[i]].set(b)
        if i < 5:
            key, kg, kbe = jax.random.split(key, 3)
            g = 1.0 + 0.1 * jax.random.normal(kg, (true_out[i],),
                                              dtype=jnp.float32)
            be = 0.1 * jax.random.normal(kbe, (true_out[i],),
                                         dtype=jnp.float32)
            vec = vec.at[1, off:off + true_out[i]].set(g)   # pad stays 0
            vec = vec.at[2, off:off + true_out[i]].set(be)  # pad stays 0

    params["vec"] = vec
    return params


def _reference_forward(x, params, n_out):
    """Pure-JAX f32 reference (same stored bf16 weights, f32 activations,
    true-width LayerNorm divisors)."""
    vec = params["vec"]
    h = x.astype(jnp.float32)
    for i in range(6):
        w = params[f"w{i + 1}"].astype(jnp.float32)
        off, width = OFFSETS[i], w.shape[1]
        h = h @ w + vec[0, off:off + width]
        if i < 5:
            n_true = float(TRUE_LN_WIDTHS[i])
            mu = jnp.sum(h, axis=-1, keepdims=True) / n_true
            var = jnp.sum(h * h, axis=-1, keepdims=True) / n_true - mu * mu
            h = ((h - mu) * jax.lax.rsqrt(var + EPS)
                 * vec[1, off:off + width] + vec[2, off:off + width])
            h = jnp.maximum(h, 0.0)
    return h[:, :n_out]


if __name__ == "__main__":
    key = jax.random.PRNGKey(0)
    key, kx, kp = jax.random.split(key, 3)

    input_dim = 32
    num_modules = 4      # -> 5 output logits
    n_out = num_modules + 1
    batch = 256          # small demo batch; tile chosen generation-aware

    x = jax.random.normal(kx, (batch, input_dim), dtype=jnp.float32)
    params = init_params(kp, input_dim, num_modules)

    logits = classification_model_forward(x, params, n_out)
    logits = jax.block_until_ready(logits)

    ref = _reference_forward(x, params, n_out)
    assert logits.shape == (batch, n_out)
    max_diff = jnp.max(jnp.abs(logits - ref))
    assert jnp.allclose(logits, ref, atol=5e-2, rtol=5e-2), \
        f"mismatch vs reference, max|diff|={max_diff}"

    print("KERNEL_OK")
</pallas_src>

<mosaic_0001>
module attributes {stable_mosaic.version = 11 : i64} {
  func.func @_mlp_kernel(%arg0: i32, %arg1: memref<256x32xbf16, #tpu.memory_space<vmem>>, %arg2: memref<32x512xbf16, #tpu.memory_space<vmem>>, %arg3: memref<512x256xbf16, #tpu.memory_space<vmem>>, %arg4: memref<256x128xbf16, #tpu.memory_space<vmem>>, %arg5: memref<128x128xbf16, #tpu.memory_space<vmem>>, %arg6: memref<128x128xbf16, #tpu.memory_space<vmem>>, %arg7: memref<128x128xbf16, #tpu.memory_space<vmem>>, %arg8: memref<3x1280xf32, #tpu.memory_space<vmem>>, %arg9: memref<256x128xf32, #tpu.memory_space<vmem>>) attributes {dimension_semantics = [#tpu.dimension_semantics<parallel>], iteration_bounds = array<i64: 1>, scalar_prefetch = 0 : i64, scratch_operands = 0 : i64, tpu.core_type = #tpu.core_type<tc>, window_params = [{transform_indices = @transform_0, window_bounds = array<i64: 256, 32>}, {pipeline_mode = #tpu.pipeline_mode<synchronous>, transform_indices = @transform_1, window_bounds = array<i64: 32, 512>}, {pipeline_mode = #tpu.pipeline_mode<synchronous>, transform_indices = @transform_2, window_bounds = array<i64: 512, 256>}, {pipeline_mode = #tpu.pipeline_mode<synchronous>, transform_indices = @transform_3, window_bounds = array<i64: 256, 128>}, {pipeline_mode = #tpu.pipeline_mode<synchronous>, transform_indices = @transform_4, window_bounds = array<i64: 128, 128>}, {pipeline_mode = #tpu.pipeline_mode<synchronous>, transform_indices = @transform_5, window_bounds = array<i64: 128, 128>}, {pipeline_mode = #tpu.pipeline_mode<synchronous>, transform_indices = @transform_6, window_bounds = array<i64: 128, 128>}, {pipeline_mode = #tpu.pipeline_mode<synchronous>, transform_indices = @transform_7, window_bounds = array<i64: 3, 1280>}, {transform_indices = @transform_8, window_bounds = array<i64: 256, 128>}]} {
    %c0 = arith.constant 0 : index
    %c0_0 = arith.constant 0 : index
    %0 = vector.load %arg1[%c0, %c0_0] : memref<256x32xbf16, #tpu.memory_space<vmem>>, vector<256x32xbf16>
    %c0_1 = arith.constant 0 : index
    %c0_2 = arith.constant 0 : index
    %1 = vector.load %arg2[%c0_1, %c0_2] : memref<32x512xbf16, #tpu.memory_space<vmem>>, vector<32x512xbf16>
    %cst = arith.constant dense<0.000000e+00> : vector<256x512xf32>
    %2 = tpu.matmul %0, %1, %cst {dimension_numbers = #tpu.dot_dimension_numbers<[1], [0], [0], [1], [0, 0, 1, 1], [], []>} : vector<256x32xbf16>, vector<32x512xbf16>, vector<256x512xf32> -> vector<256x512xf32>
    %c0_3 = arith.constant 0 : index
    %c0_4 = arith.constant 0 : index
    %3 = vector.load %arg8[%c0_3, %c0_4] : memref<3x1280xf32, #tpu.memory_space<vmem>>, vector<1x512xf32>
    %4 = vector.broadcast %3 : vector<1x512xf32> to vector<256x512xf32>
    %5 = arith.addf %2, %4 : vector<256x512xf32>
    %cst_5 = arith.constant dense<0.000000e+00> : vector<256xf32>
    %6 = vector.multi_reduction <add>, %5, %cst_5 [1] : vector<256x512xf32> to vector<256xf32>
    %7 = vector.shape_cast %6 : vector<256xf32> to vector<256x1xf32>
    %cst_6 = arith.constant 0.001953125 : f32
    %8 = vector.broadcast %cst_6 : f32 to vector<256x1xf32>
    %9 = arith.mulf %7, %8 : vector<256x1xf32>
    %10 = arith.mulf %5, %5 : vector<256x512xf32>
    %cst_7 = arith.constant dense<0.000000e+00> : vector<256xf32>
    %11 = vector.multi_reduction <add>, %10, %cst_7 [1] : vector<256x512xf32> to vector<256xf32>
    %12 = vector.shape_cast %11 : vector<256xf32> to vector<256x1xf32>
    %cst_8 = arith.constant 0.001953125 : f32
    %13 = vector.broadcast %cst_8 : f32 to vector<256x1xf32>
    %14 = arith.mulf %12, %13 : vector<256x1xf32>
    %15 = arith.mulf %9, %9 : vector<256x1xf32>
    %16 = arith.subf %14, %15 : vector<256x1xf32>
    %cst_9 = arith.constant 9.99999974E-6 : f32
    %17 = vector.broadcast %cst_9 : f32 to vector<256x1xf32>
    %18 = arith.addf %16, %17 : vector<256x1xf32>
    %19 = math.rsqrt %18 : vector<256x1xf32>
    %20 = vector.broadcast %9 : vector<256x1xf32> to vector<256x512xf32>
    %21 = arith.subf %5, %20 : vector<256x512xf32>
    %22 = vector.broadcast %19 : vector<256x1xf32> to vector<256x512xf32>
    %23 = arith.mulf %21, %22 : vector<256x512xf32>
    %c1 = arith.constant 1 : index
    %c0_10 = arith.constant 0 : index
    %24 = vector.load %arg8[%c1, %c0_10] : memref<3x1280xf32, #tpu.memory_space<vmem>>, vector<1x512xf32>
    %c2 = arith.constant 2 : index
    %c0_11 = arith.constant 0 : index
    %25 = vector.load %arg8[%c2, %c0_11] : memref<3x1280xf32, #tpu.memory_space<vmem>>, vector<1x512xf32>
    %26 = vector.broadcast %24 : vector<1x512xf32> to vector<256x512xf32>
    %27 = arith.mulf %23, %26 : vector<256x512xf32>
    %28 = vector.broadcast %25 : vector<1x512xf32> to vector<256x512xf32>
    %29 = arith.addf %27, %28 : vector<256x512xf32>
    %cst_12 = arith.constant 0.000000e+00 : f32
    %30 = vector.broadcast %cst_12 : f32 to vector<256x512xf32>
    %31 = arith.maximumf %29, %30 : vector<256x512xf32>
    %32 = arith.truncf %31 : vector<256x512xf32> to vector<256x512xbf16>
    %c0_13 = arith.constant 0 : index
    %c0_14 = arith.constant 0 : index
    %33 = vector.load %arg3[%c0_13, %c0_14] : memref<512x256xbf16, #tpu.memory_space<vmem>>, vector<512x256xbf16>
    %cst_15 = arith.constant dense<0.000000e+00> : vector<256x256xf32>
    %34 = tpu.matmul %32, %33, %cst_15 {dimension_numbers = #tpu.dot_dimension_numbers<[1], [0], [0], [1], [0, 0, 1, 1], [], []>} : vector<256x512xbf16>, vector<512x256xbf16>, vector<256x256xf32> -> vector<256x256xf32>
    %c0_16 = arith.constant 0 : index
    %c512 = arith.constant 512 : index
    %35 = vector.load %arg8[%c0_16, %c512] : memref<3x1280xf32, #tpu.memory_space<vmem>>, vector<1x256xf32>
    %36 = vector.broadcast %35 : vector<1x256xf32> to vector<256x256xf32>
    %37 = arith.addf %34, %36 : vector<256x256xf32>
    %cst_17 = arith.constant dense<0.000000e+00> : vector<256xf32>
    %38 = vector.multi_reduction <add>, %37, %cst_17 [1] : vector<256x256xf32> to vector<256xf32>
    %39 = vector.shape_cast %38 : vector<256xf32> to vector<256x1xf32>
    %cst_18 = arith.constant 3.906250e-03 : f32
    %40 = vector.broadcast %cst_18 : f32 to vector<256x1xf32>
    %41 = arith.mulf %39, %40 : vector<256x1xf32>
    %42 = arith.mulf %37, %37 : vector<256x256xf32>
    %cst_19 = arith.constant dense<0.000000e+00> : vector<256xf32>
    %43 = vector.multi_reduction <add>, %42, %cst_19 [1] : vector<256x256xf32> to vector<256xf32>
    %44 = vector.shape_cast %43 : vector<256xf32> to vector<256x1xf32>
    %cst_20 = arith.constant 3.906250e-03 : f32
    %45 = vector.broadcast %cst_20 : f32 to vector<256x1xf32>
    %46 = arith.mulf %44, %45 : vector<256x1xf32>
    %47 = arith.mulf %41, %41 : vector<256x1xf32>
    %48 = arith.subf %46, %47 : vector<256x1xf32>
    %cst_21 = arith.constant 9.99999974E-6 : f32
    %49 = vector.broadcast %cst_21 : f32 to vector<256x1xf32>
    %50 = arith.addf %48, %49 : vector<256x1xf32>
    %51 = math.rsqrt %50 : vector<256x1xf32>
    %52 = vector.broadcast %41 : vector<256x1xf32> to vector<256x256xf32>
    %53 = arith.subf %37, %52 : vector<256x256xf32>
    %54 = vector.broadcast %51 : vector<256x1xf32> to vector<256x256xf32>
    %55 = arith.mulf %53, %54 : vector<256x256xf32>
    %c1_22 = arith.constant 1 : index
    %c512_23 = arith.constant 512 : index
    %56 = vector.load %arg8[%c1_22, %c512_23] : memref<3x1280xf32, #tpu.memory_space<vmem>>, vector<1x256xf32>
    %c2_24 = arith.constant 2 : index
    %c512_25 = arith.constant 512 : index
    %57 = vector.load %arg8[%c2_24, %c512_25] : memref<3x1280xf32, #tpu.memory_space<vmem>>, vector<1x256xf32>
    %58 = vector.broadcast %56 : vector<1x256xf32> to vector<256x256xf32>
    %59 = arith.mulf %55, %58 : vector<256x256xf32>
    %60 = vector.broadcast %57 : vector<1x256xf32> to vector<256x256xf32>
    %61 = arith.addf %59, %60 : vector<256x256xf32>
    %cst_26 = arith.constant 0.000000e+00 : f32
    %62 = vector.broadcast %cst_26 : f32 to vector<256x256xf32>
    %63 = arith.maximumf %61, %62 : vector<256x256xf32>
    %64 = arith.truncf %63 : vector<256x256xf32> to vector<256x256xbf16>
    %c0_27 = arith.constant 0 : index
    %c0_28 = arith.constant 0 : index
    %65 = vector.load %arg4[%c0_27, %c0_28] : memref<256x128xbf16, #tpu.memory_space<vmem>>, vector<256x128xbf16>
    %cst_29 = arith.constant dense<0.000000e+00> : vector<256x128xf32>
    %66 = tpu.matmul %64, %65, %cst_29 {dimension_numbers = #tpu.dot_dimension_numbers<[1], [0], [0], [1], [0, 0, 1, 1], [], []>} : vector<256x256xbf16>, vector<256x128xbf16>, vector<256x128xf32> -> vector<256x128xf32>
    %c0_30 = arith.constant 0 : index
    %c768 = arith.constant 768 : index
    %67 = vector.load %arg8[%c0_30, %c768] : memref<3x1280xf32, #tpu.memory_space<vmem>>, vector<1x128xf32>
    %68 = vector.broadcast %67 : vector<1x128xf32> to vector<256x128xf32>
    %69 = arith.addf %66, %68 : vector<256x128xf32>
    %cst_31 = arith.constant dense<0.000000e+00> : vector<256xf32>
    %70 = vector.multi_reduction <add>, %69, %cst_31 [1] : vector<256x128xf32> to vector<256xf32>
    %71 = vector.shape_cast %70 : vector<256xf32> to vector<256x1xf32>
    %cst_32 = arith.constant 7.812500e-03 : f32
    %72 = vector.broadcast %cst_32 : f32 to vector<256x1xf32>
    %73 = arith.mulf %71, %72 : vector<256x1xf32>
    %74 = arith.mulf %69, %69 : vector<256x128xf32>
    %cst_33 = arith.constant dense<0.000000e+00> : vector<256xf32>
    %75 = vector.multi_reduction <add>, %74, %cst_33 [1] : vector<256x128xf32> to vector<256xf32>
    %76 = vector.shape_cast %75 : vector<256xf32> to vector<256x1xf32>
    %cst_34 = arith.constant 7.812500e-03 : f32
    %77 = vector.broadcast %cst_34 : f32 to vector<256x1xf32>
    %78 = arith.mulf %76, %77 : vector<256x1xf32>
    %79 = arith.mulf %73, %73 : vector<256x1xf32>
    %80 = arith.subf %78, %79 : vector<256x1xf32>
    %cst_35 = arith.constant 9.99999974E-6 : f32
    %81 = vector.broadcast %cst_35 : f32 to vector<256x1xf32>
    %82 = arith.addf %80, %81 : vector<256x1xf32>
    %83 = math.rsqrt %82 : vector<256x1xf32>
    %84 = vector.broadcast %73 : vector<256x1xf32> to vector<256x128xf32>
    %85 = arith.subf %69, %84 : vector<256x128xf32>
    %86 = vector.broadcast %83 : vector<256x1xf32> to vector<256x128xf32>
    %87 = arith.mulf %85, %86 : vector<256x128xf32>
    %c1_36 = arith.constant 1 : index
    %c768_37 = arith.constant 768 : index
    %88 = vector.load %arg8[%c1_36, %c768_37] : memref<3x1280xf32, #tpu.memory_space<vmem>>, vector<1x128xf32>
    %c2_38 = arith.constant 2 : index
    %c768_39 = arith.constant 768 : index
    %89 = vector.load %arg8[%c2_38, %c768_39] : memref<3x1280xf32, #tpu.memory_space<vmem>>, vector<1x128xf32>
    %90 = vector.broadcast %88 : vector<1x128xf32> to vector<256x128xf32>
    %91 = arith.mulf %87, %90 : vector<256x128xf32>
    %92 = vector.broadcast %89 : vector<1x128xf32> to vector<256x128xf32>
    %93 = arith.addf %91, %92 : vector<256x128xf32>
    %cst_40 = arith.constant 0.000000e+00 : f32
    %94 = vector.broadcast %cst_40 : f32 to vector<256x128xf32>
    %95 = arith.maximumf %93, %94 : vector<256x128xf32>
    %96 = arith.truncf %95 : vector<256x128xf32> to vector<256x128xbf16>
    %c0_41 = arith.constant 0 : index
    %c0_42 = arith.constant 0 : index
    %97 = vector.load %arg5[%c0_41, %c0_42] : memref<128x128xbf16, #tpu.memory_space<vmem>>, vector<128x128xbf16>
    %cst_43 = arith.constant dense<0.000000e+00> : vector<256x128xf32>
    %98 = tpu.matmul %96, %97, %cst_43 {dimension_numbers = #tpu.dot_dimension_numbers<[1], [0], [0], [1], [0, 0, 1, 1], [], []>} : vector<256x128xbf16>, vector<128x128xbf16>, vector<256x128xf32> -> vector<256x128xf32>
    %c0_44 = arith.constant 0 : index
    %c896 = arith.constant 896 : index
    %99 = vector.load %arg8[%c0_44, %c896] : memref<3x1280xf32, #tpu.memory_space<vmem>>, vector<1x128xf32>
    %100 = vector.broadcast %99 : vector<1x128xf32> to vector<256x128xf32>
    %101 = arith.addf %98, %100 : vector<256x128xf32>
    %cst_45 = arith.constant dense<0.000000e+00> : vector<256xf32>
    %102 = vector.multi_reduction <add>, %101, %cst_45 [1] : vector<256x128xf32> to vector<256xf32>
    %103 = vector.shape_cast %102 : vector<256xf32> to vector<256x1xf32>
    %cst_46 = arith.constant 1.562500e-02 : f32
    %104 = vector.broadcast %cst_46 : f32 to vector<256x1xf32>
    %105 = arith.mulf %103, %104 : vector<256x1xf32>
    %106 = arith.mulf %101, %101 : vector<256x128xf32>
    %cst_47 = arith.constant dense<0.000000e+00> : vector<256xf32>
    %107 = vector.multi_reduction <add>, %106, %cst_47 [1] : vector<256x128xf32> to vector<256xf32>
    %108 = vector.shape_cast %107 : vector<256xf32> to vector<256x1xf32>
    %cst_48 = arith.constant 1.562500e-02 : f32
    %109 = vector.broadcast %cst_48 : f32 to vector<256x1xf32>
    %110 = arith.mulf %108, %109 : vector<256x1xf32>
    %111 = arith.mulf %105, %105 : vector<256x1xf32>
    %112 = arith.subf %110, %111 : vector<256x1xf32>
    %cst_49 = arith.constant 9.99999974E-6 : f32
    %113 = vector.broadcast %cst_49 : f32 to vector<256x1xf32>
    %114 = arith.addf %112, %113 : vector<256x1xf32>
    %115 = math.rsqrt %114 : vector<256x1xf32>
    %116 = vector.broadcast %105 : vector<256x1xf32> to vector<256x128xf32>
    %117 = arith.subf %101, %116 : vector<256x128xf32>
    %118 = vector.broadcast %115 : vector<256x1xf32> to vector<256x128xf32>
    %119 = arith.mulf %117, %118 : vector<256x128xf32>
    %c1_50 = arith.constant 1 : index
    %c896_51 = arith.constant 896 : index
    %120 = vector.load %arg8[%c1_50, %c896_51] : memref<3x1280xf32, #tpu.memory_space<vmem>>, vector<1x128xf32>
    %c2_52 = arith.constant 2 : index
    %c896_53 = arith.constant 896 : index
    %121 = vector.load %arg8[%c2_52, %c896_53] : memref<3x1280xf32, #tpu.memory_space<vmem>>, vector<1x128xf32>
    %122 = vector.broadcast %120 : vector<1x128xf32> to vector<256x128xf32>
    %123 = arith.mulf %119, %122 : vector<256x128xf32>
    %124 = vector.broadcast %121 : vector<1x128xf32> to vector<256x128xf32>
    %125 = arith.addf %123, %124 : vector<256x128xf32>
    %cst_54 = arith.constant 0.000000e+00 : f32
    %126 = vector.broadcast %cst_54 : f32 to vector<256x128xf32>
    %127 = arith.maximumf %125, %126 : vector<256x128xf32>
    %128 = arith.truncf %127 : vector<256x128xf32> to vector<256x128xbf16>
    %c0_55 = arith.constant 0 : index
    %c0_56 = arith.constant 0 : index
    %129 = vector.load %arg6[%c0_55, %c0_56] : memref<128x128xbf16, #tpu.memory_space<vmem>>, vector<128x128xbf16>
    %cst_57 = arith.constant dense<0.000000e+00> : vector<256x128xf32>
    %130 = tpu.matmul %128, %129, %cst_57 {dimension_numbers = #tpu.dot_dimension_numbers<[1], [0], [0], [1], [0, 0, 1, 1], [], []>} : vector<256x128xbf16>, vector<128x128xbf16>, vector<256x128xf32> -> vector<256x128xf32>
    %c0_58 = arith.constant 0 : index
    %c1024 = arith.constant 1024 : index
    %131 = vector.load %arg8[%c0_58, %c1024] : memref<3x1280xf32, #tpu.memory_space<vmem>>, vector<1x128xf32>
    %132 = vector.broadcast %131 : vector<1x128xf32> to vector<256x128xf32>
    %133 = arith.addf %130, %132 : vector<256x128xf32>
    %cst_59 = arith.constant dense<0.000000e+00> : vector<256xf32>
    %134 = vector.multi_reduction <add>, %133, %cst_59 [1] : vector<256x128xf32> to vector<256xf32>
    %135 = vector.shape_cast %134 : vector<256xf32> to vector<256x1xf32>
    %cst_60 = arith.constant 3.125000e-02 : f32
    %136 = vector.broadcast %cst_60 : f32 to vector<256x1xf32>
    %137 = arith.mulf %135, %136 : vector<256x1xf32>
    %138 = arith.mulf %133, %133 : vector<256x128xf32>
    %cst_61 = arith.constant dense<0.000000e+00> : vector<256xf32>
    %139 = vector.multi_reduction <add>, %138, %cst_61 [1] : vector<256x128xf32> to vector<256xf32>
    %140 = vector.shape_cast %139 : vector<256xf32> to vector<256x1xf32>
    %cst_62 = arith.constant 3.125000e-02 : f32
    %141 = vector.broadcast %cst_62 : f32 to vector<256x1xf32>
    %142 = arith.mulf %140, %141 : vector<256x1xf32>
    %143 = arith.mulf %137, %137 : vector<256x1xf32>
    %144 = arith.subf %142, %143 : vector<256x1xf32>
    %cst_63 = arith.constant 9.99999974E-6 : f32
    %145 = vector.broadcast %cst_63 : f32 to vector<256x1xf32>
    %146 = arith.addf %144, %145 : vector<256x1xf32>
    %147 = math.rsqrt %146 : vector<256x1xf32>
    %148 = vector.broadcast %137 : vector<256x1xf32> to vector<256x128xf32>
    %149 = arith.subf %133, %148 : vector<256x128xf32>
    %150 = vector.broadcast %147 : vector<256x1xf32> to vector<256x128xf32>
    %151 = arith.mulf %149, %150 : vector<256x128xf32>
    %c1_64 = arith.constant 1 : index
    %c1024_65 = arith.constant 1024 : index
    %152 = vector.load %arg8[%c1_64, %c1024_65] : memref<3x1280xf32, #tpu.memory_space<vmem>>, vector<1x128xf32>
    %c2_66 = arith.constant 2 : index
    %c1024_67 = arith.constant 1024 : index
    %153 = vector.load %arg8[%c2_66, %c1024_67] : memref<3x1280xf32, #tpu.memory_space<vmem>>, vector<1x128xf32>
    %154 = vector.broadcast %152 : vector<1x128xf32> to vector<256x128xf32>
    %155 = arith.mulf %151, %154 : vector<256x128xf32>
    %156 = vector.broadcast %153 : vector<1x128xf32> to vector<256x128xf32>
    %157 = arith.addf %155, %156 : vector<256x128xf32>
    %cst_68 = arith.constant 0.000000e+00 : f32
    %158 = vector.broadcast %cst_68 : f32 to vector<256x128xf32>
    %159 = arith.maximumf %157, %158 : vector<256x128xf32>
    %160 = arith.truncf %159 : vector<256x128xf32> to vector<256x128xbf16>
    %c0_69 = arith.constant 0 : index
    %c0_70 = arith.constant 0 : index
    %161 = vector.load %arg7[%c0_69, %c0_70] : memref<128x128xbf16, #tpu.memory_space<vmem>>, vector<128x128xbf16>
    %cst_71 = arith.constant dense<0.000000e+00> : vector<256x128xf32>
    %162 = tpu.matmul %160, %161, %cst_71 {dimension_numbers = #tpu.dot_dimension_numbers<[1], [0], [0], [1], [0, 0, 1, 1], [], []>} : vector<256x128xbf16>, vector<128x128xbf16>, vector<256x128xf32> -> vector<256x128xf32>
    %c0_72 = arith.constant 0 : index
    %c1152 = arith.constant 1152 : index
    %163 = vector.load %arg8[%c0_72, %c1152] : memref<3x1280xf32, #tpu.memory_space<vmem>>, vector<1x128xf32>
    %164 = vector.broadcast %163 : vector<1x128xf32> to vector<256x128xf32>
    %165 = arith.addf %162, %164 : vector<256x128xf32>
    %c0_73 = arith.constant 0 : index
    %c0_74 = arith.constant 0 : index
    %166 = vector.load %arg9[%c0_73, %c0_74] : memref<256x128xf32, #tpu.memory_space<vmem>>, vector<256x128xf32>
    tpu.vector_store %arg9[%c0_73, %c0_74], %165 {strides = array<i32>} : memref<256x128xf32, #tpu.memory_space<vmem>>, vector<256x128xf32>,
    return
  }
  func.func @transform_0(%arg0: i32) -> (i32, i32) {
    %c0_i32 = arith.constant 0 : i32
    %c0_i32_0 = arith.constant 0 : i32
    return %arg0, %c0_i32 : i32, i32
  }
  func.func @transform_1(%arg0: i32) -> (i32, i32) {
    %c0_i32 = arith.constant 0 : i32
    %c0_i32_0 = arith.constant 0 : i32
    %c0_i32_1 = arith.constant 0 : i32
    return %c0_i32, %c0_i32_0 : i32, i32
  }
  func.func @transform_2(%arg0: i32) -> (i32, i32) {
    %c0_i32 = arith.constant 0 : i32
    %c0_i32_0 = arith.constant 0 : i32
    %c0_i32_1 = arith.constant 0 : i32
    return %c0_i32, %c0_i32_0 : i32, i32
  }
  func.func @transform_3(%arg0: i32) -> (i32, i32) {
    %c0_i32 = arith.constant 0 : i32
    %c0_i32_0 = arith.constant 0 : i32
    %c0_i32_1 = arith.constant 0 : i32
    return %c0_i32, %c0_i32_0 : i32, i32
  }
  func.func @transform_4(%arg0: i32) -> (i32, i32) {
    %c0_i32 = arith.constant 0 : i32
    %c0_i32_0 = arith.constant 0 : i32
    %c0_i32_1 = arith.constant 0 : i32
    return %c0_i32, %c0_i32_0 : i32, i32
  }
  func.func @transform_5(%arg0: i32) -> (i32, i32) {
    %c0_i32 = arith.constant 0 : i32
    %c0_i32_0 = arith.constant 0 : i32
    %c0_i32_1 = arith.constant 0 : i32
    return %c0_i32, %c0_i32_0 : i32, i32
  }
  func.func @transform_6(%arg0: i32) -> (i32, i32) {
    %c0_i32 = arith.constant 0 : i32
    %c0_i32_0 = arith.constant 0 : i32
    %c0_i32_1 = arith.constant 0 : i32
    return %c0_i32, %c0_i32_0 : i32, i32
  }
  func.func @transform_7(%arg0: i32) -> (i32, i32) {
    %c0_i32 = arith.constant 0 : i32
    %c0_i32_0 = arith.constant 0 : i32
    %c0_i32_1 = arith.constant 0 : i32
    return %c0_i32, %c0_i32_0 : i32, i32
  }
  func.func @transform_8(%arg0: i32) -> (i32, i32) {
    %c0_i32 = arith.constant 0 : i32
    %c0_i32_0 = arith.constant 0 : i32
    return %arg0, %c0_i32 : i32, i32
  }
}

</mosaic_0001>

<llo_original>
// kernel: tpu_custom_call.1
$region0: #{tpu_custom_call.1}
  #allocation0 [shape = 'u32[]', space=smem, size = 0x4, offset = 0x4, fixed_abs, tag = 'smem constant byte address 0x4 - core index']
  #allocation1 [shape = 'u32[144,128]{1,0:T(1,128)}', space=vmem, size = 0x12000, scoped, tag = 'internal scratch']
  %s0 = inlined_call_operand.vmem [shape: bf16[256,32], index: 0, kind: input, shape index: {}]
  %s1 = inlined_call_operand.hbm [shape: bf16[32,512], index: 1, kind: input, shape index: {}]
  %s2 = inlined_call_operand.hbm [shape: bf16[512,256], index: 2, kind: input, shape index: {}]
  %s3 = inlined_call_operand.vmem [shape: bf16[256,128], index: 3, kind: input, shape index: {}]
  %s4 = inlined_call_operand.hbm [shape: bf16[128,128], index: 4, kind: input, shape index: {}]
  %s5 = inlined_call_operand.hbm [shape: bf16[128,128], index: 5, kind: input, shape index: {}]
  %s6 = inlined_call_operand.hbm [shape: bf16[128,128], index: 6, kind: input, shape index: {}]
  %s7 = inlined_call_operand.vmem [shape: f32[3,1280], index: 7, kind: input, shape index: {}]
  %s8 = inlined_call_operand.hbm [shape: f32[256,128], index: 8, kind: output, shape index: {}]
  %s9 = sld [smem:[#allocation0]]
  $region62: #{tpu_custom_call.1} parent=0
    _
  %s11 = ssub.s32 1, %s9
  %s12 = scalar_select 0, %s11, %s9
  $region1: #{tpu_custom_call.1} parent=0
    #allocation2 [shape = 'u8[32768]{0}', space=vmem, size = 0x8000, scoped, tag = 'input window, operand 1, single buffered']
    #allocation3 [shape = 's32[1]{0}', space=sflag, size = 0x4, scoped, tag = 'scoped memory for tpu_custom_call.1']
    #allocation4 [shape = 's32[1]{0}', space=sflag, size = 0x4, scoped, tag = 'scoped memory for tpu_custom_call.1']
    #allocation5 [shape = 'u8[262144]{0}', space=vmem, size = 0x40000, scoped, tag = 'input window, operand 2, single buffered']
    #allocation6 [shape = 's32[1]{0}', space=sflag, size = 0x4, scoped, tag = 'scoped memory for tpu_custom_call.1']
    #allocation7 [shape = 'u8[32768]{0}', space=vmem, size = 0x8000, scoped, tag = 'input window, operand 4, single buffered']
    #allocation8 [shape = 'u8[32768]{0}', space=vmem, size = 0x8000, scoped, tag = 'input window, operand 5, single buffered']
    #allocation9 [shape = 's32[1]{0}', space=sflag, size = 0x4, scoped, tag = 'scoped memory for tpu_custom_call.1']
    #allocation10 [shape = 'u8[32768]{0}', space=vmem, size = 0x8000, scoped, tag = 'input window, operand 6, single buffered']
    #allocation11 [shape = 'u8[131072]{0}', space=vmem, size = 0x20000, scoped, tag = 'output window, operand 0, single buffered']
    %13 = vsyncpa [#allocation3], 0
    %14 = vsyncpa [#allocation6], 0
    %15 = vsyncpa [#allocation9], 0
    %16 = vsyncpa [#allocation4], 0
    // Predicated region
    $region2: #{tpu_custom_call.1} parent=1 // pred_check
      _
    $region3: #{tpu_custom_call.1} parent=1 // pred_check_branch
      %18 = sbr.rel (0) target = $region5
    $region4: #{tpu_custom_call.1} parent=1 // pred_region
      _
    $region5: #{tpu_custom_call.1} parent=1 // pred_fallthru
      _
    // Predicated region
    $region6: #{tpu_custom_call.1} parent=1 // pred_check
      _
    $region7: #{tpu_custom_call.1} parent=1 // pred_check_branch
      %20 = sbr.rel (0) target = $region9
    $region8: #{tpu_custom_call.1} parent=1 // pred_region
      %s22 = ssub.s32 1024, 1024
      %23 = vsyncadd [#allocation3], %s22
      %s24 = sshll.u32 [#allocation2], 4
      %s25 = int_to_ptr.vmem [resolvable:$true] %s24
      %30 = dma.hbm_to_vmem [thread:$0]  %s1, 1024, %s25, [#allocation3], 256, 256, 16
    $region9: #{tpu_custom_call.1} parent=1 // pred_fallthru
      _
    // Predicated region
    $region10: #{tpu_custom_call.1} parent=1 // pred_check
      _
    $region11: #{tpu_custom_call.1} parent=1 // pred_check_branch
      %32 = sbr.rel (0) target = $region13
    $region12: #{tpu_custom_call.1} parent=1 // pred_region
      %s34 = ssub.s32 8192, 8192
      %35 = vsyncadd [#allocation6], %s34
      %s36 = sshll.u32 [#allocation5], 4
      %s37 = int_to_ptr.vmem [resolvable:$true] %s36
      %42 = dma.hbm_to_vmem [thread:$0]  %s2, 8192, %s37, [#allocation6], 128, 128, 8
    $region13: #{tpu_custom_call.1} parent=1 // pred_fallthru
      _
    // Predicated region
    $region14: #{tpu_custom_call.1} parent=1 // pred_check
      _
    $region15: #{tpu_custom_call.1} parent=1 // pred_check_branch
      %44 = sbr.rel (0) target = $region17
    $region16: #{tpu_custom_call.1} parent=1 // pred_region
      _
    $region17: #{tpu_custom_call.1} parent=1 // pred_fallthru
      _
    // Predicated region
    $region18: #{tpu_custom_call.1} parent=1 // pred_check
      _
    $region19: #{tpu_custom_call.1} parent=1 // pred_check_branch
      %46 = sbr.rel (0) target = $region21
    $region20: #{tpu_custom_call.1} parent=1 // pred_region
      %s48 = ssub.s32 1024, 1024
      %49 = vsyncadd [#allocation6], %s48
      %s50 = sshll.u32 [#allocation7], 4
      %s51 = int_to_ptr.vmem [resolvable:$true] %s50
      %56 = dma.hbm_to_vmem [thread:$0]  %s4, 1024, %s51, [#allocation6], 64, 64, 4
    $region21: #{tpu_custom_call.1} parent=1 // pred_fallthru
      _
    // Predicated region
    $region22: #{tpu_custom_call.1} parent=1 // pred_check
      _
    $region23: #{tpu_custom_call.1} parent=1 // pred_check_branch
      %58 = sbr.rel (0) target = $region25
    $region24: #{tpu_custom_call.1} parent=1 // pred_region
      %s60 = ssub.s32 1024, 1024
      %61 = vsyncadd [#allocation9], %s60
      %s62 = sshll.u32 [#allocation8], 4
      %s63 = int_to_ptr.vmem [resolvable:$true] %s62
      %68 = dma.hbm_to_vmem [thread:$0]  %s5, 1024, %s63, [#allocation9], 64, 64, 4
    $region25: #{tpu_custom_call.1} parent=1 // pred_fallthru
      _
    // Predicated region
    $region26: #{tpu_custom_call.1} parent=1 // pred_check
      _
    $region27: #{tpu_custom_call.1} parent=1 // pred_check_branch
      %70 = sbr.rel (0) target = $region29
    $region28: #{tpu_custom_call.1} parent=1 // pred_region
      %s72 = ssub.s32 1024, 1024
      %73 = vsyncadd [#allocation9], %s72
      %s74 = sshll.u32 [#allocation10], 4
      %s75 = int_to_ptr.vmem [resolvable:$true] %s74
      %80 = dma.hbm_to_vmem [thread:$0]  %s6, 1024, %s75, [#allocation9], 64, 64, 4
    $region29: #{tpu_custom_call.1} parent=1 // pred_fallthru
      _
    // Predicated region
    $region30: #{tpu_custom_call.1} parent=1 // pred_check
      _
    $region31: #{tpu_custom_call.1} parent=1 // pred_check_branch
      %82 = sbr.rel (0) target = $region33
    $region32: #{tpu_custom_call.1} parent=1 // pred_region
      _
    $region33: #{tpu_custom_call.1} parent=1 // pred_fallthru
      _
    // Predicated region
    $region34: #{tpu_custom_call.1} parent=1 // pred_check
      _
    $region35: #{tpu_custom_call.1} parent=1 // pred_check_branch
      %84 = sbr.rel (0) target = $region37
    $region36: #{tpu_custom_call.1} parent=1 // pred_region
      %85 = dma.done [#allocation3], 1024
    $region37: #{tpu_custom_call.1} parent=1 // pred_fallthru
      _
    // Predicated region
    $region38: #{tpu_custom_call.1} parent=1 // pred_check
      _
    $region39: #{tpu_custom_call.1} parent=1 // pred_check_branch
      %87 = sbr.rel (0) target = $region41
    $region40: #{tpu_custom_call.1} parent=1 // pred_region
      %88 = dma.done [#allocation6], 8192
    $region41: #{tpu_custom_call.1} parent=1 // pred_fallthru
      _
    // Predicated region
    $region42: #{tpu_custom_call.1} parent=1 // pred_check
      _
    $region43: #{tpu_custom_call.1} parent=1 // pred_check_branch
      %90 = sbr.rel (0) target = $region45
    $region44: #{tpu_custom_call.1} parent=1 // pred_region
      %91 = dma.done [#allocation6], 1024
    $region45: #{tpu_custom_call.1} parent=1 // pred_fallthru
      _
    // Predicated region
    $region46: #{tpu_custom_call.1} parent=1 // pred_check
      _
    $region47: #{tpu_custom_call.1} parent=1 // pred_check_branch
      %93 = sbr.rel (0) target = $region49
    $region48: #{tpu_custom_call.1} parent=1 // pred_region
      %94 = dma.done [#allocation9], 1024
    $region49: #{tpu_custom_call.1} parent=1 // pred_fallthru
      _
    // Predicated region
    $region50: #{tpu_custom_call.1} parent=1 // pred_check
      _
    $region51: #{tpu_custom_call.1} parent=1 // pred_check_branch
      %96 = sbr.rel (0) target = $region53
    $region52: #{tpu_custom_call.1} parent=1 // pred_region
      %97 = dma.done [#allocation9], 1024
    $region53: #{tpu_custom_call.1} parent=1 // pred_fallthru
      _
    %v99 = vld [vmem:[%s0] sm:$0xf]
    %v100 = vld [vmem:[%s0 + $0x4] sm:$0xf]
    %v101 = vld [vmem:[%s0 + $0x8] sm:$0xf]
    %v102 = vld [vmem:[%s0 + $0xc] sm:$0xf]
    %v103 = vld [vmem:[%s0 + $0x10] sm:$0xf]
    %v104 = vld [vmem:[%s0 + $0x14] sm:$0xf]
    %v105 = vld [vmem:[%s0 + $0x18] sm:$0xf]
    %v106 = vld [vmem:[%s0 + $0x1c] sm:$0xf]
    %v107 = vld [vmem:[%s0 + $0x20] sm:$0xf]
    %v108 = vld [vmem:[%s0 + $0x24] sm:$0xf]
    %v109 = vld [vmem:[%s0 + $0x28] sm:$0xf]
    %v110 = vld [vmem:[%s0 + $0x2c] sm:$0xf]
    %v111 = vld [vmem:[%s0 + $0x30] sm:$0xf]
    %v112 = vld [vmem:[%s0 + $0x34] sm:$0xf]
    %v113 = vld [vmem:[%s0 + $0x38] sm:$0xf]
    %v114 = vld [vmem:[%s0 + $0x3c] sm:$0xf]
    %v115 = vld [vmem:[%s0 + $0x40] sm:$0xf]
    %v116 = vld [vmem:[%s0 + $0x44] sm:$0xf]
    %v117 = vld [vmem:[%s0 + $0x48] sm:$0xf]
    %v118 = vld [vmem:[%s0 + $0x4c] sm:$0xf]
    %v119 = vld [vmem:[%s0 + $0x50] sm:$0xf]
    %v120 = vld [vmem:[%s0 + $0x54] sm:$0xf]
    %v121 = vld [vmem:[%s0 + $0x58] sm:$0xf]
    %v122 = vld [vmem:[%s0 + $0x5c] sm:$0xf]
    %v123 = vld [vmem:[%s0 + $0x60] sm:$0xf]
    %v124 = vld [vmem:[%s0 + $0x64] sm:$0xf]
    %v125 = vld [vmem:[%s0 + $0x68] sm:$0xf]
    %v126 = vld [vmem:[%s0 + $0x6c] sm:$0xf]
    %v127 = vld [vmem:[%s0 + $0x70] sm:$0xf]
    %v128 = vld [vmem:[%s0 + $0x74] sm:$0xf]
    %v129 = vld [vmem:[%s0 + $0x78] sm:$0xf]
    %v130 = vld [vmem:[%s0 + $0x7c] sm:$0xf]
    %v131 = vld [vmem:[#allocation2] sm:$0xff]
    %v132 = vld [vmem:[#allocation2 + $0x8] sm:$0xff]
    %v133 = vld [vmem:[#allocation2 + $0x10] sm:$0xff]
    %v134 = vld [vmem:[#allocation2 + $0x18] sm:$0xff]
    %v135 = vld [vmem:[#allocation2 + $0x20] sm:$0xff]
    %v136 = vld [vmem:[#allocation2 + $0x28] sm:$0xff]
    %v137 = vld [vmem:[#allocation2 + $0x30] sm:$0xff]
    %v138 = vld [vmem:[#allocation2 + $0x38] sm:$0xff]
    %v139 = vld [vmem:[%s7] ss:$4 sm:$0xf]
    %v141 = vlaneseq
    %v142 = vshrl.u32 %v141, 7
    %v143 = vsub.s32 0, %v142
    %v144 = vrot.slane %v139, %v143
    %v145 = vlaneseq
    %v146 = vshrl.u32 %v145, 7
    %v147 = vsub.s32 1, %v146
    %v148 = vrot.slane %v139, %v147
    %v149 = vlaneseq
    %v150 = vshrl.u32 %v149, 7
    %v151 = vsub.s32 2, %v150
    %v152 = vrot.slane %v139, %v151
    %v153 = vlaneseq
    %v154 = vshrl.u32 %v153, 7
    %v155 = vsub.s32 3, %v154
    %v156 = vrot.slane %v139, %v155
    %v193 = vunpack.c.l.b16 %v99
    %v194 = vunpack.c.l.b16 %v100
    %v195 = vunpack.c.l.b16 %v101
    %v196 = vunpack.c.l.b16 %v102
    %v197 = vunpack.c.l.b16 %v103
    %v198 = vunpack.c.l.b16 %v104
    %v199 = vunpack.c.l.b16 %v105
    %v200 = vunpack.c.l.b16 %v106
    %v201 = vunpack.c.l.b16 %v107
    %v202 = vunpack.c.l.b16 %v108
    %v203 = vunpack.c.l.b16 %v109
    %v204 = vunpack.c.l.b16 %v110
    %v205 = vunpack.c.l.b16 %v111
    %v206 = vunpack.c.l.b16 %v112
    %v207 = vunpack.c.l.b16 %v113
    %v208 = vunpack.c.l.b16 %v114
    %v209 = vunpack.c.l.b16 %v115
    %v210 = vunpack.c.l.b16 %v116
    %v211 = vunpack.c.l.b16 %v117
    %v212 = vunpack.c.l.b16 %v118
    %v213 = vunpack.c.l.b16 %v119
    %v214 = vunpack.c.l.b16 %v120
    %v215 = vunpack.c.l.b16 %v121
    %v216 = vunpack.c.l.b16 %v122
    %v217 = vunpack.c.l.b16 %v123
    %v218 = vunpack.c.l.b16 %v124
    %v219 = vunpack.c.l.b16 %v125
    %v220 = vunpack.c.l.b16 %v126
    %v221 = vunpack.c.l.b16 %v127
    %v222 = vunpack.c.l.b16 %v128
    %v223 = vunpack.c.l.b16 %v129
    %v224 = vunpack.c.l.b16 %v130
    %v225 = vpack.c.b16 %v194, %v193
    %v226 = vpack.c.b16 %v196, %v195
    %v227 = vpack.c.b16 %v198, %v197
    %v228 = vpack.c.b16 %v200, %v199
    %v229 = vpack.c.b16 %v202, %v201
    %v230 = vpack.c.b16 %v204, %v203
    %v231 = vpack.c.b16 %v206, %v205
    %v232 = vpack.c.b16 %v208, %v207
    %v233 = vpack.c.b16 %v210, %v209
    %v234 = vpack.c.b16 %v212, %v211
    %v235 = vpack.c.b16 %v214, %v213
    %v236 = vpack.c.b16 %v216, %v215
    %v237 = vpack.c.b16 %v218, %v217
    %v238 = vpack.c.b16 %v220, %v219
    %v239 = vpack.c.b16 %v222, %v221
    %v240 = vpack.c.b16 %v224, %v223
    %v249 = vunpack.c.l.b16 %v131
    %v250 = vunpack.c.h.b16 %v131
    %v251 = vunpack.c.l.b16 %v132
    %v252 = vunpack.c.h.b16 %v132
    %v253 = vunpack.c.l.b16 %v133
    %v254 = vunpack.c.h.b16 %v133
    %v255 = vunpack.c.l.b16 %v134
    %v256 = vunpack.c.h.b16 %v134
    %v257 = vunpack.c.l.b16 %v135
    %v258 = vunpack.c.h.b16 %v135
    %v259 = vunpack.c.l.b16 %v136
    %v260 = vunpack.c.h.b16 %v136
    %v261 = vunpack.c.l.b16 %v137
    %v262 = vunpack.c.h.b16 %v137
    %v263 = vunpack.c.l.b16 %v138
    %v264 = vunpack.c.h.b16 %v138
    %v265 = vpack.c.b16 %v253, %v249
    %v266 = vpack.c.b16 %v254, %v250
    %v267 = vpack.c.b16 %v255, %v251
    %v268 = vpack.c.b16 %v256, %v252
    %v269 = vpack.c.b16 %v261, %v257
    %v270 = vpack.c.b16 %v262, %v258
    %v271 = vpack.c.b16 %v263, %v259
    %v272 = vpack.c.b16 %v264, %v260
    %vm281 = vcmask 261120
    %v283 = vsel %vm281, %v225, 0
    %v286 = vsel %vm281, %v226, 0
    %v289 = vsel %vm281, %v227, 0
    %v292 = vsel %vm281, %v228, 0
    %v295 = vsel %vm281, %v229, 0
    %v298 = vsel %vm281, %v230, 0
    %v301 = vsel %vm281, %v231, 0
    %v304 = vsel %vm281, %v232, 0
    %v307 = vsel %vm281, %v233, 0
    %v310 = vsel %vm281, %v234, 0
    %v313 = vsel %vm281, %v235, 0
    %v316 = vsel %vm281, %v236, 0
    %v319 = vsel %vm281, %v237, 0
    %v322 = vsel %vm281, %v238, 0
    %v325 = vsel %vm281, %v239, 0
    %v328 = vsel %vm281, %v240, 0
    %330 = vmatprep.subr.bf16.mxu0 %v266
    %331 = vmatpush1.bf16.msra.mxu0 %v265
    %332 = vmatprep.subr.bf16.mxu0 %v270
    %333 = vmatpush1.bf16.msra.mxu0 %v269
    %334 = vmatprep.subr.bf16.mxu0 0
    %335 = vmatpush1.bf16.msra.mxu0 0
    %336 = vmatprep.subr.bf16.mxu0 0
    %337 = vmatpush1.bf16.msra.mxu0 0
    %338 = vmatprep.subr.bf16.mxu0 0
    %339 = vmatpush1.bf16.msra.mxu0 0
    %340 = vmatprep.subr.bf16.mxu0 0
    %341 = vmatpush1.bf16.msra.mxu0 0
    %342 = vmatprep.subr.bf16.mxu0 0
    %343 = vmatpush1.bf16.msra.mxu0 0
    %344 = vmatprep.subr.bf16.mxu0 0
    %345 = vmatpush1.bf16.msra.mxu0 0
    %346 = vmatprep.subr.bf16.mxu0 0
    %347 = vmatpush1.bf16.msra.mxu0 0
    %348 = vmatprep.subr.bf16.mxu0 0
    %349 = vmatpush1.bf16.msra.mxu0 0
    %350 = vmatprep.subr.bf16.mxu0 0
    %351 = vmatpush1.bf16.msra.mxu0 0
    %352 = vmatprep.subr.bf16.mxu0 0
    %353 = vmatpush1.bf16.msra.mxu0 0
    %354 = vmatprep.subr.bf16.mxu0 0
    %355 = vmatpush1.bf16.msra.mxu0 0
    %356 = vmatprep.subr.bf16.mxu0 0
    %357 = vmatpush1.bf16.msra.mxu0 0
    %358 = vmatprep.subr.bf16.mxu0 0
    %359 = vmatpush1.bf16.msra.mxu0 0
    %360 = vmatprep.subr.bf16.mxu0 0
    %361 = vmatpush1.bf16.msra.mxu0 0
    %362 = vmatprep.mubr.bf16.mxu0 0
    %363 = vmatmul.mubr.bf16.gmra.mrb[0].mxu0 %v283
    %v364 = vpop.f32.mrb[0].mxu0
    %v365 = vadd.f32 %v144, %v364
    %v366 = vpop.f32.mrb[0].mxu0
    %v367 = vadd.f32 %v148, %v366
    %v368 = vpop.f32.mrb[0].mxu0
    %v369 = vadd.f32 %v144, %v368
    %v370 = vpop.f32.mrb[0].mxu0
    %v371 = vadd.f32 %v148, %v370
    %372 = vmatprep.mubr.bf16.mxu0 0
    %373 = vmatmul.mubr.bf16.gmra.mrb[0].mxu0 %v286
    %v374 = vpop.f32.mrb[0].mxu0
    %v375 = vadd.f32 %v144, %v374
    %v376 = vpop.f32.mrb[0].mxu0
    %v377 = vadd.f32 %v148, %v376
    %v378 = vpop.f32.mrb[0].mxu0
    %v379 = vadd.f32 %v144, %v378
    %v380 = vpop.f32.mrb[0].mxu0
    %v381 = vadd.f32 %v148, %v380
    %382 = vmatprep.mubr.bf16.mxu0 0
    %383 = vmatmul.mubr.bf16.gmra.mrb[0].mxu0 %v289
    %v384 = vpop.f32.mrb[0].mxu0
    %v385 = vadd.f32 %v144, %v384
    %v386 = vpop.f32.mrb[0].mxu0
    %v387 = vadd.f32 %v148, %v386
    %v388 = vpop.f32.mrb[0].mxu0
    %v389 = vadd.f32 %v144, %v388
    %v390 = vpop.f32.mrb[0].mxu0
    %v391 = vadd.f32 %v148, %v390
    %392 = vmatprep.mubr.bf16.mxu0 0
    %393 = vmatmul.mubr.bf16.gmra.mrb[0].mxu0 %v292
    %v394 = vpop.f32.mrb[0].mxu0
    %v395 = vadd.f32 %v144, %v394
    %v396 = vpop.f32.mrb[0].mxu0
    %v397 = vadd.f32 %v148, %v396
    %v398 = vpop.f32.mrb[0].mxu0
    %v399 = vadd.f32 %v144, %v398
    %v400 = vpop.f32.mrb[0].mxu0
    %v401 = vadd.f32 %v148, %v400
    %402 = vmatprep.mubr.bf16.mxu0 0
    %403 = vmatmul.mubr.bf16.gmra.mrb[0].mxu0 %v295
    %v404 = vpop.f32.mrb[0].mxu0
    %v405 = vadd.f32 %v144, %v404
    %v406 = vpop.f32.mrb[0].mxu0
    %v407 = vadd.f32 %v148, %v406
    %v408 = vpop.f32.mrb[0].mxu0
    %v409 = vadd.f32 %v144, %v408
    %v410 = vpop.f32.mrb[0].mxu0
    %v411 = vadd.f32 %v148, %v410
    %412 = vmatprep.mubr.bf16.mxu0 0
    %413 = vmatmul.mubr.bf16.gmra.mrb[0].mxu0 %v298
    %v414 = vpop.f32.mrb[0].mxu0
    %v415 = vadd.f32 %v144, %v414
    %v416 = vpop.f32.mrb[0].mxu0
    %v417 = vadd.f32 %v148, %v416
    %v418 = vpop.f32.mrb[0].mxu0
    %v419 = vadd.f32 %v144, %v418
    %v420 = vpop.f32.mrb[0].mxu0
    %v421 = vadd.f32 %v148, %v420
    %422 = vmatprep.mubr.bf16.mxu0 0
    %423 = vmatmul.mubr.bf16.gmra.mrb[0].mxu0 %v301
    %v424 = vpop.f32.mrb[0].mxu0
    %v425 = vadd.f32 %v144, %v424
    %v426 = vpop.f32.mrb[0].mxu0
    %v427 = vadd.f32 %v148, %v426
    %v428 = vpop.f32.mrb[0].mxu0
    %v429 = vadd.f32 %v144, %v428
    %v430 = vpop.f32.mrb[0].mxu0
    %v431 = vadd.f32 %v148, %v430
    %432 = vmatprep.mubr.bf16.mxu0 0
    %433 = vmatmul.mubr.bf16.gmra.mrb[0].mxu0 %v304
    %v434 = vpop.f32.mrb[0].mxu0
    %v435 = vadd.f32 %v144, %v434
    %v436 = vpop.f32.mrb[0].mxu0
    %v437 = vadd.f32 %v148, %v436
    %v438 = vpop.f32.mrb[0].mxu0
    %v439 = vadd.f32 %v144, %v438
    %v440 = vpop.f32.mrb[0].mxu0
    %v441 = vadd.f32 %v148, %v440
    %442 = vmatprep.mubr.bf16.mxu0 0
    %443 = vmatmul.mubr.bf16.gmra.mrb[0].mxu0 %v307
    %v444 = vpop.f32.mrb[0].mxu0
    %v445 = vadd.f32 %v144, %v444
    %v446 = vpop.f32.mrb[0].mxu0
    %v447 = vadd.f32 %v148, %v446
    %v448 = vpop.f32.mrb[0].mxu0
    %v449 = vadd.f32 %v144, %v448
    %v450 = vpop.f32.mrb[0].mxu0
    %v451 = vadd.f32 %v148, %v450
    %452 = vmatprep.mubr.bf16.mxu0 0
    %453 = vmatmul.mubr.bf16.gmra.mrb[0].mxu0 %v310
    %v454 = vpop.f32.mrb[0].mxu0
    %v455 = vadd.f32 %v144, %v454
    %v456 = vpop.f32.mrb[0].mxu0
    %v457 = vadd.f32 %v148, %v456
    %v458 = vpop.f32.mrb[0].mxu0
    %v459 = vadd.f32 %v144, %v458
    %v460 = vpop.f32.mrb[0].mxu0
    %v461 = vadd.f32 %v148, %v460
    %462 = vmatprep.mubr.bf16.mxu0 0
    %463 = vmatmul.mubr.bf16.gmra.mrb[0].mxu0 %v313
    %v464 = vpop.f32.mrb[0].mxu0
    %v465 = vadd.f32 %v144, %v464
    %v466 = vpop.f32.mrb[0].mxu0
    %v467 = vadd.f32 %v148, %v466
    %v468 = vpop.f32.mrb[0].mxu0
    %v469 = vadd.f32 %v144, %v468
    %v470 = vpop.f32.mrb[0].mxu0
    %v471 = vadd.f32 %v148, %v470
    %472 = vmatprep.mubr.bf16.mxu0 0
    %473 = vmatmul.mubr.bf16.gmra.mrb[0].mxu0 %v316
    %v474 = vpop.f32.mrb[0].mxu0
    %v475 = vadd.f32 %v144, %v474
    %v476 = vpop.f32.mrb[0].mxu0
    %v477 = vadd.f32 %v148, %v476
    %v478 = vpop.f32.mrb[0].mxu0
    %v479 = vadd.f32 %v144, %v478
    %v480 = vpop.f32.mrb[0].mxu0
    %v481 = vadd.f32 %v148, %v480
    %482 = vmatprep.mubr.bf16.mxu0 0
    %483 = vmatmul.mubr.bf16.gmra.mrb[0].mxu0 %v319
    %v484 = vpop.f32.mrb[0].mxu0
    %v485 = vadd.f32 %v144, %v484
    %v486 = vpop.f32.mrb[0].mxu0
    %v487 = vadd.f32 %v148, %v486
    %v488 = vpop.f32.mrb[0].mxu0
    %v489 = vadd.f32 %v144, %v488
    %v490 = vpop.f32.mrb[0].mxu0
    %v491 = vadd.f32 %v148, %v490
    %492 = vmatprep.mubr.bf16.mxu0 0
    %493 = vmatmul.mubr.bf16.gmra.mrb[0].mxu0 %v322
    %v494 = vpop.f32.mrb[0].mxu0
    %v495 = vadd.f32 %v144, %v494
    %v496 = vpop.f32.mrb[0].mxu0
    %v497 = vadd.f32 %v148, %v496
    %v498 = vpop.f32.mrb[0].mxu0
    %v499 = vadd.f32 %v144, %v498
    %v500 = vpop.f32.mrb[0].mxu0
    %v501 = vadd.f32 %v148, %v500
    %502 = vmatprep.mubr.bf16.mxu0 0
    %503 = vmatmul.mubr.bf16.gmra.mrb[0].mxu0 %v325
    %v504 = vpop.f32.mrb[0].mxu0
    %v505 = vadd.f32 %v144, %v504
    %v506 = vpop.f32.mrb[0].mxu0
    %v507 = vadd.f32 %v148, %v506
    %v508 = vpop.f32.mrb[0].mxu0
    %v509 = vadd.f32 %v144, %v508
    %v510 = vpop.f32.mrb[0].mxu0
    %v511 = vadd.f32 %v148, %v510
    %512 = vmatprep.mubr.bf16.mxu0 0
    %513 = vmatmul.mubr.bf16.gmra.mrb[0].mxu0 %v328
    %v514 = vpop.f32.mrb[0].mxu0
    %v515 = vadd.f32 %v144, %v514
    %v516 = vpop.f32.mrb[0].mxu0
    %v517 = vadd.f32 %v148, %v516
    %v518 = vpop.f32.mrb[0].mxu0
    %v519 = vadd.f32 %v144, %v518
    %v520 = vpop.f32.mrb[0].mxu0
    %v521 = vadd.f32 %v148, %v520
    %522 = vdwg.mxu0
    %523 = vmatprep.subr.bf16.mxu0 %v268
    %524 = vmatpush1.bf16.msra.mxu0 %v267
    %525 = vmatprep.subr.bf16.mxu0 %v272
    %526 = vmatpush1.bf16.msra.mxu0 %v271
    %527 = vmatprep.subr.bf16.mxu0 0
    %528 = vmatpush1.bf16.msra.mxu0 0
    %529 = vmatprep.subr.bf16.mxu0 0
    %530 = vmatpush1.bf16.msra.mxu0 0
    %531 = vmatprep.subr.bf16.mxu0 0
    %532 = vmatpush1.bf16.msra.mxu0 0
    %533 = vmatprep.subr.bf16.mxu0 0
    %534 = vmatpush1.bf16.msra.mxu0 0
    %535 = vmatprep.subr.bf16.mxu0 0
    %536 = vmatpush1.bf16.msra.mxu0 0
    %537 = vmatprep.subr.bf16.mxu0 0
    %538 = vmatpush1.bf16.msra.mxu0 0
    %539 = vmatprep.subr.bf16.mxu0 0
    %540 = vmatpush1.bf16.msra.mxu0 0
    %541 = vmatprep.subr.bf16.mxu0 0
    %542 = vmatpush1.bf16.msra.mxu0 0
    %543 = vmatprep.subr.bf16.mxu0 0
    %544 = vmatpush1.bf16.msra.mxu0 0
    %545 = vmatprep.subr.bf16.mxu0 0
    %546 = vmatpush1.bf16.msra.mxu0 0
    %547 = vmatprep.subr.bf16.mxu0 0
    %548 = vmatpush1.bf16.msra.mxu0 0
    %549 = vmatprep.subr.bf16.mxu0 0
    %550 = vmatpush1.bf16.msra.mxu0 0
    %551 = vmatprep.subr.bf16.mxu0 0
    %552 = vmatpush1.bf16.msra.mxu0 0
    %553 = vmatprep.subr.bf16.mxu0 0
    %554 = vmatpush1.bf16.msra.mxu0 0
    %555 = vmatprep.mubr.bf16.mxu0 0
    %556 = vmatmul.mubr.bf16.gmra.mrb[0].mxu0 %v283
    %v557 = vpop.f32.mrb[0].mxu0
    %v558 = vadd.f32 %v152, %v557
    %v559 = vpop.f32.mrb[0].mxu0
    %v560 = vadd.f32 %v156, %v559
    %v561 = vpop.f32.mrb[0].mxu0
    %v562 = vadd.f32 %v152, %v561
    %v563 = vpop.f32.mrb[0].mxu0
    %v564 = vadd.f32 %v156, %v563
    %565 = vmatprep.mubr.bf16.mxu0 0
    %566 = vmatmul.mubr.bf16.gmra.mrb[0].mxu0 %v286
    %v567 = vpop.f32.mrb[0].mxu0
    %v568 = vadd.f32 %v152, %v567
    %v569 = vpop.f32.mrb[0].mxu0
    %v570 = vadd.f32 %v156, %v569
    %v571 = vpop.f32.mrb[0].mxu0
    %v572 = vadd.f32 %v152, %v571
    %v573 = vpop.f32.mrb[0].mxu0
    %v574 = vadd.f32 %v156, %v573
    %575 = vmatprep.mubr.bf16.mxu0 0
    %576 = vmatmul.mubr.bf16.gmra.mrb[0].mxu0 %v289
    %v577 = vpop.f32.mrb[0].mxu0
    %v578 = vadd.f32 %v152, %v577
    %v579 = vpop.f32.mrb[0].mxu0
    %v580 = vadd.f32 %v156, %v579
    %v581 = vpop.f32.mrb[0].mxu0
    %v582 = vadd.f32 %v152, %v581
    %v583 = vpop.f32.mrb[0].mxu0
    %v584 = vadd.f32 %v156, %v583
    %585 = vmatprep.mubr.bf16.mxu0 0
    %586 = vmatmul.mubr.bf16.gmra.mrb[0].mxu0 %v292
    %v587 = vpop.f32.mrb[0].mxu0
    %v588 = vadd.f32 %v152, %v587
    %v589 = vpop.f32.mrb[0].mxu0
    %v590 = vadd.f32 %v156, %v589
    %v591 = vpop.f32.mrb[0].mxu0
    %v592 = vadd.f32 %v152, %v591
    %v593 = vpop.f32.mrb[0].mxu0
    %v594 = vadd.f32 %v156, %v593
    %595 = vmatprep.mubr.bf16.mxu0 0
    %596 = vmatmul.mubr.bf16.gmra.mrb[0].mxu0 %v295
    %v597 = vpop.f32.mrb[0].mxu0
    %v598 = vadd.f32 %v152, %v597
    %v599 = vpop.f32.mrb[0].mxu0
    %v600 = vadd.f32 %v156, %v599
    %v601 = vpop.f32.mrb[0].mxu0
    %v602 = vadd.f32 %v152, %v601
    %v603 = vpop.f32.mrb[0].mxu0
    %v604 = vadd.f32 %v156, %v603
    %605 = vmatprep.mubr.bf16.mxu0 0
    %606 = vmatmul.mubr.bf16.gmra.mrb[0].mxu0 %v298
    %v607 = vpop.f32.mrb[0].mxu0
    %v608 = vadd.f32 %v152, %v607
    %v609 = vpop.f32.mrb[0].mxu0
    %v610 = vadd.f32 %v156, %v609
    %v611 = vpop.f32.mrb[0].mxu0
    %v612 = vadd.f32 %v152, %v611
    %v613 = vpop.f32.mrb[0].mxu0
    %v614 = vadd.f32 %v156, %v613
    %615 = vmatprep.mubr.bf16.mxu0 0
    %616 = vmatmul.mubr.bf16.gmra.mrb[0].mxu0 %v301
    %v617 = vpop.f32.mrb[0].mxu0
    %v618 = vadd.f32 %v152, %v617
    %v619 = vpop.f32.mrb[0].mxu0
    %v620 = vadd.f32 %v156, %v619
    %v621 = vpop.f32.mrb[0].mxu0
    %v622 = vadd.f32 %v152, %v621
    %v623 = vpop.f32.mrb[0].mxu0
    %v624 = vadd.f32 %v156, %v623
    %625 = vmatprep.mubr.bf16.mxu0 0
    %626 = vmatmul.mubr.bf16.gmra.mrb[0].mxu0 %v304
    %v627 = vpop.f32.mrb[0].mxu0
    %v628 = vadd.f32 %v152, %v627
    %v629 = vpop.f32.mrb[0].mxu0
    %v630 = vadd.f32 %v156, %v629
    %v631 = vpop.f32.mrb[0].mxu0
    %v632 = vadd.f32 %v152, %v631
    %v633 = vpop.f32.mrb[0].mxu0
    %v634 = vadd.f32 %v156, %v633
    %635 = vmatprep.mubr.bf16.mxu0 0
    %636 = vmatmul.mubr.bf16.gmra.mrb[0].mxu0 %v307
    %v637 = vpop.f32.mrb[0].mxu0
    %v638 = vadd.f32 %v152, %v637
    %v639 = vpop.f32.mrb[0].mxu0
    %v640 = vadd.f32 %v156, %v639
    %v641 = vpop.f32.mrb[0].mxu0
    %v642 = vadd.f32 %v152, %v641
    %v643 = vpop.f32.mrb[0].mxu0
    %v644 = vadd.f32 %v156, %v643
    %645 = vmatprep.mubr.bf16.mxu0 0
    %646 = vmatmul.mubr.bf16.gmra.mrb[0].mxu0 %v310
    %v647 = vpop.f32.mrb[0].mxu0
    %v648 = vadd.f32 %v152, %v647
    %v649 = vpop.f32.mrb[0].mxu0
    %v650 = vadd.f32 %v156, %v649
    %v651 = vpop.f32.mrb[0].mxu0
    %v652 = vadd.f32 %v152, %v651
    %v653 = vpop.f32.mrb[0].mxu0
    %v654 = vadd.f32 %v156, %v653
    %655 = vmatprep.mubr.bf16.mxu0 0
    %656 = vmatmul.mubr.bf16.gmra.mrb[0].mxu0 %v313
    %v657 = vpop.f32.mrb[0].mxu0
    %v658 = vadd.f32 %v152, %v657
    %v659 = vpop.f32.mrb[0].mxu0
    %v660 = vadd.f32 %v156, %v659
    %v661 = vpop.f32.mrb[0].mxu0
    %v662 = vadd.f32 %v152, %v661
    %v663 = vpop.f32.mrb[0].mxu0
    %v664 = vadd.f32 %v156, %v663
    %665 = vmatprep.mubr.bf16.mxu0 0
    %666 = vmatmul.mubr.bf16.gmra.mrb[0].mxu0 %v316
    %v667 = vpop.f32.mrb[0].mxu0
    %v668 = vadd.f32 %v152, %v667
    %v669 = vpop.f32.mrb[0].mxu0
    %v670 = vadd.f32 %v156, %v669
    %v671 = vpop.f32.mrb[0].mxu0
    %v672 = vadd.f32 %v152, %v671
    %v673 = vpop.f32.mrb[0].mxu0
    %v674 = vadd.f32 %v156, %v673
    %675 = vmatprep.mubr.bf16.mxu0 0
    %676 = vmatmul.mubr.bf16.gmra.mrb[0].mxu0 %v319
    %v677 = vpop.f32.mrb[0].mxu0
    %v678 = vadd.f32 %v152, %v677
    %v679 = vpop.f32.mrb[0].mxu0
    %v680 = vadd.f32 %v156, %v679
    %v681 = vpop.f32.mrb[0].mxu0
    %v682 = vadd.f32 %v152, %v681
    %v683 = vpop.f32.mrb[0].mxu0
    %v684 = vadd.f32 %v156, %v683
    %685 = vmatprep.mubr.bf16.mxu0 0
    %686 = vmatmul.mubr.bf16.gmra.mrb[0].mxu0 %v322
    %v687 = vpop.f32.mrb[0].mxu0
    %v688 = vadd.f32 %v152, %v687
    %v689 = vpop.f32.mrb[0].mxu0
    %v690 = vadd.f32 %v156, %v689
    %v691 = vpop.f32.mrb[0].mxu0
    %v692 = vadd.f32 %v152, %v691
    %v693 = vpop.f32.mrb[0].mxu0
    %v694 = vadd.f32 %v156, %v693
    %695 = vmatprep.mubr.bf16.mxu0 0
    %696 = vmatmul.mubr.bf16.gmra.mrb[0].mxu0 %v325
    %v697 = vpop.f32.mrb[0].mxu0
    %v698 = vadd.f32 %v152, %v697
    %v699 = vpop.f32.mrb[0].mxu0
    %v700 = vadd.f32 %v156, %v699
    %v701 = vpop.f32.mrb[0].mxu0
    %v702 = vadd.f32 %v152, %v701
    %v703 = vpop.f32.mrb[0].mxu0
    %v704 = vadd.f32 %v156, %v703
    %705 = vmatprep.mubr.bf16.mxu0 0
    %706 = vmatmul.mubr.bf16.gmra.mrb[0].mxu0 %v328
    %v707 = vpop.f32.mrb[0].mxu0
    %v708 = vadd.f32 %v152, %v707
    %v709 = vpop.f32.mrb[0].mxu0
    %v710 = vadd.f32 %v156, %v709
    %v711 = vpop.f32.mrb[0].mxu0
    %v712 = vadd.f32 %v152, %v711
    %v713 = vpop.f32.mrb[0].mxu0
    %v714 = vadd.f32 %v156, %v713
    %715 = vdwg.mxu0
    %v716 = vadd.f32 %v365, %v367
    %v717 = vadd.f32 %v716, %v558
    %v718 = vadd.f32 %v717, %v560
    %719 = vadd.xlane.f32.xlu0 %v718
    %v720 = vpop.xlane.xlu0 %719
    %v721 = vadd.f32 %v369, %v371
    %v722 = vadd.f32 %v721, %v562
    %v723 = vadd.f32 %v722, %v564
    %724 = vadd.xlane.f32.xlu0 %v723
    %v725 = vpop.xlane.xlu0 %724
    %v726 = vadd.f32 %v375, %v377
    %v727 = vadd.f32 %v726, %v568
    %v728 = vadd.f32 %v727, %v570
    %729 = vadd.xlane.f32.xlu0 %v728
    %v730 = vpop.xlane.xlu0 %729
    %v731 = vadd.f32 %v379, %v381
    %v732 = vadd.f32 %v731, %v572
    %v733 = vadd.f32 %v732, %v574
    %734 = vadd.xlane.f32.xlu0 %v733
    %v735 = vpop.xlane.xlu0 %734
    %v736 = vadd.f32 %v385, %v387
    %v737 = vadd.f32 %v736, %v578
    %v738 = vadd.f32 %v737, %v580
    %739 = vadd.xlane.f32.xlu0 %v738
    %v740 = vpop.xlane.xlu0 %739
    %v741 = vadd.f32 %v389, %v391
    %v742 = vadd.f32 %v741, %v582
    %v743 = vadd.f32 %v742, %v584
    %744 = vadd.xlane.f32.xlu0 %v743
    %v745 = vpop.xlane.xlu0 %744
    %v746 = vadd.f32 %v395, %v397
    %v747 = vadd.f32 %v746, %v588
    %v748 = vadd.f32 %v747, %v590
    %749 = vadd.xlane.f32.xlu0 %v748
    %v750 = vpop.xlane.xlu0 %749
    %v751 = vadd.f32 %v399, %v401
    %v752 = vadd.f32 %v751, %v592
    %v753 = vadd.f32 %v752, %v594
    %754 = vadd.xlane.f32.xlu0 %v753
    %v755 = vpop.xlane.xlu0 %754
    %v756 = vadd.f32 %v405, %v407
    %v757 = vadd.f32 %v756, %v598
    %v758 = vadd.f32 %v757, %v600
    %759 = vadd.xlane.f32.xlu0 %v758
    %v760 = vpop.xlane.xlu0 %759
    %v761 = vadd.f32 %v409, %v411
    %v762 = vadd.f32 %v761, %v602
    %v763 = vadd.f32 %v762, %v604
    %764 = vadd.xlane.f32.xlu0 %v763
    %v765 = vpop.xlane.xlu0 %764
    %v766 = vadd.f32 %v415, %v417
    %v767 = vadd.f32 %v766, %v608
    %v768 = vadd.f32 %v767, %v610
    %769 = vadd.xlane.f32.xlu0 %v768
    %v770 = vpop.xlane.xlu0 %769
    %v771 = vadd.f32 %v419, %v421
    %v772 = vadd.f32 %v771, %v612
    %v773 = vadd.f32 %v772, %v614
    %774 = vadd.xlane.f32.xlu0 %v773
    %v775 = vpop.xlane.xlu0 %774
    %v776 = vadd.f32 %v425, %v427
    %v777 = vadd.f32 %v776, %v618
    %v778 = vadd.f32 %v777, %v620
    %779 = vadd.xlane.f32.xlu0 %v778
    %v780 = vpop.xlane.xlu0 %779
    %v781 = vadd.f32 %v429, %v431
    %v782 = vadd.f32 %v781, %v622
    %v783 = vadd.f32 %v782, %v624
    %784 = vadd.xlane.f32.xlu0 %v783
    %v785 = vpop.xlane.xlu0 %784
    %v786 = vadd.f32 %v435, %v437
    %v787 = vadd.f32 %v786, %v628
    %v788 = vadd.f32 %v787, %v630
    %789 = vadd.xlane.f32.xlu0 %v788
    %v790 = vpop.xlane.xlu0 %789
    %v791 = vadd.f32 %v439, %v441
    %v792 = vadd.f32 %v791, %v632
    %v793 = vadd.f32 %v792, %v634
    %794 = vadd.xlane.f32.xlu0 %v793
    %v795 = vpop.xlane.xlu0 %794
    %v796 = vadd.f32 %v445, %v447
    %v797 = vadd.f32 %v796, %v638
    %v798 = vadd.f32 %v797, %v640
    %799 = vadd.xlane.f32.xlu0 %v798
    %v800 = vpop.xlane.xlu0 %799
    %v801 = vadd.f32 %v449, %v451
    %v802 = vadd.f32 %v801, %v642
    %v803 = vadd.f32 %v802, %v644
    %804 = vadd.xlane.f32.xlu0 %v803
    %v805 = vpop.xlane.xlu0 %804
    %v806 = vadd.f32 %v455, %v457
    %v807 = vadd.f32 %v806, %v648
    %v808 = vadd.f32 %v807, %v650
    %809 = vadd.xlane.f32.xlu0 %v808
    %v810 = vpop.xlane.xlu0 %809
    %v811 = vadd.f32 %v459, %v461
    %v812 = vadd.f32 %v811, %v652
    %v813 = vadd.f32 %v812, %v654
    %814 = vadd.xlane.f32.xlu0 %v813
    %v815 = vpop.xlane.xlu0 %814
    %v816 = vadd.f32 %v465, %v467
    %v817 = vadd.f32 %v816, %v658
    %v818 = vadd.f32 %v817, %v660
    %819 = vadd.xlane.f32.xlu0 %v818
    %v820 = vpop.xlane.xlu0 %819
    %v821 = vadd.f32 %v469, %v471
    %v822 = vadd.f32 %v821, %v662
    %v823 = vadd.f32 %v822, %v664
    %824 = vadd.xlane.f32.xlu0 %v823
    %v825 = vpop.xlane.xlu0 %824
    %v826 = vadd.f32 %v475, %v477
    %v827 = vadd.f32 %v826, %v668
    %v828 = vadd.f32 %v827, %v670
    %829 = vadd.xlane.f32.xlu0 %v828
    %v830 = vpop.xlane.xlu0 %829
    %v831 = vadd.f32 %v479, %v481
    %v832 = vadd.f32 %v831, %v672
    %v833 = vadd.f32 %v832, %v674
    %834 = vadd.xlane.f32.xlu0 %v833
    %v835 = vpop.xlane.xlu0 %834
    %v836 = vadd.f32 %v485, %v487
    %v837 = vadd.f32 %v836, %v678
    %v838 = vadd.f32 %v837, %v680
    %839 = vadd.xlane.f32.xlu0 %v838
    %v840 = vpop.xlane.xlu0 %839
    %v841 = vadd.f32 %v489, %v491
    %v842 = vadd.f32 %v841, %v682
    %v843 = vadd.f32 %v842, %v684
    %844 = vadd.xlane.f32.xlu0 %v843
    %v845 = vpop.xlane.xlu0 %844
    %v846 = vadd.f32 %v495, %v497
    %v847 = vadd.f32 %v846, %v688
    %v848 = vadd.f32 %v847, %v690
    %849 = vadd.xlane.f32.xlu0 %v848
    %v850 = vpop.xlane.xlu0 %849
    %v851 = vadd.f32 %v499, %v501
    %v852 = vadd.f32 %v851, %v692
    %v853 = vadd.f32 %v852, %v694
    %854 = vadd.xlane.f32.xlu0 %v853
    %v855 = vpop.xlane.xlu0 %854
    %v856 = vadd.f32 %v505, %v507
    %v857 = vadd.f32 %v856, %v698
    %v858 = vadd.f32 %v857, %v700
    %859 = vadd.xlane.f32.xlu0 %v858
    %v860 = vpop.xlane.xlu0 %859
    %v861 = vadd.f32 %v509, %v511
    %v862 = vadd.f32 %v861, %v702
    %v863 = vadd.f32 %v862, %v704
    %864 = vadd.xlane.f32.xlu0 %v863
    %v865 = vpop.xlane.xlu0 %864
    %v866 = vadd.f32 %v515, %v517
    %v867 = vadd.f32 %v866, %v708
    %v868 = vadd.f32 %v867, %v710
    %869 = vadd.xlane.f32.xlu0 %v868
    %v870 = vpop.xlane.xlu0 %869
    %v871 = vadd.f32 %v519, %v521
    %v872 = vadd.f32 %v871, %v712
    %v873 = vadd.f32 %v872, %v714
    %874 = vadd.xlane.f32.xlu0 %v873
    %v875 = vpop.xlane.xlu0 %874
    %v876 = vmul.f32 %v720, 0.001953125
    %v877 = vmul.f32 %v725, 0.001953125
    %v878 = vmul.f32 %v730, 0.001953125
    %v879 = vmul.f32 %v735, 0.001953125
    %v880 = vmul.f32 %v740, 0.001953125
    %v881 = vmul.f32 %v745, 0.001953125
    %v882 = vmul.f32 %v750, 0.001953125
    %v883 = vmul.f32 %v755, 0.001953125
    %v884 = vmul.f32 %v760, 0.001953125
    %v885 = vmul.f32 %v765, 0.001953125
    %v886 = vmul.f32 %v770, 0.001953125
    %v887 = vmul.f32 %v775, 0.001953125
    %v888 = vmul.f32 %v780, 0.001953125
    %v889 = vmul.f32 %v785, 0.001953125
    %v890 = vmul.f32 %v790, 0.001953125
    %v891 = vmul.f32 %v795, 0.001953125
    %v892 = vmul.f32 %v800, 0.001953125
    %v893 = vmul.f32 %v805, 0.001953125
    %v894 = vmul.f32 %v810, 0.001953125
    %v895 = vmul.f32 %v815, 0.001953125
    %v896 = vmul.f32 %v820, 0.001953125
    %v897 = vmul.f32 %v825, 0.001953125
    %v898 = vmul.f32 %v830, 0.001953125
    %v899 = vmul.f32 %v835, 0.001953125
    %v900 = vmul.f32 %v840, 0.001953125
    %v901 = vmul.f32 %v845, 0.001953125
    %v902 = vmul.f32 %v850, 0.001953125
    %v903 = vmul.f32 %v855, 0.001953125
    %v904 = vmul.f32 %v860, 0.001953125
    %v905 = vmul.f32 %v865, 0.001953125
    %v906 = vmul.f32 %v870, 0.001953125
    %v907 = vmul.f32 %v875, 0.001953125
    %v908 = vmul.f32 %v365, %v365
    %v909 = vmul.f32 %v367, %v367
    %v910 = vmul.f32 %v558, %v558
    %v911 = vmul.f32 %v560, %v560
    %v912 = vmul.f32 %v369, %v369
    %v913 = vmul.f32 %v371, %v371
    %v914 = vmul.f32 %v562, %v562
    %v915 = vmul.f32 %v564, %v564
    %v916 = vmul.f32 %v375, %v375
    %v917 = vmul.f32 %v377, %v377
    %v918 = vmul.f32 %v568, %v568
    %v919 = vmul.f32 %v570, %v570
    %v920 = vmul.f32 %v379, %v379
    %v921 = vmul.f32 %v381, %v381
    %v922 = vmul.f32 %v572, %v572
    %v923 = vmul.f32 %v574, %v574
    %v924 = vmul.f32 %v385, %v385
    %v925 = vmul.f32 %v387, %v387
    %v926 = vmul.f32 %v578, %v578
    %v927 = vmul.f32 %v580, %v580
    %v928 = vmul.f32 %v389, %v389
    %v929 = vmul.f32 %v391, %v391
    %v930 = vmul.f32 %v582, %v582
    %v931 = vmul.f32 %v584, %v584
    %v932 = vmul.f32 %v395, %v395
    %v933 = vmul.f32 %v397, %v397
    %v934 = vmul.f32 %v588, %v588
    %v935 = vmul.f32 %v590, %v590
    %v936 = vmul.f32 %v399, %v399
    %v937 = vmul.f32 %v401, %v401
    %v938 = vmul.f32 %v592, %v592
    %v939 = vmul.f32 %v594, %v594
    %v940 = vmul.f32 %v405, %v405
    %v941 = vmul.f32 %v407, %v407
    %v942 = vmul.f32 %v598, %v598
    %v943 = vmul.f32 %v600, %v600
    %v944 = vmul.f32 %v409, %v409
    %v945 = vmul.f32 %v411, %v411
    %v946 = vmul.f32 %v602, %v602
    %v947 = vmul.f32 %v604, %v604
    %v948 = vmul.f32 %v415, %v415
    %v949 = vmul.f32 %v417, %v417
    %v950 = vmul.f32 %v608, %v608
    %v951 = vmul.f32 %v610, %v610
    %v952 = vmul.f32 %v419, %v419
    %v953 = vmul.f32 %v421, %v421
    %v954 = vmul.f32 %v612, %v612
    %v955 = vmul.f32 %v614, %v614
    %v956 = vmul.f32 %v425, %v425
    %v957 = vmul.f32 %v427, %v427
    %v958 = vmul.f32 %v618, %v618
    %v959 = vmul.f32 %v620, %v620
    %v960 = vmul.f32 %v429, %v429
    %v961 = vmul.f32 %v431, %v431
    %v962 = vmul.f32 %v622, %v622
    %v963 = vmul.f32 %v624, %v624
    %v964 = vmul.f32 %v435, %v435
    %v965 = vmul.f32 %v437, %v437
    %v966 = vmul.f32 %v628, %v628
    %v967 = vmul.f32 %v630, %v630
    %v968 = vmul.f32 %v439, %v439
    %v969 = vmul.f32 %v441, %v441
    %v970 = vmul.f32 %v632, %v632
    %v971 = vmul.f32 %v634, %v634
    %v972 = vmul.f32 %v445, %v445
    %v973 = vmul.f32 %v447, %v447
    %v974 = vmul.f32 %v638, %v638
    %v975 = vmul.f32 %v640, %v640
    %v976 = vmul.f32 %v449, %v449
    %v977 = vmul.f32 %v451, %v451
    %v978 = vmul.f32 %v642, %v642
    %v979 = vmul.f32 %v644, %v644
    %v980 = vmul.f32 %v455, %v455
    %v981 = vmul.f32 %v457, %v457
    %v982 = vmul.f32 %v648, %v648
    %v983 = vmul.f32 %v650, %v650
    %v984 = vmul.f32 %v459, %v459
    %v985 = vmul.f32 %v461, %v461
    %v986 = vmul.f32 %v652, %v652
    %v987 = vmul.f32 %v654, %v654
    %v988 = vmul.f32 %v465, %v465
    %v989 = vmul.f32 %v467, %v467
    %v990 = vmul.f32 %v658, %v658
    %v991 = vmul.f32 %v660, %v660
    %v992 = vmul.f32 %v469, %v469
    %v993 = vmul.f32 %v471, %v471
    %v994 = vmul.f32 %v662, %v662
    %v995 = vmul.f32 %v664, %v664
    %v996 = vmul.f32 %v475, %v475
    %v997 = vmul.f32 %v477, %v477
    %v998 = vmul.f32 %v668, %v668
    %v999 = vmul.f32 %v670, %v670
    %v1000 = vmul.f32 %v479, %v479
    %v1001 = vmul.f32 %v481, %v481
    %v1002 = vmul.f32 %v672, %v672
    %v1003 = vmul.f32 %v674, %v674
    %v1004 = vmul.f32 %v485, %v485
    %v1005 = vmul.f32 %v487, %v487
    %v1006 = vmul.f32 %v678, %v678
    %v1007 = vmul.f32 %v680, %v680
    %v1008 = vmul.f32 %v489, %v489
    %v1009 = vmul.f32 %v491, %v491
    %v1010 = vmul.f32 %v682, %v682
    %v1011 = vmul.f32 %v684, %v684
    %v1012 = vmul.f32 %v495, %v495
    %v1013 = vmul.f32 %v497, %v497
    %v1014 = vmul.f32 %v688, %v688
    %v1015 = vmul.f32 %v690, %v690
    %v1016 = vmul.f32 %v499, %v499
    %v1017 = vmul.f32 %v501, %v501
    %v1018 = vmul.f32 %v692, %v692
    %v1019 = vmul.f32 %v694, %v694
    %v1020 = vmul.f32 %v505, %v505
    %v1021 = vmul.f32 %v507, %v507
    %v1022 = vmul.f32 %v698, %v698
    %v1023 = vmul.f32 %v700, %v700
    %v1024 = vmul.f32 %v509, %v509
    %v1025 = vmul.f32 %v511, %v511
    %v1026 = vmul.f32 %v702, %v702
    %v1027 = vmul.f32 %v704, %v704
    %v1028 = vmul.f32 %v515, %v515
    %v1029 = vmul.f32 %v517, %v517
    %v1030 = vmul.f32 %v708, %v708
    %v1031 = vmul.f32 %v710, %v710
    %v1032 = vmul.f32 %v519, %v519
    %v1033 = vmul.f32 %v521, %v521
    %v1034 = vmul.f32 %v712, %v712
    %v1035 = vmul.f32 %v714, %v714
    %v1036 = vadd.f32 %v908, %v909
    %v1037 = vadd.f32 %v1036, %v910
    %v1038 = vadd.f32 %v1037, %v911
    %1039 = vadd.xlane.f32.xlu0 %v1038
    %v1040 = vpop.xlane.xlu0 %1039
    %v1041 = vadd.f32 %v912, %v913
    %v1042 = vadd.f32 %v1041, %v914
    %v1043 = vadd.f32 %v1042, %v915
    %1044 = vadd.xlane.f32.xlu0 %v1043
    %v1045 = vpop.xlane.xlu0 %1044
    %v1046 = vadd.f32 %v916, %v917
    %v1047 = vadd.f32 %v1046, %v918
    %v1048 = vadd.f32 %v1047, %v919
    %1049 = vadd.xlane.f32.xlu0 %v1048
    %v1050 = vpop.xlane.xlu0 %1049
    %v1051 = vadd.f32 %v920, %v921
    %v1052 = vadd.f32 %v1051, %v922
    %v1053 = vadd.f32 %v1052, %v923
    %1054 = vadd.xlane.f32.xlu0 %v1053
    %v1055 = vpop.xlane.xlu0 %1054
    %v1056 = vadd.f32 %v924, %v925
    %v1057 = vadd.f32 %v1056, %v926
    %v1058 = vadd.f32 %v1057, %v927
    %1059 = vadd.xlane.f32.xlu0 %v1058
    %v1060 = vpop.xlane.xlu0 %1059
    %v1061 = vadd.f32 %v928, %v929
    %v1062 = vadd.f32 %v1061, %v930
    %v1063 = vadd.f32 %v1062, %v931
    %1064 = vadd.xlane.f32.xlu0 %v1063
    %v1065 = vpop.xlane.xlu0 %1064
    %v1066 = vadd.f32 %v932, %v933
    %v1067 = vadd.f32 %v1066, %v934
    %v1068 = vadd.f32 %v1067, %v935
    %1069 = vadd.xlane.f32.xlu0 %v1068
    %v1070 = vpop.xlane.xlu0 %1069
    %v1071 = vadd.f32 %v936, %v937
    %v1072 = vadd.f32 %v1071, %v938
    %v1073 = vadd.f32 %v1072, %v939
    %1074 = vadd.xlane.f32.xlu0 %v1073
    %v1075 = vpop.xlane.xlu0 %1074
    %v1076 = vadd.f32 %v940, %v941
    %v1077 = vadd.f32 %v1076, %v942
    %v1078 = vadd.f32 %v1077, %v943
    %1079 = vadd.xlane.f32.xlu0 %v1078
    %v1080 = vpop.xlane.xlu0 %1079
    %v1081 = vadd.f32 %v944, %v945
    %v1082 = vadd.f32 %v1081, %v946
    %v1083 = vadd.f32 %v1082, %v947
    %1084 = vadd.xlane.f32.xlu0 %v1083
    %v1085 = vpop.xlane.xlu0 %1084
    %v1086 = vadd.f32 %v948, %v949
    %v1087 = vadd.f32 %v1086, %v950
    %v1088 = vadd.f32 %v1087, %v951
    %1089 = vadd.xlane.f32.xlu0 %v1088
    %v1090 = vpop.xlane.xlu0 %1089
    %v1091 = vadd.f32 %v952, %v953
    %v1092 = vadd.f32 %v1091, %v954
    %v1093 = vadd.f32 %v1092, %v955
    %1094 = vadd.xlane.f32.xlu0 %v1093
    %v1095 = vpop.xlane.xlu0 %1094
    %v1096 = vadd.f32 %v956, %v957
    %v1097 = vadd.f32 %v1096, %v958
    %v1098 = vadd.f32 %v1097, %v959
    %1099 = vadd.xlane.f32.xlu0 %v1098
    %v1100 = vpop.xlane.xlu0 %1099
    %v1101 = vadd.f32 %v960, %v961
    %v1102 = vadd.f32 %v1101, %v962
    %v1103 = vadd.f32 %v1102, %v963
    %1104 = vadd.xlane.f32.xlu0 %v1103
    %v1105 = vpop.xlane.xlu0 %1104
    %v1106 = vadd.f32 %v964, %v965
    %v1107 = vadd.f32 %v1106, %v966
    %v1108 = vadd.f32 %v1107, %v967
    %1109 = vadd.xlane.f32.xlu0 %v1108
    %v1110 = vpop.xlane.xlu0 %1109
    %v1111 = vadd.f32 %v968, %v969
    %v1112 = vadd.f32 %v1111, %v970
    %v1113 = vadd.f32 %v1112, %v971
    %1114 = vadd.xlane.f32.xlu0 %v1113
    %v1115 = vpop.xlane.xlu0 %1114
    %v1116 = vadd.f32 %v972, %v973
    %v1117 = vadd.f32 %v1116, %v974
    %v1118 = vadd.f32 %v1117, %v975
    %1119 = vadd.xlane.f32.xlu0 %v1118
    %v1120 = vpop.xlane.xlu0 %1119
    %v1121 = vadd.f32 %v976, %v977
    %v1122 = vadd.f32 %v1121, %v978
    %v1123 = vadd.f32 %v1122, %v979
    %1124 = vadd.xlane.f32.xlu0 %v1123
    %v1125 = vpop.xlane.xlu0 %1124
    %v1126 = vadd.f32 %v980, %v981
    %v1127 = vadd.f32 %v1126, %v982
    %v1128 = vadd.f32 %v1127, %v983
    %1129 = vadd.xlane.f32.xlu0 %v1128
    %v1130 = vpop.xlane.xlu0 %1129
    %v1131 = vadd.f32 %v984, %v985
    %v1132 = vadd.f32 %v1131, %v986
    %v1133 = vadd.f32 %v1132, %v987
    %1134 = vadd.xlane.f32.xlu0 %v1133
    %v1135 = vpop.xlane.xlu0 %1134
    %v1136 = vadd.f32 %v988, %v989
    %v1137 = vadd.f32 %v1136, %v990
    %v1138 = vadd.f32 %v1137, %v991
    %1139 = vadd.xlane.f32.xlu0 %v1138
    %v1140 = vpop.xlane.xlu0 %1139
    %v1141 = vadd.f32 %v992, %v993
    %v1142 = vadd.f32 %v1141, %v994
    %v1143 = vadd.f32 %v1142, %v995
    %1144 = vadd.xlane.f32.xlu0 %v1143
    %v1145 = vpop.xlane.xlu0 %1144
    %v1146 = vadd.f32 %v996, %v997
    %v1147 = vadd.f32 %v1146, %v998
    %v1148 = vadd.f32 %v1147, %v999
    %1149 = vadd.xlane.f32.xlu0 %v1148
    %v1150 = vpop.xlane.xlu0 %1149
    %v1151 = vadd.f32 %v1000, %v1001
    %v1152 = vadd.f32 %v1151, %v1002
    %v1153 = vadd.f32 %v1152, %v1003
    %1154 = vadd.xlane.f32.xlu0 %v1153
    %v1155 = vpop.xlane.xlu0 %1154
    %v1156 = vadd.f32 %v1004, %v1005
    %v1157 = vadd.f32 %v1156, %v1006
    %v1158 = vadd.f32 %v1157, %v1007
    %1159 = vadd.xlane.f32.xlu0 %v1158
    %v1160 = vpop.xlane.xlu0 %1159
    %v1161 = vadd.f32 %v1008, %v1009
    %v1162 = vadd.f32 %v1161, %v1010
    %v1163 = vadd.f32 %v1162, %v1011
    %1164 = vadd.xlane.f32.xlu0 %v1163
    %v1165 = vpop.xlane.xlu0 %1164
    %v1166 = vadd.f32 %v1012, %v1013
    %v1167 = vadd.f32 %v1166, %v1014
    %v1168 = vadd.f32 %v1167, %v1015
    %1169 = vadd.xlane.f32.xlu0 %v1168
    %v1170 = vpop.xlane.xlu0 %1169
    %v1171 = vadd.f32 %v1016, %v1017
    %v1172 = vadd.f32 %v1171, %v1018
    %v1173 = vadd.f32 %v1172, %v1019
    %1174 = vadd.xlane.f32.xlu0 %v1173
    %v1175 = vpop.xlane.xlu0 %1174
    %v1176 = vadd.f32 %v1020, %v1021
    %v1177 = vadd.f32 %v1176, %v1022
    %v1178 = vadd.f32 %v1177, %v1023
    %1179 = vadd.xlane.f32.xlu0 %v1178
    %v1180 = vpop.xlane.xlu0 %1179
    %v1181 = vadd.f32 %v1024, %v1025
    %v1182 = vadd.f32 %v1181, %v1026
    %v1183 = vadd.f32 %v1182, %v1027
    %1184 = vadd.xlane.f32.xlu0 %v1183
    %v1185 = vpop.xlane.xlu0 %1184
    %v1186 = vadd.f32 %v1028, %v1029
    %v1187 = vadd.f32 %v1186, %v1030
    %v1188 = vadd.f32 %v1187, %v1031
    %1189 = vadd.xlane.f32.xlu0 %v1188
    %v1190 = vpop.xlane.xlu0 %1189
    %v1191 = vadd.f32 %v1032, %v1033
    %v1192 = vadd.f32 %v1191, %v1034
    %v1193 = vadd.f32 %v1192, %v1035
    %1194 = vadd.xlane.f32.xlu0 %v1193
    %v1195 = vpop.xlane.xlu0 %1194
    %v1196 = vmul.f32 %v1040, 0.001953125
    %v1197 = vmul.f32 %v1045, 0.001953125
    %v1198 = vmul.f32 %v1050, 0.001953125
    %v1199 = vmul.f32 %v1055, 0.001953125
    %v1200 = vmul.f32 %v1060, 0.001953125
    %v1201 = vmul.f32 %v1065, 0.001953125
    %v1202 = vmul.f32 %v1070, 0.001953125
    %v1203 = vmul.f32 %v1075, 0.001953125
    %v1204 = vmul.f32 %v1080, 0.001953125
    %v1205 = vmul.f32 %v1085, 0.001953125
    %v1206 = vmul.f32 %v1090, 0.001953125
    %v1207 = vmul.f32 %v1095, 0.001953125
    %v1208 = vmul.f32 %v1100, 0.001953125
    %v1209 = vmul.f32 %v1105, 0.001953125
    %v1210 = vmul.f32 %v1110, 0.001953125
    %v1211 = vmul.f32 %v1115, 0.001953125
    %v1212 = vmul.f32 %v1120, 0.001953125
    %v1213 = vmul.f32 %v1125, 0.001953125
    %v1214 = vmul.f32 %v1130, 0.001953125
    %v1215 = vmul.f32 %v1135, 0.001953125
    %v1216 = vmul.f32 %v1140, 0.001953125
    %v1217 = vmul.f32 %v1145, 0.001953125
    %v1218 = vmul.f32 %v1150, 0.001953125
    %v1219 = vmul.f32 %v1155, 0.001953125
    %v1220 = vmul.f32 %v1160, 0.001953125
    %v1221 = vmul.f32 %v1165, 0.001953125
    %v1222 = vmul.f32 %v1170, 0.001953125
    %v1223 = vmul.f32 %v1175, 0.001953125
    %v1224 = vmul.f32 %v1180, 0.001953125
    %v1225 = vmul.f32 %v1185, 0.001953125
    %v1226 = vmul.f32 %v1190, 0.001953125
    %v1227 = vmul.f32 %v1195, 0.001953125
    %v1228 = vmul.f32 %v876, %v876
    %v1229 = vmul.f32 %v877, %v877
    %v1230 = vmul.f32 %v878, %v878
    %v1231 = vmul.f32 %v879, %v879
    %v1232 = vmul.f32 %v880, %v880
    %v1233 = vmul.f32 %v881, %v881
    %v1234 = vmul.f32 %v882, %v882
    %v1235 = vmul.f32 %v883, %v883
    %v1236 = vmul.f32 %v884, %v884
    %v1237 = vmul.f32 %v885, %v885
    %v1238 = vmul.f32 %v886, %v886
    %v1239 = vmul.f32 %v887, %v887
    %v1240 = vmul.f32 %v888, %v888
    %v1241 = vmul.f32 %v889, %v889
    %v1242 = vmul.f32 %v890, %v890
    %v1243 = vmul.f32 %v891, %v891
    %v1244 = vmul.f32 %v892, %v892
    %v1245 = vmul.f32 %v893, %v893
    %v1246 = vmul.f32 %v894, %v894
    %v1247 = vmul.f32 %v895, %v895
    %v1248 = vmul.f32 %v896, %v896
    %v1249 = vmul.f32 %v897, %v897
    %v1250 = vmul.f32 %v898, %v898
    %v1251 = vmul.f32 %v899, %v899
    %v1252 = vmul.f32 %v900, %v900
    %v1253 = vmul.f32 %v901, %v901
    %v1254 = vmul.f32 %v902, %v902
    %v1255 = vmul.f32 %v903, %v903
    %v1256 = vmul.f32 %v904, %v904
    %v1257 = vmul.f32 %v905, %v905
    %v1258 = vmul.f32 %v906, %v906
    %v1259 = vmul.f32 %v907, %v907
    %v1260 = vsub.f32 %v1196, %v1228
    %v1261 = vsub.f32 %v1197, %v1229
    %v1262 = vsub.f32 %v1198, %v1230
    %v1263 = vsub.f32 %v1199, %v1231
    %v1264 = vsub.f32 %v1200, %v1232
    %v1265 = vsub.f32 %v1201, %v1233
    %v1266 = vsub.f32 %v1202, %v1234
    %v1267 = vsub.f32 %v1203, %v1235
    %v1268 = vsub.f32 %v1204, %v1236
    %v1269 = vsub.f32 %v1205, %v1237
    %v1270 = vsub.f32 %v1206, %v1238
    %v1271 = vsub.f32 %v1207, %v1239
    %v1272 = vsub.f32 %v1208, %v1240
    %v1273 = vsub.f32 %v1209, %v1241
    %v1274 = vsub.f32 %v1210, %v1242
    %v1275 = vsub.f32 %v1211, %v1243
    %v1276 = vsub.f32 %v1212, %v1244
    %v1277 = vsub.f32 %v1213, %v1245
    %v1278 = vsub.f32 %v1214, %v1246
    %v1279 = vsub.f32 %v1215, %v1247
    %v1280 = vsub.f32 %v1216, %v1248
    %v1281 = vsub.f32 %v1217, %v1249
    %v1282 = vsub.f32 %v1218, %v1250
    %v1283 = vsub.f32 %v1219, %v1251
    %v1284 = vsub.f32 %v1220, %v1252
    %v1285 = vsub.f32 %v1221, %v1253
    %v1286 = vsub.f32 %v1222, %v1254
    %v1287 = vsub.f32 %v1223, %v1255
    %v1288 = vsub.f32 %v1224, %v1256
    %v1289 = vsub.f32 %v1225, %v1257
    %v1290 = vsub.f32 %v1226, %v1258
    %v1291 = vsub.f32 %v1227, %v1259
    %v1292 = vadd.f32 %v1260, 1e-05
    %v1293 = vadd.f32 %v1261, 1e-05
    %v1294 = vadd.f32 %v1262, 1e-05
    %v1295 = vadd.f32 %v1263, 1e-05
    %v1296 = vadd.f32 %v1264, 1e-05
    %v1297 = vadd.f32 %v1265, 1e-05
    %v1298 = vadd.f32 %v1266, 1e-05
    %v1299 = vadd.f32 %v1267, 1e-05
    %v1300 = vadd.f32 %v1268, 1e-05
    %v1301 = vadd.f32 %v1269, 1e-05
    %v1302 = vadd.f32 %v1270, 1e-05
    %v1303 = vadd.f32 %v1271, 1e-05
    %v1304 = vadd.f32 %v1272, 1e-05
    %v1305 = vadd.f32 %v1273, 1e-05
    %v1306 = vadd.f32 %v1274, 1e-05
    %v1307 = vadd.f32 %v1275, 1e-05
    %v1308 = vadd.f32 %v1276, 1e-05
    %v1309 = vadd.f32 %v1277, 1e-05
    %v1310 = vadd.f32 %v1278, 1e-05
    %v1311 = vadd.f32 %v1279, 1e-05
    %v1312 = vadd.f32 %v1280, 1e-05
    %v1313 = vadd.f32 %v1281, 1e-05
    %v1314 = vadd.f32 %v1282, 1e-05
    %v1315 = vadd.f32 %v1283, 1e-05
    %v1316 = vadd.f32 %v1284, 1e-05
    %v1317 = vadd.f32 %v1285, 1e-05
    %v1318 = vadd.f32 %v1286, 1e-05
    %v1319 = vadd.f32 %v1287, 1e-05
    %v1320 = vadd.f32 %v1288, 1e-05
    %v1321 = vadd.f32 %v1289, 1e-05
    %v1322 = vadd.f32 %v1290, 1e-05
    %v1323 = vadd.f32 %v1291, 1e-05
    %v1324 = vrsqrt.pop %v1292
    %v1325 = vrsqrt.pop %v1293
    %v1326 = vrsqrt.pop %v1294
    %v1327 = vrsqrt.pop %v1295
    %v1328 = vrsqrt.pop %v1296
    %v1329 = vrsqrt.pop %v1297
    %v1330 = vrsqrt.pop %v1298
    %v1331 = vrsqrt.pop %v1299
    %v1332 = vrsqrt.pop %v1300
    %v1333 = vrsqrt.pop %v1301
    %v1334 = vrsqrt.pop %v1302
    %v1335 = vrsqrt.pop %v1303
    %v1336 = vrsqrt.pop %v1304
    %v1337 = vrsqrt.pop %v1305
    %v1338 = vrsqrt.pop %v1306
    %v1339 = vrsqrt.pop %v1307
    %v1340 = vrsqrt.pop %v1308
    %v1341 = vrsqrt.pop %v1309
    %v1342 = vrsqrt.pop %v1310
    %v1343 = vrsqrt.pop %v1311
    %v1344 = vrsqrt.pop %v1312
    %v1345 = vrsqrt.pop %v1313
    %v1346 = vrsqrt.pop %v1314
    %v1347 = vrsqrt.pop %v1315
    %v1348 = vrsqrt.pop %v1316
    %v1349 = vrsqrt.pop %v1317
    %v1350 = vrsqrt.pop %v1318
    %v1351 = vrsqrt.pop %v1319
    %v1352 = vrsqrt.pop %v1320
    %v1353 = vrsqrt.pop %v1321
    %v1354 = vrsqrt.pop %v1322
    %v1355 = vrsqrt.pop %v1323
    %v1356 = vsub.f32 %v365, %v876
    %v1357 = vsub.f32 %v367, %v876
    %v1358 = vsub.f32 %v558, %v876
    %v1359 = vsub.f32 %v560, %v876
    %v1360 = vsub.f32 %v369, %v877
    %v1361 = vsub.f32 %v371, %v877
    %v1362 = vsub.f32 %v562, %v877
    %v1363 = vsub.f32 %v564, %v877
    %v1364 = vsub.f32 %v375, %v878
    %v1365 = vsub.f32 %v377, %v878
    %v1366 = vsub.f32 %v568, %v878
    %v1367 = vsub.f32 %v570, %v878
    %v1368 = vsub.f32 %v379, %v879
    %v1369 = vsub.f32 %v381, %v879
    %v1370 = vsub.f32 %v572, %v879
    %v1371 = vsub.f32 %v574, %v879
    %v1372 = vsub.f32 %v385, %v880
    %v1373 = vsub.f32 %v387, %v880
    %v1374 = vsub.f32 %v578, %v880
    %v1375 = vsub.f32 %v580, %v880
    %v1376 = vsub.f32 %v389, %v881
    %v1377 = vsub.f32 %v391, %v881
    %v1378 = vsub.f32 %v582, %v881
    %v1379 = vsub.f32 %v584, %v881
    %v1380 = vsub.f32 %v395, %v882
    %v1381 = vsub.f32 %v397, %v882
    %v1382 = vsub.f32 %v588, %v882
    %v1383 = vsub.f32 %v590, %v882
    %v1384 = vsub.f32 %v399, %v883
    %v1385 = vsub.f32 %v401, %v883
    %v1386 = vsub.f32 %v592, %v883
    %v1387 = vsub.f32 %v594, %v883
    %v1388 = vsub.f32 %v405, %v884
    %v1389 = vsub.f32 %v407, %v884
    %v1390 = vsub.f32 %v598, %v884
    %v1391 = vsub.f32 %v600, %v884
    %v1392 = vsub.f32 %v409, %v885
    %v1393 = vsub.f32 %v411, %v885
    %v1394 = vsub.f32 %v602, %v885
    %v1395 = vsub.f32 %v604, %v885
    %v1396 = vsub.f32 %v415, %v886
    %v1397 = vsub.f32 %v417, %v886
    %v1398 = vsub.f32 %v608, %v886
    %v1399 = vsub.f32 %v610, %v886
    %v1400 = vsub.f32 %v419, %v887
    %v1401 = vsub.f32 %v421, %v887
    %v1402 = vsub.f32 %v612, %v887
    %v1403 = vsub.f32 %v614, %v887
    %v1404 = vsub.f32 %v425, %v888
    %v1405 = vsub.f32 %v427, %v888
    %v1406 = vsub.f32 %v618, %v888
    %v1407 = vsub.f32 %v620, %v888
    %v1408 = vsub.f32 %v429, %v889
    %v1409 = vsub.f32 %v431, %v889
    %v1410 = vsub.f32 %v622, %v889
    %v1411 = vsub.f32 %v624, %v889
    %v1412 = vsub.f32 %v435, %v890
    %v1413 = vsub.f32 %v437, %v890
    %v1414 = vsub.f32 %v628, %v890
    %v1415 = vsub.f32 %v630, %v890
    %v1416 = vsub.f32 %v439, %v891
    %v1417 = vsub.f32 %v441, %v891
    %v1418 = vsub.f32 %v632, %v891
    %v1419 = vsub.f32 %v634, %v891
    %v1420 = vsub.f32 %v445, %v892
    %v1421 = vsub.f32 %v447, %v892
    %v1422 = vsub.f32 %v638, %v892
    %v1423 = vsub.f32 %v640, %v892
    %v1424 = vsub.f32 %v449, %v893
    %v1425 = vsub.f32 %v451, %v893
    %v1426 = vsub.f32 %v642, %v893
    %v1427 = vsub.f32 %v644, %v893
    %v1428 = vsub.f32 %v455, %v894
    %v1429 = vsub.f32 %v457, %v894
    %v1430 = vsub.f32 %v648, %v894
    %v1431 = vsub.f32 %v650, %v894
    %v1432 = vsub.f32 %v459, %v895
    %v1433 = vsub.f32 %v461, %v895
    %v1434 = vsub.f32 %v652, %v895
    %v1435 = vsub.f32 %v654, %v895
    %v1436 = vsub.f32 %v465, %v896
    %v1437 = vsub.f32 %v467, %v896
    %v1438 = vsub.f32 %v658, %v896
    %v1439 = vsub.f32 %v660, %v896
    %v1440 = vsub.f32 %v469, %v897
    %v1441 = vsub.f32 %v471, %v897
    %v1442 = vsub.f32 %v662, %v897
    %v1443 = vsub.f32 %v664, %v897
    %v1444 = vsub.f32 %v475, %v898
    %v1445 = vsub.f32 %v477, %v898
    %v1446 = vsub.f32 %v668, %v898
    %v1447 = vsub.f32 %v670, %v898
    %v1448 = vsub.f32 %v479, %v899
    %v1449 = vsub.f32 %v481, %v899
    %v1450 = vsub.f32 %v672, %v899
    %v1451 = vsub.f32 %v674, %v899
    %v1452 = vsub.f32 %v485, %v900
    %v1453 = vsub.f32 %v487, %v900
    %v1454 = vsub.f32 %v678, %v900
    %v1455 = vsub.f32 %v680, %v900
    %v1456 = vsub.f32 %v489, %v901
    %v1457 = vsub.f32 %v491, %v901
    %v1458 = vsub.f32 %v682, %v901
    %v1459 = vsub.f32 %v684, %v901
    %v1460 = vsub.f32 %v495, %v902
    %v1461 = vsub.f32 %v497, %v902
    %v1462 = vsub.f32 %v688, %v902
    %v1463 = vsub.f32 %v690, %v902
    %v1464 = vsub.f32 %v499, %v903
    %v1465 = vsub.f32 %v501, %v903
    %v1466 = vsub.f32 %v692, %v903
    %v1467 = vsub.f32 %v694, %v903
    %v1468 = vsub.f32 %v505, %v904
    %v1469 = vsub.f32 %v507, %v904
    %v1470 = vsub.f32 %v698, %v904
    %v1471 = vsub.f32 %v700, %v904
    %v1472 = vsub.f32 %v509, %v905
    %v1473 = vsub.f32 %v511, %v905
    %v1474 = vsub.f32 %v702, %v905
    %v1475 = vsub.f32 %v704, %v905
    %v1476 = vsub.f32 %v515, %v906
    %v1477 = vsub.f32 %v517, %v906
    %v1478 = vsub.f32 %v708, %v906
    %v1479 = vsub.f32 %v710, %v906
    %v1480 = vsub.f32 %v519, %v907
    %v1481 = vsub.f32 %v521, %v907
    %v1482 = vsub.f32 %v712, %v907
    %v1483 = vsub.f32 %v714, %v907
    %v1484 = vmul.f32 %v1356, %v1324
    %v1485 = vmul.f32 %v1357, %v1324
    %v1486 = vmul.f32 %v1358, %v1324
    %v1487 = vmul.f32 %v1359, %v1324
    %v1488 = vmul.f32 %v1360, %v1325
    %v1489 = vmul.f32 %v1361, %v1325
    %v1490 = vmul.f32 %v1362, %v1325
    %v1491 = vmul.f32 %v1363, %v1325
    %v1492 = vmul.f32 %v1364, %v1326
    %v1493 = vmul.f32 %v1365, %v1326
    %v1494 = vmul.f32 %v1366, %v1326
    %v1495 = vmul.f32 %v1367, %v1326
    %v1496 = vmul.f32 %v1368, %v1327
    %v1497 = vmul.f32 %v1369, %v1327
    %v1498 = vmul.f32 %v1370, %v1327
    %v1499 = vmul.f32 %v1371, %v1327
    %v1500 = vmul.f32 %v1372, %v1328
    %v1501 = vmul.f32 %v1373, %v1328
    %v1502 = vmul.f32 %v1374, %v1328
    %v1503 = vmul.f32 %v1375, %v1328
    %v1504 = vmul.f32 %v1376, %v1329
    %v1505 = vmul.f32 %v1377, %v1329
    %v1506 = vmul.f32 %v1378, %v1329
    %v1507 = vmul.f32 %v1379, %v1329
    %v1508 = vmul.f32 %v1380, %v1330
    %v1509 = vmul.f32 %v1381, %v1330
    %v1510 = vmul.f32 %v1382, %v1330
    %v1511 = vmul.f32 %v1383, %v1330
    %v1512 = vmul.f32 %v1384, %v1331
    %v1513 = vmul.f32 %v1385, %v1331
    %v1514 = vmul.f32 %v1386, %v1331
    %v1515 = vmul.f32 %v1387, %v1331
    %v1516 = vmul.f32 %v1388, %v1332
    %v1517 = vmul.f32 %v1389, %v1332
    %v1518 = vmul.f32 %v1390, %v1332
    %v1519 = vmul.f32 %v1391, %v1332
    %v1520 = vmul.f32 %v1392, %v1333
    %v1521 = vmul.f32 %v1393, %v1333
    %v1522 = vmul.f32 %v1394, %v1333
    %v1523 = vmul.f32 %v1395, %v1333
    %v1524 = vmul.f32 %v1396, %v1334
    %v1525 = vmul.f32 %v1397, %v1334
    %v1526 = vmul.f32 %v1398, %v1334
    %v1527 = vmul.f32 %v1399, %v1334
    %v1528 = vmul.f32 %v1400, %v1335
    %v1529 = vmul.f32 %v1401, %v1335
    %v1530 = vmul.f32 %v1402, %v1335
    %v1531 = vmul.f32 %v1403, %v1335
    %v1532 = vmul.f32 %v1404, %v1336
    %v1533 = vmul.f32 %v1405, %v1336
    %v1534 = vmul.f32 %v1406, %v1336
    %v1535 = vmul.f32 %v1407, %v1336
    %v1536 = vmul.f32 %v1408, %v1337
    %v1537 = vmul.f32 %v1409, %v1337
    %v1538 = vmul.f32 %v1410, %v1337
    %v1539 = vmul.f32 %v1411, %v1337
    %v1540 = vmul.f32 %v1412, %v1338
    %v1541 = vmul.f32 %v1413, %v1338
    %v1542 = vmul.f32 %v1414, %v1338
    %v1543 = vmul.f32 %v1415, %v1338
    %v1544 = vmul.f32 %v1416, %v1339
    %v1545 = vmul.f32 %v1417, %v1339
    %v1546 = vmul.f32 %v1418, %v1339
    %v1547 = vmul.f32 %v1419, %v1339
    %v1548 = vmul.f32 %v1420, %v1340
    %v1549 = vmul.f32 %v1421, %v1340
    %v1550 = vmul.f32 %v1422, %v1340
    %v1551 = vmul.f32 %v1423, %v1340
    %v1552 = vmul.f32 %v1424, %v1341
    %v1553 = vmul.f32 %v1425, %v1341
    %v1554 = vmul.f32 %v1426, %v1341
    %v1555 = vmul.f32 %v1427, %v1341
    %v1556 = vmul.f32 %v1428, %v1342
    %v1557 = vmul.f32 %v1429, %v1342
    %v1558 = vmul.f32 %v1430, %v1342
    %v1559 = vmul.f32 %v1431, %v1342
    %v1560 = vmul.f32 %v1432, %v1343
    %v1561 = vmul.f32 %v1433, %v1343
    %v1562 = vmul.f32 %v1434, %v1343
    %v1563 = vmul.f32 %v1435, %v1343
    %v1564 = vmul.f32 %v1436, %v1344
    %v1565 = vmul.f32 %v1437, %v1344
    %v1566 = vmul.f32 %v1438, %v1344
    %v1567 = vmul.f32 %v1439, %v1344
    %v1568 = vmul.f32 %v1440, %v1345
    %v1569 = vmul.f32 %v1441, %v1345
    %v1570 = vmul.f32 %v1442, %v1345
    %v1571 = vmul.f32 %v1443, %v1345
    %v1572 = vmul.f32 %v1444, %v1346
    %v1573 = vmul.f32 %v1445, %v1346
    %v1574 = vmul.f32 %v1446, %v1346
    %v1575 = vmul.f32 %v1447, %v1346
    %v1576 = vmul.f32 %v1448, %v1347
    %v1577 = vmul.f32 %v1449, %v1347
    %v1578 = vmul.f32 %v1450, %v1347
    %v1579 = vmul.f32 %v1451, %v1347
    %v1580 = vmul.f32 %v1452, %v1348
    %v1581 = vmul.f32 %v1453, %v1348
    %v1582 = vmul.f32 %v1454, %v1348
    %v1583 = vmul.f32 %v1455, %v1348
    %v1584 = vmul.f32 %v1456, %v1349
    %v1585 = vmul.f32 %v1457, %v1349
    %v1586 = vmul.f32 %v1458, %v1349
    %v1587 = vmul.f32 %v1459, %v1349
    %v1588 = vmul.f32 %v1460, %v1350
    %v1589 = vmul.f32 %v1461, %v1350
    %v1590 = vmul.f32 %v1462, %v1350
    %v1591 = vmul.f32 %v1463, %v1350
    %v1592 = vmul.f32 %v1464, %v1351
    %v1593 = vmul.f32 %v1465, %v1351
    %v1594 = vmul.f32 %v1466, %v1351
    %v1595 = vmul.f32 %v1467, %v1351
    %v1596 = vmul.f32 %v1468, %v1352
    %v1597 = vmul.f32 %v1469, %v1352
    %v1598 = vmul.f32 %v1470, %v1352
    %v1599 = vmul.f32 %v1471, %v1352
    %v1600 = vmul.f32 %v1472, %v1353
    %v1601 = vmul.f32 %v1473, %v1353
    %v1602 = vmul.f32 %v1474, %v1353
    %v1603 = vmul.f32 %v1475, %v1353
    %v1604 = vmul.f32 %v1476, %v1354
    %v1605 = vmul.f32 %v1477, %v1354
    %v1606 = vmul.f32 %v1478, %v1354
    %v1607 = vmul.f32 %v1479, %v1354
    %v1608 = vmul.f32 %v1480, %v1355
    %v1609 = vmul.f32 %v1481, %v1355
    %v1610 = vmul.f32 %v1482, %v1355
    %v1611 = vmul.f32 %v1483, %v1355
    %s1612 = scalar_lea.vmem %s7, 1
    %v1613 = vld [vmem:[%s1612] ss:$4 sm:$0xf]
    %s1614 = scalar_lea.vmem %s7, 2
    %v1615 = vld [vmem:[%s1614] ss:$4 sm:$0xf]
    %v1617 = vlaneseq
    %v1618 = vshrl.u32 %v1617, 7
    %v1619 = vsub.s32 0, %v1618
    %v1620 = vrot.slane %v1613, %v1619
    %v1621 = vlaneseq
    %v1622 = vshrl.u32 %v1621, 7
    %v1623 = vsub.s32 1, %v1622
    %v1624 = vrot.slane %v1613, %v1623
    %v1625 = vlaneseq
    %v1626 = vshrl.u32 %v1625, 7
    %v1627 = vsub.s32 2, %v1626
    %v1628 = vrot.slane %v1613, %v1627
    %v1629 = vlaneseq
    %v1630 = vshrl.u32 %v1629, 7
    %v1631 = vsub.s32 3, %v1630
    %v1632 = vrot.slane %v1613, %v1631
    %v1637 = vmul.f32 %v1484, %v1620
    %v1638 = vmul.f32 %v1485, %v1624
    %v1639 = vmul.f32 %v1486, %v1628
    %v1640 = vmul.f32 %v1487, %v1632
    %v1641 = vmul.f32 %v1488, %v1620
    %v1642 = vmul.f32 %v1489, %v1624
    %v1643 = vmul.f32 %v1490, %v1628
    %v1644 = vmul.f32 %v1491, %v1632
    %v1645 = vmul.f32 %v1492, %v1620
    %v1646 = vmul.f32 %v1493, %v1624
    %v1647 = vmul.f32 %v1494, %v1628
    %v1648 = vmul.f32 %v1495, %v1632
    %v1649 = vmul.f32 %v1496, %v1620
    %v1650 = vmul.f32 %v1497, %v1624
    %v1651 = vmul.f32 %v1498, %v1628
    %v1652 = vmul.f32 %v1499, %v1632
    %v1653 = vmul.f32 %v1500, %v1620
    %v1654 = vmul.f32 %v1501, %v1624
    %v1655 = vmul.f32 %v1502, %v1628
    %v1656 = vmul.f32 %v1503, %v1632
    %v1657 = vmul.f32 %v1504, %v1620
    %v1658 = vmul.f32 %v1505, %v1624
    %v1659 = vmul.f32 %v1506, %v1628
    %v1660 = vmul.f32 %v1507, %v1632
    %v1661 = vmul.f32 %v1508, %v1620
    %v1662 = vmul.f32 %v1509, %v1624
    %v1663 = vmul.f32 %v1510, %v1628
    %v1664 = vmul.f32 %v1511, %v1632
    %v1665 = vmul.f32 %v1512, %v1620
    %v1666 = vmul.f32 %v1513, %v1624
    %v1667 = vmul.f32 %v1514, %v1628
    %v1668 = vmul.f32 %v1515, %v1632
    %v1669 = vmul.f32 %v1516, %v1620
    %v1670 = vmul.f32 %v1517, %v1624
    %v1671 = vmul.f32 %v1518, %v1628
    %v1672 = vmul.f32 %v1519, %v1632
    %v1673 = vmul.f32 %v1520, %v1620
    %v1674 = vmul.f32 %v1521, %v1624
    %v1675 = vmul.f32 %v1522, %v1628
    %v1676 = vmul.f32 %v1523, %v1632
    %v1677 = vmul.f32 %v1524, %v1620
    %v1678 = vmul.f32 %v1525, %v1624
    %v1679 = vmul.f32 %v1526, %v1628
    %v1680 = vmul.f32 %v1527, %v1632
    %v1681 = vmul.f32 %v1528, %v1620
    %v1682 = vmul.f32 %v1529, %v1624
    %v1683 = vmul.f32 %v1530, %v1628
    %v1684 = vmul.f32 %v1531, %v1632
    %v1685 = vmul.f32 %v1532, %v1620
    %v1686 = vmul.f32 %v1533, %v1624
    %v1687 = vmul.f32 %v1534, %v1628
    %v1688 = vmul.f32 %v1535, %v1632
    %v1689 = vmul.f32 %v1536, %v1620
    %v1690 = vmul.f32 %v1537, %v1624
    %v1691 = vmul.f32 %v1538, %v1628
    %v1692 = vmul.f32 %v1539, %v1632
    %v1693 = vmul.f32 %v1540, %v1620
    %v1694 = vmul.f32 %v1541, %v1624
    %v1695 = vmul.f32 %v1542, %v1628
    %v1696 = vmul.f32 %v1543, %v1632
    %v1697 = vmul.f32 %v1544, %v1620
    %v1698 = vmul.f32 %v1545, %v1624
    %v1699 = vmul.f32 %v1546, %v1628
    %v1700 = vmul.f32 %v1547, %v1632
    %v1701 = vmul.f32 %v1548, %v1620
    %v1702 = vmul.f32 %v1549, %v1624
    %v1703 = vmul.f32 %v1550, %v1628
    %v1704 = vmul.f32 %v1551, %v1632
    %v1705 = vmul.f32 %v1552, %v1620
    %v1706 = vmul.f32 %v1553, %v1624
    %v1707 = vmul.f32 %v1554, %v1628
    %v1708 = vmul.f32 %v1555, %v1632
    %v1709 = vmul.f32 %v1556, %v1620
    %v1710 = vmul.f32 %v1557, %v1624
    %v1711 = vmul.f32 %v1558, %v1628
    %v1712 = vmul.f32 %v1559, %v1632
    %v1713 = vmul.f32 %v1560, %v1620
    %v1714 = vmul.f32 %v1561, %v1624
    %v1715 = vmul.f32 %v1562, %v1628
    %v1716 = vmul.f32 %v1563, %v1632
    %v1717 = vmul.f32 %v1564, %v1620
    %v1718 = vmul.f32 %v1565, %v1624
    %v1719 = vmul.f32 %v1566, %v1628
    %v1720 = vmul.f32 %v1567, %v1632
    %v1721 = vmul.f32 %v1568, %v1620
    %v1722 = vmul.f32 %v1569, %v1624
    %v1723 = vmul.f32 %v1570, %v1628
    %v1724 = vmul.f32 %v1571, %v1632
    %v1725 = vmul.f32 %v1572, %v1620
    %v1726 = vmul.f32 %v1573, %v1624
    %v1727 = vmul.f32 %v1574, %v1628
    %v1728 = vmul.f32 %v1575, %v1632
    %v1729 = vmul.f32 %v1576, %v1620
    %v1730 = vmul.f32 %v1577, %v1624
    %v1731 = vmul.f32 %v1578, %v1628
    %v1732 = vmul.f32 %v1579, %v1632
    %v1733 = vmul.f32 %v1580, %v1620
    %v1734 = vmul.f32 %v1581, %v1624
    %v1735 = vmul.f32 %v1582, %v1628
    %v1736 = vmul.f32 %v1583, %v1632
    %v1737 = vmul.f32 %v1584, %v1620
    %v1738 = vmul.f32 %v1585, %v1624
    %v1739 = vmul.f32 %v1586, %v1628
    %v1740 = vmul.f32 %v1587, %v1632
    %v1741 = vmul.f32 %v1588, %v1620
    %v1742 = vmul.f32 %v1589, %v1624
    %v1743 = vmul.f32 %v1590, %v1628
    %v1744 = vmul.f32 %v1591, %v1632
    %v1745 = vmul.f32 %v1592, %v1620
    %v1746 = vmul.f32 %v1593, %v1624
    %v1747 = vmul.f32 %v1594, %v1628
    %v1748 = vmul.f32 %v1595, %v1632
    %v1749 = vmul.f32 %v1596, %v1620
    %v1750 = vmul.f32 %v1597, %v1624
    %v1751 = vmul.f32 %v1598, %v1628
    %v1752 = vmul.f32 %v1599, %v1632
    %v1753 = vmul.f32 %v1600, %v1620
    %v1754 = vmul.f32 %v1601, %v1624
    %v1755 = vmul.f32 %v1602, %v1628
    %v1756 = vmul.f32 %v1603, %v1632
    %v1757 = vmul.f32 %v1604, %v1620
    %v1758 = vmul.f32 %v1605, %v1624
    %v1759 = vmul.f32 %v1606, %v1628
    %v1760 = vmul.f32 %v1607, %v1632
    %v1761 = vmul.f32 %v1608, %v1620
    %v1762 = vmul.f32 %v1609, %v1624
    %v1763 = vmul.f32 %v1610, %v1628
    %v1764 = vmul.f32 %v1611, %v1632
    %v1766 = vlaneseq
    %v1767 = vshrl.u32 %v1766, 7
    %v1768 = vsub.s32 0, %v1767
    %v1769 = vrot.slane %v1615, %v1768
    %v1770 = vlaneseq
    %v1771 = vshrl.u32 %v1770, 7
    %v1772 = vsub.s32 1, %v1771
    %v1773 = vrot.slane %v1615, %v1772
    %v1774 = vlaneseq
    %v1775 = vshrl.u32 %v1774, 7
    %v1776 = vsub.s32 2, %v1775
    %v1777 = vrot.slane %v1615, %v1776
    %v1778 = vlaneseq
    %v1779 = vshrl.u32 %v1778, 7
    %v1780 = vsub.s32 3, %v1779
    %v1781 = vrot.slane %v1615, %v1780
    %v1786 = vadd.f32 %v1637, %v1769
    %v1787 = vadd.f32 %v1638, %v1773
    %v1788 = vadd.f32 %v1639, %v1777
    %v1789 = vadd.f32 %v1640, %v1781
    %v1790 = vadd.f32 %v1641, %v1769
    %v1791 = vadd.f32 %v1642, %v1773
    %v1792 = vadd.f32 %v1643, %v1777
    %v1793 = vadd.f32 %v1644, %v1781
    %v1794 = vadd.f32 %v1645, %v1769
    %v1795 = vadd.f32 %v1646, %v1773
    %v1796 = vadd.f32 %v1647, %v1777
    %v1797 = vadd.f32 %v1648, %v1781
    %v1798 = vadd.f32 %v1649, %v1769
    %v1799 = vadd.f32 %v1650, %v1773
    %v1800 = vadd.f32 %v1651, %v1777
    %v1801 = vadd.f32 %v1652, %v1781
    %v1802 = vadd.f32 %v1653, %v1769
    %v1803 = vadd.f32 %v1654, %v1773
    %v1804 = vadd.f32 %v1655, %v1777
    %v1805 = vadd.f32 %v1656, %v1781
    %v1806 = vadd.f32 %v1657, %v1769
    %v1807 = vadd.f32 %v1658, %v1773
    %v1808 = vadd.f32 %v1659, %v1777
    %v1809 = vadd.f32 %v1660, %v1781
    %v1810 = vadd.f32 %v1661, %v1769
    %v1811 = vadd.f32 %v1662, %v1773
    %v1812 = vadd.f32 %v1663, %v1777
    %v1813 = vadd.f32 %v1664, %v1781
    %v1814 = vadd.f32 %v1665, %v1769
    %v1815 = vadd.f32 %v1666, %v1773
    %v1816 = vadd.f32 %v1667, %v1777
    %v1817 = vadd.f32 %v1668, %v1781
    %v1818 = vadd.f32 %v1669, %v1769
    %v1819 = vadd.f32 %v1670, %v1773
    %v1820 = vadd.f32 %v1671, %v1777
    %v1821 = vadd.f32 %v1672, %v1781
    %v1822 = vadd.f32 %v1673, %v1769
    %v1823 = vadd.f32 %v1674, %v1773
    %v1824 = vadd.f32 %v1675, %v1777
    %v1825 = vadd.f32 %v1676, %v1781
    %v1826 = vadd.f32 %v1677, %v1769
    %v1827 = vadd.f32 %v1678, %v1773
    %v1828 = vadd.f32 %v1679, %v1777
    %v1829 = vadd.f32 %v1680, %v1781
    %v1830 = vadd.f32 %v1681, %v1769
    %v1831 = vadd.f32 %v1682, %v1773
    %v1832 = vadd.f32 %v1683, %v1777
    %v1833 = vadd.f32 %v1684, %v1781
    %v1834 = vadd.f32 %v1685, %v1769
    %v1835 = vadd.f32 %v1686, %v1773
    %v1836 = vadd.f32 %v1687, %v1777
    %v1837 = vadd.f32 %v1688, %v1781
    %v1838 = vadd.f32 %v1689, %v1769
    %v1839 = vadd.f32 %v1690, %v1773
    %v1840 = vadd.f32 %v1691, %v1777
    %v1841 = vadd.f32 %v1692, %v1781
    %v1842 = vadd.f32 %v1693, %v1769
    %v1843 = vadd.f32 %v1694, %v1773
    %v1844 = vadd.f32 %v1695, %v1777
    %v1845 = vadd.f32 %v1696, %v1781
    %v1846 = vadd.f32 %v1697, %v1769
    %v1847 = vadd.f32 %v1698, %v1773
    %v1848 = vadd.f32 %v1699, %v1777
    %v1849 = vadd.f32 %v1700, %v1781
    %v1850 = vadd.f32 %v1701, %v1769
    %v1851 = vadd.f32 %v1702, %v1773
    %v1852 = vadd.f32 %v1703, %v1777
    %v1853 = vadd.f32 %v1704, %v1781
    %v1854 = vadd.f32 %v1705, %v1769
    %v1855 = vadd.f32 %v1706, %v1773
    %v1856 = vadd.f32 %v1707, %v1777
    %v1857 = vadd.f32 %v1708, %v1781
    %v1858 = vadd.f32 %v1709, %v1769
    %v1859 = vadd.f32 %v1710, %v1773
    %v1860 = vadd.f32 %v1711, %v1777
    %v1861 = vadd.f32 %v1712, %v1781
    %v1862 = vadd.f32 %v1713, %v1769
    %v1863 = vadd.f32 %v1714, %v1773
    %v1864 = vadd.f32 %v1715, %v1777
    %v1865 = vadd.f32 %v1716, %v1781
    %v1866 = vadd.f32 %v1717, %v1769
    %v1867 = vadd.f32 %v1718, %v1773
    %v1868 = vadd.f32 %v1719, %v1777
    %v1869 = vadd.f32 %v1720, %v1781
    %v1870 = vadd.f32 %v1721, %v1769
    %v1871 = vadd.f32 %v1722, %v1773
    %v1872 = vadd.f32 %v1723, %v1777
    %v1873 = vadd.f32 %v1724, %v1781
    %v1874 = vadd.f32 %v1725, %v1769
    %v1875 = vadd.f32 %v1726, %v1773
    %v1876 = vadd.f32 %v1727, %v1777
    %v1877 = vadd.f32 %v1728, %v1781
    %v1878 = vadd.f32 %v1729, %v1769
    %v1879 = vadd.f32 %v1730, %v1773
    %v1880 = vadd.f32 %v1731, %v1777
    %v1881 = vadd.f32 %v1732, %v1781
    %v1882 = vadd.f32 %v1733, %v1769
    %v1883 = vadd.f32 %v1734, %v1773
    %v1884 = vadd.f32 %v1735, %v1777
    %v1885 = vadd.f32 %v1736, %v1781
    %v1886 = vadd.f32 %v1737, %v1769
    %v1887 = vadd.f32 %v1738, %v1773
    %v1888 = vadd.f32 %v1739, %v1777
    %v1889 = vadd.f32 %v1740, %v1781
    %v1890 = vadd.f32 %v1741, %v1769
    %v1891 = vadd.f32 %v1742, %v1773
    %v1892 = vadd.f32 %v1743, %v1777
    %v1893 = vadd.f32 %v1744, %v1781
    %v1894 = vadd.f32 %v1745, %v1769
    %v1895 = vadd.f32 %v1746, %v1773
    %v1896 = vadd.f32 %v1747, %v1777
    %v1897 = vadd.f32 %v1748, %v1781
    %v1898 = vadd.f32 %v1749, %v1769
    %v1899 = vadd.f32 %v1750, %v1773
    %v1900 = vadd.f32 %v1751, %v1777
    %v1901 = vadd.f32 %v1752, %v1781
    %v1902 = vadd.f32 %v1753, %v1769
    %v1903 = vadd.f32 %v1754, %v1773
    %v1904 = vadd.f32 %v1755, %v1777
    %v1905 = vadd.f32 %v1756, %v1781
    %v1906 = vadd.f32 %v1757, %v1769
    %v1907 = vadd.f32 %v1758, %v1773
    %v1908 = vadd.f32 %v1759, %v1777
    %v1909 = vadd.f32 %v1760, %v1781
    %v1910 = vadd.f32 %v1761, %v1769
    %v1911 = vadd.f32 %v1762, %v1773
    %v1912 = vadd.f32 %v1763, %v1777
    %v1913 = vadd.f32 %v1764, %v1781
    %v1914 = vmax.f32 %v1786, 0.0
    %v1915 = vmax.f32 %v1787, 0.0
    %v1916 = vmax.f32 %v1788, 0.0
    %v1917 = vmax.f32 %v1789, 0.0
    %v1918 = vmax.f32 %v1790, 0.0
    %v1919 = vmax.f32 %v1791, 0.0
    %v1920 = vmax.f32 %v1792, 0.0
    %v1921 = vmax.f32 %v1793, 0.0
    %v1922 = vmax.f32 %v1794, 0.0
    %v1923 = vmax.f32 %v1795, 0.0
    %v1924 = vmax.f32 %v1796, 0.0
    %v1925 = vmax.f32 %v1797, 0.0
    %v1926 = vmax.f32 %v1798, 0.0
    %v1927 = vmax.f32 %v1799, 0.0
    %v1928 = vmax.f32 %v1800, 0.0
    %v1929 = vmax.f32 %v1801, 0.0
    %v1930 = vmax.f32 %v1802, 0.0
    %v1931 = vmax.f32 %v1803, 0.0
    %v1932 = vmax.f32 %v1804, 0.0
    %v1933 = vmax.f32 %v1805, 0.0
    %v1934 = vmax.f32 %v1806, 0.0
    %v1935 = vmax.f32 %v1807, 0.0
    %v1936 = vmax.f32 %v1808, 0.0
    %v1937 = vmax.f32 %v1809, 0.0
    %v1938 = vmax.f32 %v1810, 0.0
    %v1939 = vmax.f32 %v1811, 0.0
    %v1940 = vmax.f32 %v1812, 0.0
    %v1941 = vmax.f32 %v1813, 0.0
    %v1942 = vmax.f32 %v1814, 0.0
    %v1943 = vmax.f32 %v1815, 0.0
    %v1944 = vmax.f32 %v1816, 0.0
    %v1945 = vmax.f32 %v1817, 0.0
    %v1946 = vmax.f32 %v1818, 0.0
    %v1947 = vmax.f32 %v1819, 0.0
    %v1948 = vmax.f32 %v1820, 0.0
    %v1949 = vmax.f32 %v1821, 0.0
    %v1950 = vmax.f32 %v1822, 0.0
    %v1951 = vmax.f32 %v1823, 0.0
    %v1952 = vmax.f32 %v1824, 0.0
    %v1953 = vmax.f32 %v1825, 0.0
    %v1954 = vmax.f32 %v1826, 0.0
    %v1955 = vmax.f32 %v1827, 0.0
    %v1956 = vmax.f32 %v1828, 0.0
    %v1957 = vmax.f32 %v1829, 0.0
    %v1958 = vmax.f32 %v1830, 0.0
    %v1959 = vmax.f32 %v1831, 0.0
    %v1960 = vmax.f32 %v1832, 0.0
    %v1961 = vmax.f32 %v1833, 0.0
    %v1962 = vmax.f32 %v1834, 0.0
    %v1963 = vmax.f32 %v1835, 0.0
    %v1964 = vmax.f32 %v1836, 0.0
    %v1965 = vmax.f32 %v1837, 0.0
    %v1966 = vmax.f32 %v1838, 0.0
    %v1967 = vmax.f32 %v1839, 0.0
    %v1968 = vmax.f32 %v1840, 0.0
    %v1969 = vmax.f32 %v1841, 0.0
    %v1970 = vmax.f32 %v1842, 0.0
    %v1971 = vmax.f32 %v1843, 0.0
    %v1972 = vmax.f32 %v1844, 0.0
    %v1973 = vmax.f32 %v1845, 0.0
    %v1974 = vmax.f32 %v1846, 0.0
    %v1975 = vmax.f32 %v1847, 0.0
    %v1976 = vmax.f32 %v1848, 0.0
    %v1977 = vmax.f32 %v1849, 0.0
    %v1978 = vmax.f32 %v1850, 0.0
    %v1979 = vmax.f32 %v1851, 0.0
    %v1980 = vmax.f32 %v1852, 0.0
    %v1981 = vmax.f32 %v1853, 0.0
    %v1982 = vmax.f32 %v1854, 0.0
    %v1983 = vmax.f32 %v1855, 0.0
    %v1984 = vmax.f32 %v1856, 0.0
    %v1985 = vmax.f32 %v1857, 0.0
    %v1986 = vmax.f32 %v1858, 0.0
    %v1987 = vmax.f32 %v1859, 0.0
    %v1988 = vmax.f32 %v1860, 0.0
    %v1989 = vmax.f32 %v1861, 0.0
    %v1990 = vmax.f32 %v1862, 0.0
    %v1991 = vmax.f32 %v1863, 0.0
    %v1992 = vmax.f32 %v1864, 0.0
    %v1993 = vmax.f32 %v1865, 0.0
    %v1994 = vmax.f32 %v1866, 0.0
    %v1995 = vmax.f32 %v1867, 0.0
    %v1996 = vmax.f32 %v1868, 0.0
    %v1997 = vmax.f32 %v1869, 0.0
    %v1998 = vmax.f32 %v1870, 0.0
    %v1999 = vmax.f32 %v1871, 0.0
    %v2000 = vmax.f32 %v1872, 0.0
    %v2001 = vmax.f32 %v1873, 0.0
    %v2002 = vmax.f32 %v1874, 0.0
    %v2003 = vmax.f32 %v1875, 0.0
    %v2004 = vmax.f32 %v1876, 0.0
    %v2005 = vmax.f32 %v1877, 0.0
    %v2006 = vmax.f32 %v1878, 0.0
    %v2007 = vmax.f32 %v1879, 0.0
    %v2008 = vmax.f32 %v1880, 0.0
    %v2009 = vmax.f32 %v1881, 0.0
    %v2010 = vmax.f32 %v1882, 0.0
    %v2011 = vmax.f32 %v1883, 0.0
    %v2012 = vmax.f32 %v1884, 0.0
    %v2013 = vmax.f32 %v1885, 0.0
    %v2014 = vmax.f32 %v1886, 0.0
    %v2015 = vmax.f32 %v1887, 0.0
    %v2016 = vmax.f32 %v1888, 0.0
    %v2017 = vmax.f32 %v1889, 0.0
    %v2018 = vmax.f32 %v1890, 0.0
    %v2019 = vmax.f32 %v1891, 0.0
    %v2020 = vmax.f32 %v1892, 0.0
    %v2021 = vmax.f32 %v1893, 0.0
    %v2022 = vmax.f32 %v1894, 0.0
    %v2023 = vmax.f32 %v1895, 0.0
    %v2024 = vmax.f32 %v1896, 0.0
    %v2025 = vmax.f32 %v1897, 0.0
    %v2026 = vmax.f32 %v1898, 0.0
    %v2027 = vmax.f32 %v1899, 0.0
    %v2028 = vmax.f32 %v1900, 0.0
    %v2029 = vmax.f32 %v1901, 0.0
    %v2030 = vmax.f32 %v1902, 0.0
    %v2031 = vmax.f32 %v1903, 0.0
    %v2032 = vmax.f32 %v1904, 0.0
    %v2033 = vmax.f32 %v1905, 0.0
    %v2034 = vmax.f32 %v1906, 0.0
    %v2035 = vmax.f32 %v1907, 0.0
    %v2036 = vmax.f32 %v1908, 0.0
    %v2037 = vmax.f32 %v1909, 0.0
    %v2038 = vmax.f32 %v1910, 0.0
    %v2039 = vmax.f32 %v1911, 0.0
    %v2040 = vmax.f32 %v1912, 0.0
    %v2041 = vmax.f32 %v1913, 0.0
    %v2042 = vpack.c.bf16 %v1918, %v1914
    %v2043 = vpack.c.bf16 %v1919, %v1915
    %v2044 = vpack.c.bf16 %v1920, %v1916
    %v2045 = vpack.c.bf16 %v1921, %v1917
    %v2046 = vpack.c.bf16 %v1926, %v1922
    %v2047 = vpack.c.bf16 %v1927, %v1923
    %v2048 = vpack.c.bf16 %v1928, %v1924
    %v2049 = vpack.c.bf16 %v1929, %v1925
    %v2050 = vpack.c.bf16 %v1934, %v1930
    %v2051 = vpack.c.bf16 %v1935, %v1931
    %v2052 = vpack.c.bf16 %v1936, %v1932
    %v2053 = vpack.c.bf16 %v1937, %v1933
    %v2054 = vpack.c.bf16 %v1942, %v1938
    %v2055 = vpack.c.bf16 %v1943, %v1939
    %v2056 = vpack.c.bf16 %v1944, %v1940
    %v2057 = vpack.c.bf16 %v1945, %v1941
    %v2058 = vpack.c.bf16 %v1950, %v1946
    %v2059 = vpack.c.bf16 %v1951, %v1947
    %v2060 = vpack.c.bf16 %v1952, %v1948
    %v2061 = vpack.c.bf16 %v1953, %v1949
    %v2062 = vpack.c.bf16 %v1958, %v1954
    %v2063 = vpack.c.bf16 %v1959, %v1955
    %v2064 = vpack.c.bf16 %v1960, %v1956
    %v2065 = vpack.c.bf16 %v1961, %v1957
    %v2066 = vpack.c.bf16 %v1966, %v1962
    %v2067 = vpack.c.bf16 %v1967, %v1963
    %v2068 = vpack.c.bf16 %v1968, %v1964
    %v2069 = vpack.c.bf16 %v1969, %v1965
    %v2070 = vpack.c.bf16 %v1974, %v1970
    %v2071 = vpack.c.bf16 %v1975, %v1971
    %v2072 = vpack.c.bf16 %v1976, %v1972
    %v2073 = vpack.c.bf16 %v1977, %v1973
    %v2074 = vpack.c.bf16 %v1982, %v1978
    %v2075 = vpack.c.bf16 %v1983, %v1979
    %v2076 = vpack.c.bf16 %v1984, %v1980
    %v2077 = vpack.c.bf16 %v1985, %v1981
    %v2078 = vpack.c.bf16 %v1990, %v1986
    %v2079 = vpack.c.bf16 %v1991, %v1987
    %v2080 = vpack.c.bf16 %v1992, %v1988
    %v2081 = vpack.c.bf16 %v1993, %v1989
    %v2082 = vpack.c.bf16 %v1998, %v1994
    %v2083 = vpack.c.bf16 %v1999, %v1995
    %v2084 = vpack.c.bf16 %v2000, %v1996
    %v2085 = vpack.c.bf16 %v2001, %v1997
    %v2086 = vpack.c.bf16 %v2006, %v2002
    %v2087 = vpack.c.bf16 %v2007, %v2003
    %v2088 = vpack.c.bf16 %v2008, %v2004
    %v2089 = vpack.c.bf16 %v2009, %v2005
    %v2090 = vpack.c.bf16 %v2014, %v2010
    %v2091 = vpack.c.bf16 %v2015, %v2011
    %v2092 = vpack.c.bf16 %v2016, %v2012
    %v2093 = vpack.c.bf16 %v2017, %v2013
    %v2094 = vpack.c.bf16 %v2022, %v2018
    %v2095 = vpack.c.bf16 %v2023, %v2019
    %v2096 = vpack.c.bf16 %v2024, %v2020
    %v2097 = vpack.c.bf16 %v2025, %v2021
    %v2098 = vpack.c.bf16 %v2030, %v2026
    %v2099 = vpack.c.bf16 %v2031, %v2027
    %v2100 = vpack.c.bf16 %v2032, %v2028
    %v2101 = vpack.c.bf16 %v2033, %v2029
    %v2102 = vpack.c.bf16 %v2038, %v2034
    %v2103 = vpack.c.bf16 %v2039, %v2035
    %v2104 = vpack.c.bf16 %v2040, %v2036
    %v2105 = vpack.c.bf16 %v2041, %v2037
    %v2106 = vld [vmem:[#allocation5] sm:$0xff]
    %v2107 = vld [vmem:[#allocation5 + $0x8] sm:$0xff]
    %v2108 = vld [vmem:[#allocation5 + $0x10] sm:$0xff]
    %v2109 = vld [vmem:[#allocation5 + $0x18] sm:$0xff]
    %v2110 = vld [vmem:[#allocation5 + $0x20] sm:$0xff]
    %v2111 = vld [vmem:[#allocation5 + $0x28] sm:$0xff]
    %v2112 = vld [vmem:[#allocation5 + $0x30] sm:$0xff]
    %v2113 = vld [vmem:[#allocation5 + $0x38] sm:$0xff]
    %v2114 = vld [vmem:[#allocation5 + $0x40] sm:$0xff]
    %v2115 = vld [vmem:[#allocation5 + $0x48] sm:$0xff]
    %v2116 = vld [vmem:[#allocation5 + $0x50] sm:$0xff]
    %v2117 = vld [vmem:[#allocation5 + $0x58] sm:$0xff]
    %v2118 = vld [vmem:[#allocation5 + $0x60] sm:$0xff]
    %v2119 = vld [vmem:[#allocation5 + $0x68] sm:$0xff]
    %v2120 = vld [vmem:[#allocation5 + $0x70] sm:$0xff]
    %v2121 = vld [vmem:[#allocation5 + $0x78] sm:$0xff]
    %v2122 = vld [vmem:[#allocation5 + $0x80] sm:$0xff]
    %v2123 = vld [vmem:[#allocation5 + $0x88] sm:$0xff]
    %v2124 = vld [vmem:[#allocation5 + $0x90] sm:$0xff]
    %v2125 = vld [vmem:[#allocation5 + $0x98] sm:$0xff]
    %v2126 = vld [vmem:[#allocation5 + $0xa0] sm:$0xff]
    %v2127 = vld [vmem:[#allocation5 + $0xa8] sm:$0xff]
    %v2128 = vld [vmem:[#allocation5 + $0xb0] sm:$0xff]
    %v2129 = vld [vmem:[#allocation5 + $0xb8] sm:$0xff]
    %v2130 = vld [vmem:[#allocation5 + $0xc0] sm:$0xff]
    %v2131 = vld [vmem:[#allocation5 + $0xc8] sm:$0xff]
    %v2132 = vld [vmem:[#allocation5 + $0xd0] sm:$0xff]
    %v2133 = vld [vmem:[#allocation5 + $0xd8] sm:$0xff]
    %v2134 = vld [vmem:[#allocation5 + $0xe0] sm:$0xff]
    %v2135 = vld [vmem:[#allocation5 + $0xe8] sm:$0xff]
    %v2136 = vld [vmem:[#allocation5 + $0xf0] sm:$0xff]
    %v2137 = vld [vmem:[#allocation5 + $0xf8] sm:$0xff]
    %v2138 = vld [vmem:[#allocation5 + $0x100] sm:$0xff]
    %v2139 = vld [vmem:[#allocation5 + $0x108] sm:$0xff]
    %v2140 = vld [vmem:[#allocation5 + $0x110] sm:$0xff]
    %v2141 = vld [vmem:[#allocation5 + $0x118] sm:$0xff]
    %v2142 = vld [vmem:[#allocation5 + $0x120] sm:$0xff]
    %v2143 = vld [vmem:[#allocation5 + $0x128] sm:$0xff]
    %v2144 = vld [vmem:[#allocation5 + $0x130] sm:$0xff]
    %v2145 = vld [vmem:[#allocation5 + $0x138] sm:$0xff]
    %v2146 = vld [vmem:[#allocation5 + $0x140] sm:$0xff]
    %v2147 = vld [vmem:[#allocation5 + $0x148] sm:$0xff]
    %v2148 = vld [vmem:[#allocation5 + $0x150] sm:$0xff]
    %v2149 = vld [vmem:[#allocation5 + $0x158] sm:$0xff]
    %v2150 = vld [vmem:[#allocation5 + $0x160] sm:$0xff]
    %v2151 = vld [vmem:[#allocation5 + $0x168] sm:$0xff]
    %v2152 = vld [vmem:[#allocation5 + $0x170] sm:$0xff]
    %v2153 = vld [vmem:[#allocation5 + $0x178] sm:$0xff]
    %v2154 = vld [vmem:[#allocation5 + $0x180] sm:$0xff]
    %v2155 = vld [vmem:[#allocation5 + $0x188] sm:$0xff]
    %v2156 = vld [vmem:[#allocation5 + $0x190] sm:$0xff]
    %v2157 = vld [vmem:[#allocation5 + $0x198] sm:$0xff]
    %v2158 = vld [vmem:[#allocation5 + $0x1a0] sm:$0xff]
    %v2159 = vld [vmem:[#allocation5 + $0x1a8] sm:$0xff]
    %v2160 = vld [vmem:[#allocation5 + $0x1b0] sm:$0xff]
    %v2161 = vld [vmem:[#allocation5 + $0x1b8] sm:$0xff]
    %v2162 = vld [vmem:[#allocation5 + $0x1c0] sm:$0xff]
    %v2163 = vld [vmem:[#allocation5 + $0x1c8] sm:$0xff]
    %v2164 = vld [vmem:[#allocation5 + $0x1d0] sm:$0xff]
    %v2165 = vld [vmem:[#allocation5 + $0x1d8] sm:$0xff]
    %v2166 = vld [vmem:[#allocation5 + $0x1e0] sm:$0xff]
    %v2167 = vld [vmem:[#allocation5 + $0x1e8] sm:$0xff]
    %v2168 = vld [vmem:[#allocation5 + $0x1f0] sm:$0xff]
    %v2169 = vld [vmem:[#allocation5 + $0x1f8] sm:$0xff]
    %s2170 = scalar_lea.vmem %s7, 16
    %v2171 = vld [vmem:[%s2170] ss:$4 sm:$0x3]
    %v2173 = vlaneseq
    %v2174 = vshrl.u32 %v2173, 7
    %v2175 = vsub.s32 0, %v2174
    %v2176 = vrot.slane %v2171, %v2175
    %v2177 = vlaneseq
    %v2178 = vshrl.u32 %v2177, 7
    %v2179 = vsub.s32 1, %v2178
    %v2180 = vrot.slane %v2171, %v2179
    %v2247 = vunpack.c.l.b16 %v2106
    %v2248 = vunpack.c.h.b16 %v2106
    %v2249 = vunpack.c.l.b16 %v2107
    %v2250 = vunpack.c.h.b16 %v2107
    %v2251 = vunpack.c.l.b16 %v2108
    %v2252 = vunpack.c.h.b16 %v2108
    %v2253 = vunpack.c.l.b16 %v2109
    %v2254 = vunpack.c.h.b16 %v2109
    %v2255 = vunpack.c.l.b16 %v2110
    %v2256 = vunpack.c.h.b16 %v2110
    %v2257 = vunpack.c.l.b16 %v2111
    %v2258 = vunpack.c.h.b16 %v2111
    %v2259 = vunpack.c.l.b16 %v2112
    %v2260 = vunpack.c.h.b16 %v2112
    %v2261 = vunpack.c.l.b16 %v2113
    %v2262 = vunpack.c.h.b16 %v2113
    %v2263 = vunpack.c.l.b16 %v2114
    %v2264 = vunpack.c.h.b16 %v2114
    %v2265 = vunpack.c.l.b16 %v2115
    %v2266 = vunpack.c.h.b16 %v2115
    %v2267 = vunpack.c.l.b16 %v2116
    %v2268 = vunpack.c.h.b16 %v2116
    %v2269 = vunpack.c.l.b16 %v2117
    %v2270 = vunpack.c.h.b16 %v2117
    %v2271 = vunpack.c.l.b16 %v2118
    %v2272 = vunpack.c.h.b16 %v2118
    %v2273 = vunpack.c.l.b16 %v2119
    %v2274 = vunpack.c.h.b16 %v2119
    %v2275 = vunpack.c.l.b16 %v2120
    %v2276 = vunpack.c.h.b16 %v2120
    %v2277 = vunpack.c.l.b16 %v2121
    %v2278 = vunpack.c.h.b16 %v2121
    %v2279 = vunpack.c.l.b16 %v2122
    %v2280 = vunpack.c.h.b16 %v2122
    %v2281 = vunpack.c.l.b16 %v2123
    %v2282 = vunpack.c.h.b16 %v2123
    %v2283 = vunpack.c.l.b16 %v2124
    %v2284 = vunpack.c.h.b16 %v2124
    %v2285 = vunpack.c.l.b16 %v2125
    %v2286 = vunpack.c.h.b16 %v2125
    %v2287 = vunpack.c.l.b16 %v2126
    %v2288 = vunpack.c.h.b16 %v2126
    %v2289 = vunpack.c.l.b16 %v2127
    %v2290 = vunpack.c.h.b16 %v2127
    %v2291 = vunpack.c.l.b16 %v2128
    %v2292 = vunpack.c.h.b16 %v2128
    %v2293 = vunpack.c.l.b16 %v2129
    %v2294 = vunpack.c.h.b16 %v2129
    %v2295 = vunpack.c.l.b16 %v2130
    %v2296 = vunpack.c.h.b16 %v2130
    %v2297 = vunpack.c.l.b16 %v2131
    %v2298 = vunpack.c.h.b16 %v2131
    %v2299 = vunpack.c.l.b16 %v2132
    %v2300 = vunpack.c.h.b16 %v2132
    %v2301 = vunpack.c.l.b16 %v2133
    %v2302 = vunpack.c.h.b16 %v2133
    %v2303 = vunpack.c.l.b16 %v2134
    %v2304 = vunpack.c.h.b16 %v2134
    %v2305 = vunpack.c.l.b16 %v2135
    %v2306 = vunpack.c.h.b16 %v2135
    %v2307 = vunpack.c.l.b16 %v2136
    %v2308 = vunpack.c.h.b16 %v2136
    %v2309 = vunpack.c.l.b16 %v2137
    %v2310 = vunpack.c.h.b16 %v2137
    %v2311 = vunpack.c.l.b16 %v2138
    %v2312 = vunpack.c.h.b16 %v2138
    %v2313 = vunpack.c.l.b16 %v2139
    %v2314 = vunpack.c.h.b16 %v2139
    %v2315 = vunpack.c.l.b16 %v2140
    %v2316 = vunpack.c.h.b16 %v2140
    %v2317 = vunpack.c.l.b16 %v2141
    %v2318 = vunpack.c.h.b16 %v2141
    %v2319 = vunpack.c.l.b16 %v2142
    %v2320 = vunpack.c.h.b16 %v2142
    %v2321 = vunpack.c.l.b16 %v2143
    %v2322 = vunpack.c.h.b16 %v2143
    %v2323 = vunpack.c.l.b16 %v2144
    %v2324 = vunpack.c.h.b16 %v2144
    %v2325 = vunpack.c.l.b16 %v2145
    %v2326 = vunpack.c.h.b16 %v2145
    %v2327 = vunpack.c.l.b16 %v2146
    %v2328 = vunpack.c.h.b16 %v2146
    %v2329 = vunpack.c.l.b16 %v2147
    %v2330 = vunpack.c.h.b16 %v2147
    %v2331 = vunpack.c.l.b16 %v2148
    %v2332 = vunpack.c.h.b16 %v2148
    %v2333 = vunpack.c.l.b16 %v2149
    %v2334 = vunpack.c.h.b16 %v2149
    %v2335 = vunpack.c.l.b16 %v2150
    %v2336 = vunpack.c.h.b16 %v2150
    %v2337 = vunpack.c.l.b16 %v2151
    %v2338 = vunpack.c.h.b16 %v2151
    %v2339 = vunpack.c.l.b16 %v2152
    %v2340 = vunpack.c.h.b16 %v2152
    %v2341 = vunpack.c.l.b16 %v2153
    %v2342 = vunpack.c.h.b16 %v2153
    %v2343 = vunpack.c.l.b16 %v2154
    %v2344 = vunpack.c.h.b16 %v2154
    %v2345 = vunpack.c.l.b16 %v2155
    %v2346 = vunpack.c.h.b16 %v2155
    %v2347 = vunpack.c.l.b16 %v2156
    %v2348 = vunpack.c.h.b16 %v2156
    %v2349 = vunpack.c.l.b16 %v2157
    %v2350 = vunpack.c.h.b16 %v2157
    %v2351 = vunpack.c.l.b16 %v2158
    %v2352 = vunpack.c.h.b16 %v2158
    %v2353 = vunpack.c.l.b16 %v2159
    %v2354 = vunpack.c.h.b16 %v2159
    %v2355 = vunpack.c.l.b16 %v2160
    %v2356 = vunpack.c.h.b16 %v2160
    %v2357 = vunpack.c.l.b16 %v2161
    %v2358 = vunpack.c.h.b16 %v2161
    %v2359 = vunpack.c.l.b16 %v2162
    %v2360 = vunpack.c.h.b16 %v2162
    %v2361 = vunpack.c.l.b16 %v2163
    %v2362 = vunpack.c.h.b16 %v2163
    %v2363 = vunpack.c.l.b16 %v2164
    %v2364 = vunpack.c.h.b16 %v2164
    %v2365 = vunpack.c.l.b16 %v2165
    %v2366 = vunpack.c.h.b16 %v2165
    %v2367 = vunpack.c.l.b16 %v2166
    %v2368 = vunpack.c.h.b16 %v2166
    %v2369 = vunpack.c.l.b16 %v2167
    %v2370 = vunpack.c.h.b16 %v2167
    %v2371 = vunpack.c.l.b16 %v2168
    %v2372 = vunpack.c.h.b16 %v2168
    %v2373 = vunpack.c.l.b16 %v2169
    %v2374 = vunpack.c.h.b16 %v2169
    %v2375 = vpack.c.b16 %v2249, %v2247
    %v2376 = vpack.c.b16 %v2250, %v2248
    %v2377 = vpack.c.b16 %v2253, %v2251
    %v2378 = vpack.c.b16 %v2254, %v2252
    %v2379 = vpack.c.b16 %v2257, %v2255
    %v2380 = vpack.c.b16 %v2258, %v2256
    %v2381 = vpack.c.b16 %v2261, %v2259
    %v2382 = vpack.c.b16 %v2262, %v2260
    %v2383 = vpack.c.b16 %v2265, %v2263
    %v2384 = vpack.c.b16 %v2266, %v2264
    %v2385 = vpack.c.b16 %v2269, %v2267
    %v2386 = vpack.c.b16 %v2270, %v2268
    %v2387 = vpack.c.b16 %v2273, %v2271
    %v2388 = vpack.c.b16 %v2274, %v2272
    %v2389 = vpack.c.b16 %v2277, %v2275
    %v2390 = vpack.c.b16 %v2278, %v2276
    %v2391 = vpack.c.b16 %v2281, %v2279
    %v2392 = vpack.c.b16 %v2282, %v2280
    %v2393 = vpack.c.b16 %v2285, %v2283
    %v2394 = vpack.c.b16 %v2286, %v2284
    %v2395 = vpack.c.b16 %v2289, %v2287
    %v2396 = vpack.c.b16 %v2290, %v2288
    %v2397 = vpack.c.b16 %v2293, %v2291
    %v2398 = vpack.c.b16 %v2294, %v2292
    %v2399 = vpack.c.b16 %v2297, %v2295
    %v2400 = vpack.c.b16 %v2298, %v2296
    %v2401 = vpack.c.b16 %v2301, %v2299
    %v2402 = vpack.c.b16 %v2302, %v2300
    %v2403 = vpack.c.b16 %v2305, %v2303
    %v2404 = vpack.c.b16 %v2306, %v2304
    %v2405 = vpack.c.b16 %v2309, %v2307
    %v2406 = vpack.c.b16 %v2310, %v2308
    %v2407 = vpack.c.b16 %v2313, %v2311
    %v2408 = vpack.c.b16 %v2314, %v2312
    %v2409 = vpack.c.b16 %v2317, %v2315
    %v2410 = vpack.c.b16 %v2318, %v2316
    %v2411 = vpack.c.b16 %v2321, %v2319
    %v2412 = vpack.c.b16 %v2322, %v2320
    %v2413 = vpack.c.b16 %v2325, %v2323
    %v2414 = vpack.c.b16 %v2326, %v2324
    %v2415 = vpack.c.b16 %v2329, %v2327
    %v2416 = vpack.c.b16 %v2330, %v2328
    %v2417 = vpack.c.b16 %v2333, %v2331
    %v2418 = vpack.c.b16 %v2334, %v2332
    %v2419 = vpack.c.b16 %v2337, %v2335
    %v2420 = vpack.c.b16 %v2338, %v2336
    %v2421 = vpack.c.b16 %v2341, %v2339
    %v2422 = vpack.c.b16 %v2342, %v2340
    %v2423 = vpack.c.b16 %v2345, %v2343
    %v2424 = vpack.c.b16 %v2346, %v2344
    %v2425 = vpack.c.b16 %v2349, %v2347
    %v2426 = vpack.c.b16 %v2350, %v2348
    %v2427 = vpack.c.b16 %v2353, %v2351
    %v2428 = vpack.c.b16 %v2354, %v2352
    %v2429 = vpack.c.b16 %v2357, %v2355
    %v2430 = vpack.c.b16 %v2358, %v2356
    %v2431 = vpack.c.b16 %v2361, %v2359
    %v2432 = vpack.c.b16 %v2362, %v2360
    %v2433 = vpack.c.b16 %v2365, %v2363
    %v2434 = vpack.c.b16 %v2366, %v2364
    %v2435 = vpack.c.b16 %v2369, %v2367
    %v2436 = vpack.c.b16 %v2370, %v2368
    %v2437 = vpack.c.b16 %v2373, %v2371
    %v2438 = vpack.c.b16 %v2374, %v2372
    %2503 = vmatprep.subr.bf16.mxu0 %v2376
    %2504 = vmatpush1.bf16.msra.mxu0 %v2375
    %2505 = vmatprep.subr.bf16.mxu0 %v2378
    %2506 = vmatpush1.bf16.msra.mxu0 %v2377
    %2507 = vmatprep.subr.bf16.mxu0 %v2380
    %2508 = vmatpush1.bf16.msra.mxu0 %v2379
    %2509 = vmatprep.subr.bf16.mxu0 %v2382
    %2510 = vmatpush1.bf16.msra.mxu0 %v2381
    %2511 = vmatprep.subr.bf16.mxu0 %v2384
    %2512 = vmatpush1.bf16.msra.mxu0 %v2383
    %2513 = vmatprep.subr.bf16.mxu0 %v2386
    %2514 = vmatpush1.bf16.msra.mxu0 %v2385
    %2515 = vmatprep.subr.bf16.mxu0 %v2388
    %2516 = vmatpush1.bf16.msra.mxu0 %v2387
    %2517 = vmatprep.subr.bf16.mxu0 %v2390
    %2518 = vmatpush1.bf16.msra.mxu0 %v2389
    %2519 = vmatprep.subr.bf16.mxu0 %v2392
    %2520 = vmatpush1.bf16.msra.mxu0 %v2391
    %2521 = vmatprep.subr.bf16.mxu0 %v2394
    %2522 = vmatpush1.bf16.msra.mxu0 %v2393
    %2523 = vmatprep.subr.bf16.mxu0 %v2396
    %2524 = vmatpush1.bf16.msra.mxu0 %v2395
    %2525 = vmatprep.subr.bf16.mxu0 %v2398
    %2526 = vmatpush1.bf16.msra.mxu0 %v2397
    %2527 = vmatprep.subr.bf16.mxu0 %v2400
    %2528 = vmatpush1.bf16.msra.mxu0 %v2399
    %2529 = vmatprep.subr.bf16.mxu0 %v2402
    %2530 = vmatpush1.bf16.msra.mxu0 %v2401
    %2531 = vmatprep.subr.bf16.mxu0 %v2404
    %2532 = vmatpush1.bf16.msra.mxu0 %v2403
    %2533 = vmatprep.subr.bf16.mxu0 %v2406
    %2534 = vmatpush1.bf16.msra.mxu0 %v2405
    %2535 = vmatprep.mubr.bf16.mxu0 %v2043
    %2536 = vmatmul.mubr.bf16.gmra.mrb[0].mxu0 %v2042
    %v2537 = vpop.f32.mrb[0].mxu0
    %v2538 = vadd.f32 %v2176, %v2537
    %v2539 = vpop.f32.mrb[0].mxu0
    %v2540 = vadd.f32 %v2180, %v2539
    %v2541 = vpop.f32.mrb[0].mxu0
    %v2542 = vadd.f32 %v2176, %v2541
    %v2543 = vpop.f32.mrb[0].mxu0
    %v2544 = vadd.f32 %v2180, %v2543
    %2545 = vmatprep.mubr.bf16.mxu0 %v2047
    %2546 = vmatmul.mubr.bf16.gmra.mrb[0].mxu0 %v2046
    %v2547 = vpop.f32.mrb[0].mxu0
    %v2548 = vadd.f32 %v2176, %v2547
    %v2549 = vpop.f32.mrb[0].mxu0
    %v2550 = vadd.f32 %v2180, %v2549
    %v2551 = vpop.f32.mrb[0].mxu0
    %v2552 = vadd.f32 %v2176, %v2551
    %v2553 = vpop.f32.mrb[0].mxu0
    %v2554 = vadd.f32 %v2180, %v2553
    %2555 = vmatprep.mubr.bf16.mxu0 %v2051
    %2556 = vmatmul.mubr.bf16.gmra.mrb[0].mxu0 %v2050
    %v2557 = vpop.f32.mrb[0].mxu0
    %v2558 = vadd.f32 %v2176, %v2557
    %v2559 = vpop.f32.mrb[0].mxu0
    %v2560 = vadd.f32 %v2180, %v2559
    %v2561 = vpop.f32.mrb[0].mxu0
    %v2562 = vadd.f32 %v2176, %v2561
    %v2563 = vpop.f32.mrb[0].mxu0
    %v2564 = vadd.f32 %v2180, %v2563
    %2565 = vmatprep.mubr.bf16.mxu0 %v2055
    %2566 = vmatmul.mubr.bf16.gmra.mrb[0].mxu0 %v2054
    %v2567 = vpop.f32.mrb[0].mxu0
    %v2568 = vadd.f32 %v2176, %v2567
    %v2569 = vpop.f32.mrb[0].mxu0
    %v2570 = vadd.f32 %v2180, %v2569
    %v2571 = vpop.f32.mrb[0].mxu0
    %v2572 = vadd.f32 %v2176, %v2571
    %v2573 = vpop.f32.mrb[0].mxu0
    %v2574 = vadd.f32 %v2180, %v2573
    %2575 = vmatprep.mubr.bf16.mxu0 %v2059
    %2576 = vmatmul.mubr.bf16.gmra.mrb[0].mxu0 %v2058
    %v2577 = vpop.f32.mrb[0].mxu0
    %v2578 = vadd.f32 %v2176, %v2577
    %v2579 = vpop.f32.mrb[0].mxu0
    %v2580 = vadd.f32 %v2180, %v2579
    %v2581 = vpop.f32.mrb[0].mxu0
    %v2582 = vadd.f32 %v2176, %v2581
    %v2583 = vpop.f32.mrb[0].mxu0
    %v2584 = vadd.f32 %v2180, %v2583
    %2585 = vmatprep.mubr.bf16.mxu0 %v2063
    %2586 = vmatmul.mubr.bf16.gmra.mrb[0].mxu0 %v2062
    %v2587 = vpop.f32.mrb[0].mxu0
    %v2588 = vadd.f32 %v2176, %v2587
    %v2589 = vpop.f32.mrb[0].mxu0
    %v2590 = vadd.f32 %v2180, %v2589
    %v2591 = vpop.f32.mrb[0].mxu0
    %v2592 = vadd.f32 %v2176, %v2591
    %v2593 = vpop.f32.mrb[0].mxu0
    %v2594 = vadd.f32 %v2180, %v2593
    %2595 = vmatprep.mubr.bf16.mxu0 %v2067
    %2596 = vmatmul.mubr.bf16.gmra.mrb[0].mxu0 %v2066
    %v2597 = vpop.f32.mrb[0].mxu0
    %v2598 = vadd.f32 %v2176, %v2597
    %v2599 = vpop.f32.mrb[0].mxu0
    %v2600 = vadd.f32 %v2180, %v2599
    %v2601 = vpop.f32.mrb[0].mxu0
    %v2602 = vadd.f32 %v2176, %v2601
    %v2603 = vpop.f32.mrb[0].mxu0
    %v2604 = vadd.f32 %v2180, %v2603
    %2605 = vmatprep.mubr.bf16.mxu0 %v2071
    %2606 = vmatmul.mubr.bf16.gmra.mrb[0].mxu0 %v2070
    %v2607 = vpop.f32.mrb[0].mxu0
    %v2608 = vadd.f32 %v2176, %v2607
    %v2609 = vpop.f32.mrb[0].mxu0
    %v2610 = vadd.f32 %v2180, %v2609
    %v2611 = vpop.f32.mrb[0].mxu0
    %v2612 = vadd.f32 %v2176, %v2611
    %v2613 = vpop.f32.mrb[0].mxu0
    %v2614 = vadd.f32 %v2180, %v2613
    %2615 = vmatprep.mubr.bf16.mxu0 %v2075
    %2616 = vmatmul.mubr.bf16.gmra.mrb[0].mxu0 %v2074
    %v2617 = vpop.f32.mrb[0].mxu0
    %v2618 = vadd.f32 %v2176, %v2617
    %v2619 = vpop.f32.mrb[0].mxu0
    %v2620 = vadd.f32 %v2180, %v2619
    %v2621 = vpop.f32.mrb[0].mxu0
    %v2622 = vadd.f32 %v2176, %v2621
    %v2623 = vpop.f32.mrb[0].mxu0
    %v2624 = vadd.f32 %v2180, %v2623
    %2625 = vmatprep.mubr.bf16.mxu0 %v2079
    %2626 = vmatmul.mubr.bf16.gmra.mrb[0].mxu0 %v2078
    %v2627 = vpop.f32.mrb[0].mxu0
    %v2628 = vadd.f32 %v2176, %v2627
    %v2629 = vpop.f32.mrb[0].mxu0
    %v2630 = vadd.f32 %v2180, %v2629
    %v2631 = vpop.f32.mrb[0].mxu0
    %v2632 = vadd.f32 %v2176, %v2631
    %v2633 = vpop.f32.mrb[0].mxu0
    %v2634 = vadd.f32 %v2180, %v2633
    %2635 = vmatprep.mubr.bf16.mxu0 %v2083
    %2636 = vmatmul.mubr.bf16.gmra.mrb[0].mxu0 %v2082
    %v2637 = vpop.f32.mrb[0].mxu0
    %v2638 = vadd.f32 %v2176, %v2637
    %v2639 = vpop.f32.mrb[0].mxu0
    %v2640 = vadd.f32 %v2180, %v2639
    %v2641 = vpop.f32.mrb[0].mxu0
    %v2642 = vadd.f32 %v2176, %v2641
    %v2643 = vpop.f32.mrb[0].mxu0
    %v2644 = vadd.f32 %v2180, %v2643
    %2645 = vmatprep.mubr.bf16.mxu0 %v2087
    %2646 = vmatmul.mubr.bf16.gmra.mrb[0].mxu0 %v2086
    %v2647 = vpop.f32.mrb[0].mxu0
    %v2648 = vadd.f32 %v2176, %v2647
    %v2649 = vpop.f32.mrb[0].mxu0
    %v2650 = vadd.f32 %v2180, %v2649
    %v2651 = vpop.f32.mrb[0].mxu0
    %v2652 = vadd.f32 %v2176, %v2651
    %v2653 = vpop.f32.mrb[0].mxu0
    %v2654 = vadd.f32 %v2180, %v2653
    %2655 = vmatprep.mubr.bf16.mxu0 %v2091
    %2656 = vmatmul.mubr.bf16.gmra.mrb[0].mxu0 %v2090
    %v2657 = vpop.f32.mrb[0].mxu0
    %v2658 = vadd.f32 %v2176, %v2657
    %v2659 = vpop.f32.mrb[0].mxu0
    %v2660 = vadd.f32 %v2180, %v2659
    %v2661 = vpop.f32.mrb[0].mxu0
    %v2662 = vadd.f32 %v2176, %v2661
    %v2663 = vpop.f32.mrb[0].mxu0
    %v2664 = vadd.f32 %v2180, %v2663
    %2665 = vmatprep.mubr.bf16.mxu0 %v2095
    %2666 = vmatmul.mubr.bf16.gmra.mrb[0].mxu0 %v2094
    %v2667 = vpop.f32.mrb[0].mxu0
    %v2668 = vadd.f32 %v2176, %v2667
    %v2669 = vpop.f32.mrb[0].mxu0
    %v2670 = vadd.f32 %v2180, %v2669
    %v2671 = vpop.f32.mrb[0].mxu0
    %v2672 = vadd.f32 %v2176, %v2671
    %v2673 = vpop.f32.mrb[0].mxu0
    %v2674 = vadd.f32 %v2180, %v2673
    %2675 = vmatprep.mubr.bf16.mxu0 %v2099
    %2676 = vmatmul.mubr.bf16.gmra.mrb[0].mxu0 %v2098
    %v2677 = vpop.f32.mrb[0].mxu0
    %v2678 = vadd.f32 %v2176, %v2677
    %v2679 = vpop.f32.mrb[0].mxu0
    %v2680 = vadd.f32 %v2180, %v2679
    %v2681 = vpop.f32.mrb[0].mxu0
    %v2682 = vadd.f32 %v2176, %v2681
    %v2683 = vpop.f32.mrb[0].mxu0
    %v2684 = vadd.f32 %v2180, %v2683
    %2685 = vmatprep.mubr.bf16.mxu0 %v2103
    %2686 = vmatmul.mubr.bf16.gmra.mrb[0].mxu0 %v2102
    %v2687 = vpop.f32.mrb[0].mxu0
    %v2688 = vadd.f32 %v2176, %v2687
    %v2689 = vpop.f32.mrb[0].mxu0
    %v2690 = vadd.f32 %v2180, %v2689
    %v2691 = vpop.f32.mrb[0].mxu0
    %v2692 = vadd.f32 %v2176, %v2691
    %v2693 = vpop.f32.mrb[0].mxu0
    %v2694 = vadd.f32 %v2180, %v2693
    %2695 = vdwg.mxu0
    %2696 = vmatprep.subr.bf16.mxu0 %v2408
    %2697 = vmatpush1.bf16.msra.mxu0 %v2407
    %2698 = vmatprep.subr.bf16.mxu0 %v2410
    %2699 = vmatpush1.bf16.msra.mxu0 %v2409
    %2700 = vmatprep.subr.bf16.mxu0 %v2412
    %2701 = vmatpush1.bf16.msra.mxu0 %v2411
    %2702 = vmatprep.subr.bf16.mxu0 %v2414
    %2703 = vmatpush1.bf16.msra.mxu0 %v2413
    %2704 = vmatprep.subr.bf16.mxu0 %v2416
    %2705 = vmatpush1.bf16.msra.mxu0 %v2415
    %2706 = vmatprep.subr.bf16.mxu0 %v2418
    %2707 = vmatpush1.bf16.msra.mxu0 %v2417
    %2708 = vmatprep.subr.bf16.mxu0 %v2420
    %2709 = vmatpush1.bf16.msra.mxu0 %v2419
    %2710 = vmatprep.subr.bf16.mxu0 %v2422
    %2711 = vmatpush1.bf16.msra.mxu0 %v2421
    %2712 = vmatprep.subr.bf16.mxu0 %v2424
    %2713 = vmatpush1.bf16.msra.mxu0 %v2423
    %2714 = vmatprep.subr.bf16.mxu0 %v2426
    %2715 = vmatpush1.bf16.msra.mxu0 %v2425
    %2716 = vmatprep.subr.bf16.mxu0 %v2428
    %2717 = vmatpush1.bf16.msra.mxu0 %v2427
    %2718 = vmatprep.subr.bf16.mxu0 %v2430
    %2719 = vmatpush1.bf16.msra.mxu0 %v2429
    %2720 = vmatprep.subr.bf16.mxu0 %v2432
    %2721 = vmatpush1.bf16.msra.mxu0 %v2431
    %2722 = vmatprep.subr.bf16.mxu0 %v2434
    %2723 = vmatpush1.bf16.msra.mxu0 %v2433
    %2724 = vmatprep.subr.bf16.mxu0 %v2436
    %2725 = vmatpush1.bf16.msra.mxu0 %v2435
    %2726 = vmatprep.subr.bf16.mxu0 %v2438
    %2727 = vmatpush1.bf16.msra.mxu0 %v2437
    %2728 = vmatprep.mubr.bf16.mxu0 %v2045
    %2729 = vmatmul.mubr.bf16.gmra.mrb[0].mxu0 %v2044
    %v2730 = vpop.f32.mrb[0].mxu0
    %v2731 = vadd.f32 %v2538, %v2730
    %v2732 = vpop.f32.mrb[0].mxu0
    %v2733 = vadd.f32 %v2540, %v2732
    %v2734 = vpop.f32.mrb[0].mxu0
    %v2735 = vadd.f32 %v2542, %v2734
    %v2736 = vpop.f32.mrb[0].mxu0
    %v2737 = vadd.f32 %v2544, %v2736
    %2738 = vmatprep.mubr.bf16.mxu0 %v2049
    %2739 = vmatmul.mubr.bf16.gmra.mrb[0].mxu0 %v2048
    %v2740 = vpop.f32.mrb[0].mxu0
    %v2741 = vadd.f32 %v2548, %v2740
    %v2742 = vpop.f32.mrb[0].mxu0
    %v2743 = vadd.f32 %v2550, %v2742
    %v2744 = vpop.f32.mrb[0].mxu0
    %v2745 = vadd.f32 %v2552, %v2744
    %v2746 = vpop.f32.mrb[0].mxu0
    %v2747 = vadd.f32 %v2554, %v2746
    %2748 = vmatprep.mubr.bf16.mxu0 %v2053
    %2749 = vmatmul.mubr.bf16.gmra.mrb[0].mxu0 %v2052
    %v2750 = vpop.f32.mrb[0].mxu0
    %v2751 = vadd.f32 %v2558, %v2750
    %v2752 = vpop.f32.mrb[0].mxu0
    %v2753 = vadd.f32 %v2560, %v2752
    %v2754 = vpop.f32.mrb[0].mxu0
    %v2755 = vadd.f32 %v2562, %v2754
    %v2756 = vpop.f32.mrb[0].mxu0
    %v2757 = vadd.f32 %v2564, %v2756
    %2758 = vmatprep.mubr.bf16.mxu0 %v2057
    %2759 = vmatmul.mubr.bf16.gmra.mrb[0].mxu0 %v2056
    %v2760 = vpop.f32.mrb[0].mxu0
    %v2761 = vadd.f32 %v2568, %v2760
    %v2762 = vpop.f32.mrb[0].mxu0
    %v2763 = vadd.f32 %v2570, %v2762
    %v2764 = vpop.f32.mrb[0].mxu0
    %v2765 = vadd.f32 %v2572, %v2764
    %v2766 = vpop.f32.mrb[0].mxu0
    %v2767 = vadd.f32 %v2574, %v2766
    %2768 = vmatprep.mubr.bf16.mxu0 %v2061
    %2769 = vmatmul.mubr.bf16.gmra.mrb[0].mxu0 %v2060
    %v2770 = vpop.f32.mrb[0].mxu0
    %v2771 = vadd.f32 %v2578, %v2770
    %v2772 = vpop.f32.mrb[0].mxu0
    %v2773 = vadd.f32 %v2580, %v2772
    %v2774 = vpop.f32.mrb[0].mxu0
    %v2775 = vadd.f32 %v2582, %v2774
    %v2776 = vpop.f32.mrb[0].mxu0
    %v2777 = vadd.f32 %v2584, %v2776
    %2778 = vmatprep.mubr.bf16.mxu0 %v2065
    %2779 = vmatmul.mubr.bf16.gmra.mrb[0].mxu0 %v2064
    %v2780 = vpop.f32.mrb[0].mxu0
    %v2781 = vadd.f32 %v2588, %v2780
    %v2782 = vpop.f32.mrb[0].mxu0
    %v2783 = vadd.f32 %v2590, %v2782
    %v2784 = vpop.f32.mrb[0].mxu0
    %v2785 = vadd.f32 %v2592, %v2784
    %v2786 = vpop.f32.mrb[0].mxu0
    %v2787 = vadd.f32 %v2594, %v2786
    %2788 = vmatprep.mubr.bf16.mxu0 %v2069
    %2789 = vmatmul.mubr.bf16.gmra.mrb[0].mxu0 %v2068
    %v2790 = vpop.f32.mrb[0].mxu0
    %v2791 = vadd.f32 %v2598, %v2790
    %v2792 = vpop.f32.mrb[0].mxu0
    %v2793 = vadd.f32 %v2600, %v2792
    %v2794 = vpop.f32.mrb[0].mxu0
    %v2795 = vadd.f32 %v2602, %v2794
    %v2796 = vpop.f32.mrb[0].mxu0
    %v2797 = vadd.f32 %v2604, %v2796
    %2798 = vmatprep.mubr.bf16.mxu0 %v2073
    %2799 = vmatmul.mubr.bf16.gmra.mrb[0].mxu0 %v2072
    %v2800 = vpop.f32.mrb[0].mxu0
    %v2801 = vadd.f32 %v2608, %v2800
    %v2802 = vpop.f32.mrb[0].mxu0
    %v2803 = vadd.f32 %v2610, %v2802
    %v2804 = vpop.f32.mrb[0].mxu0
    %v2805 = vadd.f32 %v2612, %v2804
    %v2806 = vpop.f32.mrb[0].mxu0
    %v2807 = vadd.f32 %v2614, %v2806
    %2808 = vmatprep.mubr.bf16.mxu0 %v2077
    %2809 = vmatmul.mubr.bf16.gmra.mrb[0].mxu0 %v2076
    %v2810 = vpop.f32.mrb[0].mxu0
    %v2811 = vadd.f32 %v2618, %v2810
    %v2812 = vpop.f32.mrb[0].mxu0
    %v2813 = vadd.f32 %v2620, %v2812
    %v2814 = vpop.f32.mrb[0].mxu0
    %v2815 = vadd.f32 %v2622, %v2814
    %v2816 = vpop.f32.mrb[0].mxu0
    %v2817 = vadd.f32 %v2624, %v2816
    %2818 = vmatprep.mubr.bf16.mxu0 %v2081
    %2819 = vmatmul.mubr.bf16.gmra.mrb[0].mxu0 %v2080
    %v2820 = vpop.f32.mrb[0].mxu0
    %v2821 = vadd.f32 %v2628, %v2820
    %v2822 = vpop.f32.mrb[0].mxu0
    %v2823 = vadd.f32 %v2630, %v2822
    %v2824 = vpop.f32.mrb[0].mxu0
    %v2825 = vadd.f32 %v2632, %v2824
    %v2826 = vpop.f32.mrb[0].mxu0
    %v2827 = vadd.f32 %v2634, %v2826
    %2828 = vmatprep.mubr.bf16.mxu0 %v2085
    %2829 = vmatmul.mubr.bf16.gmra.mrb[0].mxu0 %v2084
    %v2830 = vpop.f32.mrb[0].mxu0
    %v2831 = vadd.f32 %v2638, %v2830
    %v2832 = vpop.f32.mrb[0].mxu0
    %v2833 = vadd.f32 %v2640, %v2832
    %v2834 = vpop.f32.mrb[0].mxu0
    %v2835 = vadd.f32 %v2642, %v2834
    %v2836 = vpop.f32.mrb[0].mxu0
    %v2837 = vadd.f32 %v2644, %v2836
    %2838 = vmatprep.mubr.bf16.mxu0 %v2089
    %2839 = vmatmul.mubr.bf16.gmra.mrb[0].mxu0 %v2088
    %v2840 = vpop.f32.mrb[0].mxu0
    %v2841 = vadd.f32 %v2648, %v2840
    %v2842 = vpop.f32.mrb[0].mxu0
    %v2843 = vadd.f32 %v2650, %v2842
    %v2844 = vpop.f32.mrb[0].mxu0
    %v2845 = vadd.f32 %v2652, %v2844
    %v2846 = vpop.f32.mrb[0].mxu0
    %v2847 = vadd.f32 %v2654, %v2846
    %2848 = vmatprep.mubr.bf16.mxu0 %v2093
    %2849 = vmatmul.mubr.bf16.gmra.mrb[0].mxu0 %v2092
    %v2850 = vpop.f32.mrb[0].mxu0
    %v2851 = vadd.f32 %v2658, %v2850
    %v2852 = vpop.f32.mrb[0].mxu0
    %v2853 = vadd.f32 %v2660, %v2852
    %v2854 = vpop.f32.mrb[0].mxu0
    %v2855 = vadd.f32 %v2662, %v2854
    %v2856 = vpop.f32.mrb[0].mxu0
    %v2857 = vadd.f32 %v2664, %v2856
    %2858 = vmatprep.mubr.bf16.mxu0 %v2097
    %2859 = vmatmul.mubr.bf16.gmra.mrb[0].mxu0 %v2096
    %v2860 = vpop.f32.mrb[0].mxu0
    %v2861 = vadd.f32 %v2668, %v2860
    %v2862 = vpop.f32.mrb[0].mxu0
    %v2863 = vadd.f32 %v2670, %v2862
    %v2864 = vpop.f32.mrb[0].mxu0
    %v2865 = vadd.f32 %v2672, %v2864
    %v2866 = vpop.f32.mrb[0].mxu0
    %v2867 = vadd.f32 %v2674, %v2866
    %2868 = vmatprep.mubr.bf16.mxu0 %v2101
    %2869 = vmatmul.mubr.bf16.gmra.mrb[0].mxu0 %v2100
    %v2870 = vpop.f32.mrb[0].mxu0
    %v2871 = vadd.f32 %v2678, %v2870
    %v2872 = vpop.f32.mrb[0].mxu0
    %v2873 = vadd.f32 %v2680, %v2872
    %v2874 = vpop.f32.mrb[0].mxu0
    %v2875 = vadd.f32 %v2682, %v2874
    %v2876 = vpop.f32.mrb[0].mxu0
    %v2877 = vadd.f32 %v2684, %v2876
    %2878 = vmatprep.mubr.bf16.mxu0 %v2105
    %2879 = vmatmul.mubr.bf16.gmra.mrb[0].mxu0 %v2104
    %v2880 = vpop.f32.mrb[0].mxu0
    %v2881 = vadd.f32 %v2688, %v2880
    %v2882 = vpop.f32.mrb[0].mxu0
    %v2883 = vadd.f32 %v2690, %v2882
    %v2884 = vpop.f32.mrb[0].mxu0
    %v2885 = vadd.f32 %v2692, %v2884
    %v2886 = vpop.f32.mrb[0].mxu0
    %v2887 = vadd.f32 %v2694, %v2886
    %2888 = vdwg.mxu0
    %v2889 = vadd.f32 %v2731, %v2733
    %2890 = vadd.xlane.f32.xlu0 %v2889
    %v2891 = vpop.xlane.xlu0 %2890
    %v2892 = vadd.f32 %v2735, %v2737
    %2893 = vadd.xlane.f32.xlu0 %v2892
    %v2894 = vpop.xlane.xlu0 %2893
    %v2895 = vadd.f32 %v2741, %v2743
    %2896 = vadd.xlane.f32.xlu0 %v2895
    %v2897 = vpop.xlane.xlu0 %2896
    %v2898 = vadd.f32 %v2745, %v2747
    %2899 = vadd.xlane.f32.xlu0 %v2898
    %v2900 = vpop.xlane.xlu0 %2899
    %v2901 = vadd.f32 %v2751, %v2753
    %2902 = vadd.xlane.f32.xlu0 %v2901
    %v2903 = vpop.xlane.xlu0 %2902
    %v2904 = vadd.f32 %v2755, %v2757
    %2905 = vadd.xlane.f32.xlu0 %v2904
    %v2906 = vpop.xlane.xlu0 %2905
    %v2907 = vadd.f32 %v2761, %v2763
    %2908 = vadd.xlane.f32.xlu0 %v2907
    %v2909 = vpop.xlane.xlu0 %2908
    %v2910 = vadd.f32 %v2765, %v2767
    %2911 = vadd.xlane.f32.xlu0 %v2910
    %v2912 = vpop.xlane.xlu0 %2911
    %v2913 = vadd.f32 %v2771, %v2773
    %2914 = vadd.xlane.f32.xlu0 %v2913
    %v2915 = vpop.xlane.xlu0 %2914
    %v2916 = vadd.f32 %v2775, %v2777
    %2917 = vadd.xlane.f32.xlu0 %v2916
    %v2918 = vpop.xlane.xlu0 %2917
    %v2919 = vadd.f32 %v2781, %v2783
    %2920 = vadd.xlane.f32.xlu0 %v2919
    %v2921 = vpop.xlane.xlu0 %2920
    %v2922 = vadd.f32 %v2785, %v2787
    %2923 = vadd.xlane.f32.xlu0 %v2922
    %v2924 = vpop.xlane.xlu0 %2923
    %v2925 = vadd.f32 %v2791, %v2793
    %2926 = vadd.xlane.f32.xlu0 %v2925
    %v2927 = vpop.xlane.xlu0 %2926
    %v2928 = vadd.f32 %v2795, %v2797
    %2929 = vadd.xlane.f32.xlu0 %v2928
    %v2930 = vpop.xlane.xlu0 %2929
    %v2931 = vadd.f32 %v2801, %v2803
    %2932 = vadd.xlane.f32.xlu0 %v2931
    %v2933 = vpop.xlane.xlu0 %2932
    %v2934 = vadd.f32 %v2805, %v2807
    %2935 = vadd.xlane.f32.xlu0 %v2934
    %v2936 = vpop.xlane.xlu0 %2935
    %v2937 = vadd.f32 %v2811, %v2813
    %2938 = vadd.xlane.f32.xlu0 %v2937
    %v2939 = vpop.xlane.xlu0 %2938
    %v2940 = vadd.f32 %v2815, %v2817
    %2941 = vadd.xlane.f32.xlu0 %v2940
    %v2942 = vpop.xlane.xlu0 %2941
    %v2943 = vadd.f32 %v2821, %v2823
    %2944 = vadd.xlane.f32.xlu0 %v2943
    %v2945 = vpop.xlane.xlu0 %2944
    %v2946 = vadd.f32 %v2825, %v2827
    %2947 = vadd.xlane.f32.xlu0 %v2946
    %v2948 = vpop.xlane.xlu0 %2947
    %v2949 = vadd.f32 %v2831, %v2833
    %2950 = vadd.xlane.f32.xlu0 %v2949
    %v2951 = vpop.xlane.xlu0 %2950
    %v2952 = vadd.f32 %v2835, %v2837
    %2953 = vadd.xlane.f32.xlu0 %v2952
    %v2954 = vpop.xlane.xlu0 %2953
    %v2955 = vadd.f32 %v2841, %v2843
    %2956 = vadd.xlane.f32.xlu0 %v2955
    %v2957 = vpop.xlane.xlu0 %2956
    %v2958 = vadd.f32 %v2845, %v2847
    %2959 = vadd.xlane.f32.xlu0 %v2958
    %v2960 = vpop.xlane.xlu0 %2959
    %v2961 = vadd.f32 %v2851, %v2853
    %2962 = vadd.xlane.f32.xlu0 %v2961
    %v2963 = vpop.xlane.xlu0 %2962
    %v2964 = vadd.f32 %v2855, %v2857
    %2965 = vadd.xlane.f32.xlu0 %v2964
    %v2966 = vpop.xlane.xlu0 %2965
    %v2967 = vadd.f32 %v2861, %v2863
    %2968 = vadd.xlane.f32.xlu0 %v2967
    %v2969 = vpop.xlane.xlu0 %2968
    %v2970 = vadd.f32 %v2865, %v2867
    %2971 = vadd.xlane.f32.xlu0 %v2970
    %v2972 = vpop.xlane.xlu0 %2971
    %v2973 = vadd.f32 %v2871, %v2873
    %2974 = vadd.xlane.f32.xlu0 %v2973
    %v2975 = vpop.xlane.xlu0 %2974
    %v2976 = vadd.f32 %v2875, %v2877
    %2977 = vadd.xlane.f32.xlu0 %v2976
    %v2978 = vpop.xlane.xlu0 %2977
    %v2979 = vadd.f32 %v2881, %v2883
    %2980 = vadd.xlane.f32.xlu0 %v2979
    %v2981 = vpop.xlane.xlu0 %2980
    %v2982 = vadd.f32 %v2885, %v2887
    %2983 = vadd.xlane.f32.xlu0 %v2982
    %v2984 = vpop.xlane.xlu0 %2983
    %v2985 = vmul.f32 %v2891, 0.00390625
    %v2986 = vmul.f32 %v2894, 0.00390625
    %v2987 = vmul.f32 %v2897, 0.00390625
    %v2988 = vmul.f32 %v2900, 0.00390625
    %v2989 = vmul.f32 %v2903, 0.00390625
    %v2990 = vmul.f32 %v2906, 0.00390625
    %v2991 = vmul.f32 %v2909, 0.00390625
    %v2992 = vmul.f32 %v2912, 0.00390625
    %v2993 = vmul.f32 %v2915, 0.00390625
    %v2994 = vmul.f32 %v2918, 0.00390625
    %v2995 = vmul.f32 %v2921, 0.00390625
    %v2996 = vmul.f32 %v2924, 0.00390625
    %v2997 = vmul.f32 %v2927, 0.00390625
    %v2998 = vmul.f32 %v2930, 0.00390625
    %v2999 = vmul.f32 %v2933, 0.00390625
    %v3000 = vmul.f32 %v2936, 0.00390625
    %v3001 = vmul.f32 %v2939, 0.00390625
    %v3002 = vmul.f32 %v2942, 0.00390625
    %v3003 = vmul.f32 %v2945, 0.00390625
    %v3004 = vmul.f32 %v2948, 0.00390625
    %v3005 = vmul.f32 %v2951, 0.00390625
    %v3006 = vmul.f32 %v2954, 0.00390625
    %v3007 = vmul.f32 %v2957, 0.00390625
    %v3008 = vmul.f32 %v2960, 0.00390625
    %v3009 = vmul.f32 %v2963, 0.00390625
    %v3010 = vmul.f32 %v2966, 0.00390625
    %v3011 = vmul.f32 %v2969, 0.00390625
    %v3012 = vmul.f32 %v2972, 0.00390625
    %v3013 = vmul.f32 %v2975, 0.00390625
    %v3014 = vmul.f32 %v2978, 0.00390625
    %v3015 = vmul.f32 %v2981, 0.00390625
    %v3016 = vmul.f32 %v2984, 0.00390625
    %v3017 = vmul.f32 %v2731, %v2731
    %v3018 = vmul.f32 %v2733, %v2733
    %v3019 = vmul.f32 %v2735, %v2735
    %v3020 = vmul.f32 %v2737, %v2737
    %v3021 = vmul.f32 %v2741, %v2741
    %v3022 = vmul.f32 %v2743, %v2743
    %v3023 = vmul.f32 %v2745, %v2745
    %v3024 = vmul.f32 %v2747, %v2747
    %v3025 = vmul.f32 %v2751, %v2751
    %v3026 = vmul.f32 %v2753, %v2753
    %v3027 = vmul.f32 %v2755, %v2755
    %v3028 = vmul.f32 %v2757, %v2757
    %v3029 = vmul.f32 %v2761, %v2761
    %v3030 = vmul.f32 %v2763, %v2763
    %v3031 = vmul.f32 %v2765, %v2765
    %v3032 = vmul.f32 %v2767, %v2767
    %v3033 = vmul.f32 %v2771, %v2771
    %v3034 = vmul.f32 %v2773, %v2773
    %v3035 = vmul.f32 %v2775, %v2775
    %v3036 = vmul.f32 %v2777, %v2777
    %v3037 = vmul.f32 %v2781, %v2781
    %v3038 = vmul.f32 %v2783, %v2783
    %v3039 = vmul.f32 %v2785, %v2785
    %v3040 = vmul.f32 %v2787, %v2787
    %v3041 = vmul.f32 %v2791, %v2791
    %v3042 = vmul.f32 %v2793, %v2793
    %v3043 = vmul.f32 %v2795, %v2795
    %v3044 = vmul.f32 %v2797, %v2797
    %v3045 = vmul.f32 %v2801, %v2801
    %v3046 = vmul.f32 %v2803, %v2803
    %v3047 = vmul.f32 %v2805, %v2805
    %v3048 = vmul.f32 %v2807, %v2807
    %v3049 = vmul.f32 %v2811, %v2811
    %v3050 = vmul.f32 %v2813, %v2813
    %v3051 = vmul.f32 %v2815, %v2815
    %v3052 = vmul.f32 %v2817, %v2817
    %v3053 = vmul.f32 %v2821, %v2821
    %v3054 = vmul.f32 %v2823, %v2823
    %v3055 = vmul.f32 %v2825, %v2825
    %v3056 = vmul.f32 %v2827, %v2827
    %v3057 = vmul.f32 %v2831, %v2831
    %v3058 = vmul.f32 %v2833, %v2833
    %v3059 = vmul.f32 %v2835, %v2835
    %v3060 = vmul.f32 %v2837, %v2837
    %v3061 = vmul.f32 %v2841, %v2841
    %v3062 = vmul.f32 %v2843, %v2843
    %v3063 = vmul.f32 %v2845, %v2845
    %v3064 = vmul.f32 %v2847, %v2847
    %v3065 = vmul.f32 %v2851, %v2851
    %v3066 = vmul.f32 %v2853, %v2853
    %v3067 = vmul.f32 %v2855, %v2855
    %v3068 = vmul.f32 %v2857, %v2857
    %v3069 = vmul.f32 %v2861, %v2861
    %v3070 = vmul.f32 %v2863, %v2863
    %v3071 = vmul.f32 %v2865, %v2865
    %v3072 = vmul.f32 %v2867, %v2867
    %v3073 = vmul.f32 %v2871, %v2871
    %v3074 = vmul.f32 %v2873, %v2873
    %v3075 = vmul.f32 %v2875, %v2875
    %v3076 = vmul.f32 %v2877, %v2877
    %v3077 = vmul.f32 %v2881, %v2881
    %v3078 = vmul.f32 %v2883, %v2883
    %v3079 = vmul.f32 %v2885, %v2885
    %v3080 = vmul.f32 %v2887, %v2887
    %v3081 = vadd.f32 %v3017, %v3018
    %3082 = vadd.xlane.f32.xlu0 %v3081
    %v3083 = vpop.xlane.xlu0 %3082
    %v3084 = vadd.f32 %v3019, %v3020
    %3085 = vadd.xlane.f32.xlu0 %v3084
    %v3086 = vpop.xlane.xlu0 %3085
    %v3087 = vadd.f32 %v3021, %v3022
    %3088 = vadd.xlane.f32.xlu0 %v3087
    %v3089 = vpop.xlane.xlu0 %3088
    %v3090 = vadd.f32 %v3023, %v3024
    %3091 = vadd.xlane.f32.xlu0 %v3090
    %v3092 = vpop.xlane.xlu0 %3091
    %v3093 = vadd.f32 %v3025, %v3026
    %3094 = vadd.xlane.f32.xlu0 %v3093
    %v3095 = vpop.xlane.xlu0 %3094
    %v3096 = vadd.f32 %v3027, %v3028
    %3097 = vadd.xlane.f32.xlu0 %v3096
    %v3098 = vpop.xlane.xlu0 %3097
    %v3099 = vadd.f32 %v3029, %v3030
    %3100 = vadd.xlane.f32.xlu0 %v3099
    %v3101 = vpop.xlane.xlu0 %3100
    %v3102 = vadd.f32 %v3031, %v3032
    %3103 = vadd.xlane.f32.xlu0 %v3102
    %v3104 = vpop.xlane.xlu0 %3103
    %v3105 = vadd.f32 %v3033, %v3034
    %3106 = vadd.xlane.f32.xlu0 %v3105
    %v3107 = vpop.xlane.xlu0 %3106
    %v3108 = vadd.f32 %v3035, %v3036
    %3109 = vadd.xlane.f32.xlu0 %v3108
    %v3110 = vpop.xlane.xlu0 %3109
    %v3111 = vadd.f32 %v3037, %v3038
    %3112 = vadd.xlane.f32.xlu0 %v3111
    %v3113 = vpop.xlane.xlu0 %3112
    %v3114 = vadd.f32 %v3039, %v3040
    %3115 = vadd.xlane.f32.xlu0 %v3114
    %v3116 = vpop.xlane.xlu0 %3115
    %v3117 = vadd.f32 %v3041, %v3042
    %3118 = vadd.xlane.f32.xlu0 %v3117
    %v3119 = vpop.xlane.xlu0 %3118
    %v3120 = vadd.f32 %v3043, %v3044
    %3121 = vadd.xlane.f32.xlu0 %v3120
    %v3122 = vpop.xlane.xlu0 %3121
    %v3123 = vadd.f32 %v3045, %v3046
    %3124 = vadd.xlane.f32.xlu0 %v3123
    %v3125 = vpop.xlane.xlu0 %3124
    %v3126 = vadd.f32 %v3047, %v3048
    %3127 = vadd.xlane.f32.xlu0 %v3126
    %v3128 = vpop.xlane.xlu0 %3127
    %v3129 = vadd.f32 %v3049, %v3050
    %3130 = vadd.xlane.f32.xlu0 %v3129
    %v3131 = vpop.xlane.xlu0 %3130
    %v3132 = vadd.f32 %v3051, %v3052
    %3133 = vadd.xlane.f32.xlu0 %v3132
    %v3134 = vpop.xlane.xlu0 %3133
    %v3135 = vadd.f32 %v3053, %v3054
    %3136 = vadd.xlane.f32.xlu0 %v3135
    %v3137 = vpop.xlane.xlu0 %3136
    %v3138 = vadd.f32 %v3055, %v3056
    %3139 = vadd.xlane.f32.xlu0 %v3138
    %v3140 = vpop.xlane.xlu0 %3139
    %v3141 = vadd.f32 %v3057, %v3058
    %3142 = vadd.xlane.f32.xlu0 %v3141
    %v3143 = vpop.xlane.xlu0 %3142
    %v3144 = vadd.f32 %v3059, %v3060
    %3145 = vadd.xlane.f32.xlu0 %v3144
    %v3146 = vpop.xlane.xlu0 %3145
    %v3147 = vadd.f32 %v3061, %v3062
    %3148 = vadd.xlane.f32.xlu0 %v3147
    %v3149 = vpop.xlane.xlu0 %3148
    %v3150 = vadd.f32 %v3063, %v3064
    %3151 = vadd.xlane.f32.xlu0 %v3150
    %v3152 = vpop.xlane.xlu0 %3151
    %v3153 = vadd.f32 %v3065, %v3066
    %3154 = vadd.xlane.f32.xlu0 %v3153
    %v3155 = vpop.xlane.xlu0 %3154
    %v3156 = vadd.f32 %v3067, %v3068
    %3157 = vadd.xlane.f32.xlu0 %v3156
    %v3158 = vpop.xlane.xlu0 %3157
    %v3159 = vadd.f32 %v3069, %v3070
    %3160 = vadd.xlane.f32.xlu0 %v3159
    %v3161 = vpop.xlane.xlu0 %3160
    %v3162 = vadd.f32 %v3071, %v3072
    %3163 = vadd.xlane.f32.xlu0 %v3162
    %v3164 = vpop.xlane.xlu0 %3163
    %v3165 = vadd.f32 %v3073, %v3074
    %3166 = vadd.xlane.f32.xlu0 %v3165
    %v3167 = vpop.xlane.xlu0 %3166
    %v3168 = vadd.f32 %v3075, %v3076
    %3169 = vadd.xlane.f32.xlu0 %v3168
    %v3170 = vpop.xlane.xlu0 %3169
    %v3171 = vadd.f32 %v3077, %v3078
    %3172 = vadd.xlane.f32.xlu0 %v3171
    %v3173 = vpop.xlane.xlu0 %3172
    %v3174 = vadd.f32 %v3079, %v3080
    %3175 = vadd.xlane.f32.xlu0 %v3174
    %v3176 = vpop.xlane.xlu0 %3175
    %v3177 = vmul.f32 %v3083, 0.00390625
    %v3178 = vmul.f32 %v3086, 0.00390625
    %v3179 = vmul.f32 %v3089, 0.00390625
    %v3180 = vmul.f32 %v3092, 0.00390625
    %v3181 = vmul.f32 %v3095, 0.00390625
    %v3182 = vmul.f32 %v3098, 0.00390625
    %v3183 = vmul.f32 %v3101, 0.00390625
    %v3184 = vmul.f32 %v3104, 0.00390625
    %v3185 = vmul.f32 %v3107, 0.00390625
    %v3186 = vmul.f32 %v3110, 0.00390625
    %v3187 = vmul.f32 %v3113, 0.00390625
    %v3188 = vmul.f32 %v3116, 0.00390625
    %v3189 = vmul.f32 %v3119, 0.00390625
    %v3190 = vmul.f32 %v3122, 0.00390625
    %v3191 = vmul.f32 %v3125, 0.00390625
    %v3192 = vmul.f32 %v3128, 0.00390625
    %v3193 = vmul.f32 %v3131, 0.00390625
    %v3194 = vmul.f32 %v3134, 0.00390625
    %v3195 = vmul.f32 %v3137, 0.00390625
    %v3196 = vmul.f32 %v3140, 0.00390625
    %v3197 = vmul.f32 %v3143, 0.00390625
    %v3198 = vmul.f32 %v3146, 0.00390625
    %v3199 = vmul.f32 %v3149, 0.00390625
    %v3200 = vmul.f32 %v3152, 0.00390625
    %v3201 = vmul.f32 %v3155, 0.00390625
    %v3202 = vmul.f32 %v3158, 0.00390625
    %v3203 = vmul.f32 %v3161, 0.00390625
    %v3204 = vmul.f32 %v3164, 0.00390625
    %v3205 = vmul.f32 %v3167, 0.00390625
    %v3206 = vmul.f32 %v3170, 0.00390625
    %v3207 = vmul.f32 %v3173, 0.00390625
    %v3208 = vmul.f32 %v3176, 0.00390625
    %v3209 = vmul.f32 %v2985, %v2985
    %v3210 = vmul.f32 %v2986, %v2986
    %v3211 = vmul.f32 %v2987, %v2987
    %v3212 = vmul.f32 %v2988, %v2988
    %v3213 = vmul.f32 %v2989, %v2989
    %v3214 = vmul.f32 %v2990, %v2990
    %v3215 = vmul.f32 %v2991, %v2991
    %v3216 = vmul.f32 %v2992, %v2992
    %v3217 = vmul.f32 %v2993, %v2993
    %v3218 = vmul.f32 %v2994, %v2994
    %v3219 = vmul.f32 %v2995, %v2995
    %v3220 = vmul.f32 %v2996, %v2996
    %v3221 = vmul.f32 %v2997, %v2997
    %v3222 = vmul.f32 %v2998, %v2998
    %v3223 = vmul.f32 %v2999, %v2999
    %v3224 = vmul.f32 %v3000, %v3000
    %v3225 = vmul.f32 %v3001, %v3001
    %v3226 = vmul.f32 %v3002, %v3002
    %v3227 = vmul.f32 %v3003, %v3003
    %v3228 = vmul.f32 %v3004, %v3004
    %v3229 = vmul.f32 %v3005, %v3005
    %v3230 = vmul.f32 %v3006, %v3006
    %v3231 = vmul.f32 %v3007, %v3007
    %v3232 = vmul.f32 %v3008, %v3008
    %v3233 = vmul.f32 %v3009, %v3009
    %v3234 = vmul.f32 %v3010, %v3010
    %v3235 = vmul.f32 %v3011, %v3011
    %v3236 = vmul.f32 %v3012, %v3012
    %v3237 = vmul.f32 %v3013, %v3013
    %v3238 = vmul.f32 %v3014, %v3014
    %v3239 = vmul.f32 %v3015, %v3015
    %v3240 = vmul.f32 %v3016, %v3016
    %v3241 = vsub.f32 %v3177, %v3209
    %v3242 = vsub.f32 %v3178, %v3210
    %v3243 = vsub.f32 %v3179, %v3211
    %v3244 = vsub.f32 %v3180, %v3212
    %v3245 = vsub.f32 %v3181, %v3213
    %v3246 = vsub.f32 %v3182, %v3214
    %v3247 = vsub.f32 %v3183, %v3215
    %v3248 = vsub.f32 %v3184, %v3216
    %v3249 = vsub.f32 %v3185, %v3217
    %v3250 = vsub.f32 %v3186, %v3218
    %v3251 = vsub.f32 %v3187, %v3219
    %v3252 = vsub.f32 %v3188, %v3220
    %v3253 = vsub.f32 %v3189, %v3221
    %v3254 = vsub.f32 %v3190, %v3222
    %v3255 = vsub.f32 %v3191, %v3223
    %v3256 = vsub.f32 %v3192, %v3224
    %v3257 = vsub.f32 %v3193, %v3225
    %v3258 = vsub.f32 %v3194, %v3226
    %v3259 = vsub.f32 %v3195, %v3227
    %v3260 = vsub.f32 %v3196, %v3228
    %v3261 = vsub.f32 %v3197, %v3229
    %v3262 = vsub.f32 %v3198, %v3230
    %v3263 = vsub.f32 %v3199, %v3231
    %v3264 = vsub.f32 %v3200, %v3232
    %v3265 = vsub.f32 %v3201, %v3233
    %v3266 = vsub.f32 %v3202, %v3234
    %v3267 = vsub.f32 %v3203, %v3235
    %v3268 = vsub.f32 %v3204, %v3236
    %v3269 = vsub.f32 %v3205, %v3237
    %v3270 = vsub.f32 %v3206, %v3238
    %v3271 = vsub.f32 %v3207, %v3239
    %v3272 = vsub.f32 %v3208, %v3240
    %v3273 = vadd.f32 %v3241, 1e-05
    %v3274 = vadd.f32 %v3242, 1e-05
    %v3275 = vadd.f32 %v3243, 1e-05
    %v3276 = vadd.f32 %v3244, 1e-05
    %v3277 = vadd.f32 %v3245, 1e-05
    %v3278 = vadd.f32 %v3246, 1e-05
    %v3279 = vadd.f32 %v3247, 1e-05
    %v3280 = vadd.f32 %v3248, 1e-05
    %v3281 = vadd.f32 %v3249, 1e-05
    %v3282 = vadd.f32 %v3250, 1e-05
    %v3283 = vadd.f32 %v3251, 1e-05
    %v3284 = vadd.f32 %v3252, 1e-05
    %v3285 = vadd.f32 %v3253, 1e-05
    %v3286 = vadd.f32 %v3254, 1e-05
    %v3287 = vadd.f32 %v3255, 1e-05
    %v3288 = vadd.f32 %v3256, 1e-05
    %v3289 = vadd.f32 %v3257, 1e-05
    %v3290 = vadd.f32 %v3258, 1e-05
    %v3291 = vadd.f32 %v3259, 1e-05
    %v3292 = vadd.f32 %v3260, 1e-05
    %v3293 = vadd.f32 %v3261, 1e-05
    %v3294 = vadd.f32 %v3262, 1e-05
    %v3295 = vadd.f32 %v3263, 1e-05
    %v3296 = vadd.f32 %v3264, 1e-05
    %v3297 = vadd.f32 %v3265, 1e-05
    %v3298 = vadd.f32 %v3266, 1e-05
    %v3299 = vadd.f32 %v3267, 1e-05
    %v3300 = vadd.f32 %v3268, 1e-05
    %v3301 = vadd.f32 %v3269, 1e-05
    %v3302 = vadd.f32 %v3270, 1e-05
    %v3303 = vadd.f32 %v3271, 1e-05
    %v3304 = vadd.f32 %v3272, 1e-05
    %v3305 = vrsqrt.pop %v3273
    %v3306 = vrsqrt.pop %v3274
    %v3307 = vrsqrt.pop %v3275
    %v3308 = vrsqrt.pop %v3276
    %v3309 = vrsqrt.pop %v3277
    %v3310 = vrsqrt.pop %v3278
    %v3311 = vrsqrt.pop %v3279
    %v3312 = vrsqrt.pop %v3280
    %v3313 = vrsqrt.pop %v3281
    %v3314 = vrsqrt.pop %v3282
    %v3315 = vrsqrt.pop %v3283
    %v3316 = vrsqrt.pop %v3284
    %v3317 = vrsqrt.pop %v3285
    %v3318 = vrsqrt.pop %v3286
    %v3319 = vrsqrt.pop %v3287
    %v3320 = vrsqrt.pop %v3288
    %v3321 = vrsqrt.pop %v3289
    %v3322 = vrsqrt.pop %v3290
    %v3323 = vrsqrt.pop %v3291
    %v3324 = vrsqrt.pop %v3292
    %v3325 = vrsqrt.pop %v3293
    %v3326 = vrsqrt.pop %v3294
    %v3327 = vrsqrt.pop %v3295
    %v3328 = vrsqrt.pop %v3296
    %v3329 = vrsqrt.pop %v3297
    %v3330 = vrsqrt.pop %v3298
    %v3331 = vrsqrt.pop %v3299
    %v3332 = vrsqrt.pop %v3300
    %v3333 = vrsqrt.pop %v3301
    %v3334 = vrsqrt.pop %v3302
    %v3335 = vrsqrt.pop %v3303
    %v3336 = vrsqrt.pop %v3304
    %v3337 = vsub.f32 %v2731, %v2985
    %v3338 = vsub.f32 %v2733, %v2985
    %v3339 = vsub.f32 %v2735, %v2986
    %v3340 = vsub.f32 %v2737, %v2986
    %v3341 = vsub.f32 %v2741, %v2987
    %v3342 = vsub.f32 %v2743, %v2987
    %v3343 = vsub.f32 %v2745, %v2988
    %v3344 = vsub.f32 %v2747, %v2988
    %v3345 = vsub.f32 %v2751, %v2989
    %v3346 = vsub.f32 %v2753, %v2989
    %v3347 = vsub.f32 %v2755, %v2990
    %v3348 = vsub.f32 %v2757, %v2990
    %v3349 = vsub.f32 %v2761, %v2991
    %v3350 = vsub.f32 %v2763, %v2991
    %v3351 = vsub.f32 %v2765, %v2992
    %v3352 = vsub.f32 %v2767, %v2992
    %v3353 = vsub.f32 %v2771, %v2993
    %v3354 = vsub.f32 %v2773, %v2993
    %v3355 = vsub.f32 %v2775, %v2994
    %v3356 = vsub.f32 %v2777, %v2994
    %v3357 = vsub.f32 %v2781, %v2995
    %v3358 = vsub.f32 %v2783, %v2995
    %v3359 = vsub.f32 %v2785, %v2996
    %v3360 = vsub.f32 %v2787, %v2996
    %v3361 = vsub.f32 %v2791, %v2997
    %v3362 = vsub.f32 %v2793, %v2997
    %v3363 = vsub.f32 %v2795, %v2998
    %v3364 = vsub.f32 %v2797, %v2998
    %v3365 = vsub.f32 %v2801, %v2999
    %v3366 = vsub.f32 %v2803, %v2999
    %v3367 = vsub.f32 %v2805, %v3000
    %v3368 = vsub.f32 %v2807, %v3000
    %v3369 = vsub.f32 %v2811, %v3001
    %v3370 = vsub.f32 %v2813, %v3001
    %v3371 = vsub.f32 %v2815, %v3002
    %v3372 = vsub.f32 %v2817, %v3002
    %v3373 = vsub.f32 %v2821, %v3003
    %v3374 = vsub.f32 %v2823, %v3003
    %v3375 = vsub.f32 %v2825, %v3004
    %v3376 = vsub.f32 %v2827, %v3004
    %v3377 = vsub.f32 %v2831, %v3005
    %v3378 = vsub.f32 %v2833, %v3005
    %v3379 = vsub.f32 %v2835, %v3006
    %v3380 = vsub.f32 %v2837, %v3006
    %v3381 = vsub.f32 %v2841, %v3007
    %v3382 = vsub.f32 %v2843, %v3007
    %v3383 = vsub.f32 %v2845, %v3008
    %v3384 = vsub.f32 %v2847, %v3008
    %v3385 = vsub.f32 %v2851, %v3009
    %v3386 = vsub.f32 %v2853, %v3009
    %v3387 = vsub.f32 %v2855, %v3010
    %v3388 = vsub.f32 %v2857, %v3010
    %v3389 = vsub.f32 %v2861, %v3011
    %v3390 = vsub.f32 %v2863, %v3011
    %v3391 = vsub.f32 %v2865, %v3012
    %v3392 = vsub.f32 %v2867, %v3012
    %v3393 = vsub.f32 %v2871, %v3013
    %v3394 = vsub.f32 %v2873, %v3013
    %v3395 = vsub.f32 %v2875, %v3014
    %v3396 = vsub.f32 %v2877, %v3014
    %v3397 = vsub.f32 %v2881, %v3015
    %v3398 = vsub.f32 %v2883, %v3015
    %v3399 = vsub.f32 %v2885, %v3016
    %v3400 = vsub.f32 %v2887, %v3016
    %v3401 = vmul.f32 %v3337, %v3305
    %v3402 = vmul.f32 %v3338, %v3305
    %v3403 = vmul.f32 %v3339, %v3306
    %v3404 = vmul.f32 %v3340, %v3306
    %v3405 = vmul.f32 %v3341, %v3307
    %v3406 = vmul.f32 %v3342, %v3307
    %v3407 = vmul.f32 %v3343, %v3308
    %v3408 = vmul.f32 %v3344, %v3308
    %v3409 = vmul.f32 %v3345, %v3309
    %v3410 = vmul.f32 %v3346, %v3309
    %v3411 = vmul.f32 %v3347, %v3310
    %v3412 = vmul.f32 %v3348, %v3310
    %v3413 = vmul.f32 %v3349, %v3311
    %v3414 = vmul.f32 %v3350, %v3311
    %v3415 = vmul.f32 %v3351, %v3312
    %v3416 = vmul.f32 %v3352, %v3312
    %v3417 = vmul.f32 %v3353, %v3313
    %v3418 = vmul.f32 %v3354, %v3313
    %v3419 = vmul.f32 %v3355, %v3314
    %v3420 = vmul.f32 %v3356, %v3314
    %v3421 = vmul.f32 %v3357, %v3315
    %v3422 = vmul.f32 %v3358, %v3315
    %v3423 = vmul.f32 %v3359, %v3316
    %v3424 = vmul.f32 %v3360, %v3316
    %v3425 = vmul.f32 %v3361, %v3317
    %v3426 = vmul.f32 %v3362, %v3317
    %v3427 = vmul.f32 %v3363, %v3318
    %v3428 = vmul.f32 %v3364, %v3318
    %v3429 = vmul.f32 %v3365, %v3319
    %v3430 = vmul.f32 %v3366, %v3319
    %v3431 = vmul.f32 %v3367, %v3320
    %v3432 = vmul.f32 %v3368, %v3320
    %v3433 = vmul.f32 %v3369, %v3321
    %v3434 = vmul.f32 %v3370, %v3321
    %v3435 = vmul.f32 %v3371, %v3322
    %v3436 = vmul.f32 %v3372, %v3322
    %v3437 = vmul.f32 %v3373, %v3323
    %v3438 = vmul.f32 %v3374, %v3323
    %v3439 = vmul.f32 %v3375, %v3324
    %v3440 = vmul.f32 %v3376, %v3324
    %v3441 = vmul.f32 %v3377, %v3325
    %v3442 = vmul.f32 %v3378, %v3325
    %v3443 = vmul.f32 %v3379, %v3326
    %v3444 = vmul.f32 %v3380, %v3326
    %v3445 = vmul.f32 %v3381, %v3327
    %v3446 = vmul.f32 %v3382, %v3327
    %v3447 = vmul.f32 %v3383, %v3328
    %v3448 = vmul.f32 %v3384, %v3328
    %v3449 = vmul.f32 %v3385, %v3329
    %v3450 = vmul.f32 %v3386, %v3329
    %v3451 = vmul.f32 %v3387, %v3330
    %v3452 = vmul.f32 %v3388, %v3330
    %v3453 = vmul.f32 %v3389, %v3331
    %v3454 = vmul.f32 %v3390, %v3331
    %v3455 = vmul.f32 %v3391, %v3332
    %v3456 = vmul.f32 %v3392, %v3332
    %v3457 = vmul.f32 %v3393, %v3333
    %v3458 = vmul.f32 %v3394, %v3333
    %v3459 = vmul.f32 %v3395, %v3334
    %v3460 = vmul.f32 %v3396, %v3334
    %v3461 = vmul.f32 %v3397, %v3335
    %v3462 = vmul.f32 %v3398, %v3335
    %v3463 = vmul.f32 %v3399, %v3336
    %v3464 = vmul.f32 %v3400, %v3336
    %s3465 = scalar_lea.vmem %s7, 17
    %v3466 = vld [vmem:[%s3465] ss:$4 sm:$0x3]
    %s3467 = scalar_lea.vmem %s7, 18
    %v3468 = vld [vmem:[%s3467] ss:$4 sm:$0x3]
    %v3470 = vlaneseq
    %v3471 = vshrl.u32 %v3470, 7
    %v3472 = vsub.s32 0, %v3471
    %v3473 = vrot.slane %v3466, %v3472
    %v3474 = vlaneseq
    %v3475 = vshrl.u32 %v3474, 7
    %v3476 = vsub.s32 1, %v3475
    %v3477 = vrot.slane %v3466, %v3476
    %v3480 = vmul.f32 %v3401, %v3473
    %v3481 = vmul.f32 %v3402, %v3477
    %v3482 = vmul.f32 %v3403, %v3473
    %v3483 = vmul.f32 %v3404, %v3477
    %v3484 = vmul.f32 %v3405, %v3473
    %v3485 = vmul.f32 %v3406, %v3477
    %v3486 = vmul.f32 %v3407, %v3473
    %v3487 = vmul.f32 %v3408, %v3477
    %v3488 = vmul.f32 %v3409, %v3473
    %v3489 = vmul.f32 %v3410, %v3477
    %v3490 = vmul.f32 %v3411, %v3473
    %v3491 = vmul.f32 %v3412, %v3477
    %v3492 = vmul.f32 %v3413, %v3473
    %v3493 = vmul.f32 %v3414, %v3477
    %v3494 = vmul.f32 %v3415, %v3473
    %v3495 = vmul.f32 %v3416, %v3477
    %v3496 = vmul.f32 %v3417, %v3473
    %v3497 = vmul.f32 %v3418, %v3477
    %v3498 = vmul.f32 %v3419, %v3473
    %v3499 = vmul.f32 %v3420, %v3477
    %v3500 = vmul.f32 %v3421, %v3473
    %v3501 = vmul.f32 %v3422, %v3477
    %v3502 = vmul.f32 %v3423, %v3473
    %v3503 = vmul.f32 %v3424, %v3477
    %v3504 = vmul.f32 %v3425, %v3473
    %v3505 = vmul.f32 %v3426, %v3477
    %v3506 = vmul.f32 %v3427, %v3473
    %v3507 = vmul.f32 %v3428, %v3477
    %v3508 = vmul.f32 %v3429, %v3473
    %v3509 = vmul.f32 %v3430, %v3477
    %v3510 = vmul.f32 %v3431, %v3473
    %v3511 = vmul.f32 %v3432, %v3477
    %v3512 = vmul.f32 %v3433, %v3473
    %v3513 = vmul.f32 %v3434, %v3477
    %v3514 = vmul.f32 %v3435, %v3473
    %v3515 = vmul.f32 %v3436, %v3477
    %v3516 = vmul.f32 %v3437, %v3473
    %v3517 = vmul.f32 %v3438, %v3477
    %v3518 = vmul.f32 %v3439, %v3473
    %v3519 = vmul.f32 %v3440, %v3477
    %v3520 = vmul.f32 %v3441, %v3473
    %v3521 = vmul.f32 %v3442, %v3477
    %v3522 = vmul.f32 %v3443, %v3473
    %v3523 = vmul.f32 %v3444, %v3477
    %v3524 = vmul.f32 %v3445, %v3473
    %v3525 = vmul.f32 %v3446, %v3477
    %v3526 = vmul.f32 %v3447, %v3473
    %v3527 = vmul.f32 %v3448, %v3477
    %v3528 = vmul.f32 %v3449, %v3473
    %v3529 = vmul.f32 %v3450, %v3477
    %v3530 = vmul.f32 %v3451, %v3473
    %v3531 = vmul.f32 %v3452, %v3477
    %v3532 = vmul.f32 %v3453, %v3473
    %v3533 = vmul.f32 %v3454, %v3477
    %v3534 = vmul.f32 %v3455, %v3473
    %v3535 = vmul.f32 %v3456, %v3477
    %v3536 = vmul.f32 %v3457, %v3473
    %v3537 = vmul.f32 %v3458, %v3477
    %v3538 = vmul.f32 %v3459, %v3473
    %v3539 = vmul.f32 %v3460, %v3477
    %v3540 = vmul.f32 %v3461, %v3473
    %v3541 = vmul.f32 %v3462, %v3477
    %v3542 = vmul.f32 %v3463, %v3473
    %v3543 = vmul.f32 %v3464, %v3477
    %v3545 = vlaneseq
    %v3546 = vshrl.u32 %v3545, 7
    %v3547 = vsub.s32 0, %v3546
    %v3548 = vrot.slane %v3468, %v3547
    %v3549 = vlaneseq
    %v3550 = vshrl.u32 %v3549, 7
    %v3551 = vsub.s32 1, %v3550
    %v3552 = vrot.slane %v3468, %v3551
    %v3555 = vadd.f32 %v3480, %v3548
    %v3556 = vadd.f32 %v3481, %v3552
    %v3557 = vadd.f32 %v3482, %v3548
    %v3558 = vadd.f32 %v3483, %v3552
    %v3559 = vadd.f32 %v3484, %v3548
    %v3560 = vadd.f32 %v3485, %v3552
    %v3561 = vadd.f32 %v3486, %v3548
    %v3562 = vadd.f32 %v3487, %v3552
    %v3563 = vadd.f32 %v3488, %v3548
    %v3564 = vadd.f32 %v3489, %v3552
    %v3565 = vadd.f32 %v3490, %v3548
    %v3566 = vadd.f32 %v3491, %v3552
    %v3567 = vadd.f32 %v3492, %v3548
    %v3568 = vadd.f32 %v3493, %v3552
    %v3569 = vadd.f32 %v3494, %v3548
    %v3570 = vadd.f32 %v3495, %v3552
    %v3571 = vadd.f32 %v3496, %v3548
    %v3572 = vadd.f32 %v3497, %v3552
    %v3573 = vadd.f32 %v3498, %v3548
    %v3574 = vadd.f32 %v3499, %v3552
    %v3575 = vadd.f32 %v3500, %v3548
    %v3576 = vadd.f32 %v3501, %v3552
    %v3577 = vadd.f32 %v3502, %v3548
    %v3578 = vadd.f32 %v3503, %v3552
    %v3579 = vadd.f32 %v3504, %v3548
    %v3580 = vadd.f32 %v3505, %v3552
    %v3581 = vadd.f32 %v3506, %v3548
    %v3582 = vadd.f32 %v3507, %v3552
    %v3583 = vadd.f32 %v3508, %v3548
    %v3584 = vadd.f32 %v3509, %v3552
    %v3585 = vadd.f32 %v3510, %v3548
    %v3586 = vadd.f32 %v3511, %v3552
    %v3587 = vadd.f32 %v3512, %v3548
    %v3588 = vadd.f32 %v3513, %v3552
    %v3589 = vadd.f32 %v3514, %v3548
    %v3590 = vadd.f32 %v3515, %v3552
    %v3591 = vadd.f32 %v3516, %v3548
    %v3592 = vadd.f32 %v3517, %v3552
    %v3593 = vadd.f32 %v3518, %v3548
    %v3594 = vadd.f32 %v3519, %v3552
    %v3595 = vadd.f32 %v3520, %v3548
    %v3596 = vadd.f32 %v3521, %v3552
    %v3597 = vadd.f32 %v3522, %v3548
    %v3598 = vadd.f32 %v3523, %v3552
    %v3599 = vadd.f32 %v3524, %v3548
    %v3600 = vadd.f32 %v3525, %v3552
    %v3601 = vadd.f32 %v3526, %v3548
    %v3602 = vadd.f32 %v3527, %v3552
    %v3603 = vadd.f32 %v3528, %v3548
    %v3604 = vadd.f32 %v3529, %v3552
    %v3605 = vadd.f32 %v3530, %v3548
    %v3606 = vadd.f32 %v3531, %v3552
    %v3607 = vadd.f32 %v3532, %v3548
    %v3608 = vadd.f32 %v3533, %v3552
    %v3609 = vadd.f32 %v3534, %v3548
    %v3610 = vadd.f32 %v3535, %v3552
    %v3611 = vadd.f32 %v3536, %v3548
    %v3612 = vadd.f32 %v3537, %v3552
    %v3613 = vadd.f32 %v3538, %v3548
    %v3614 = vadd.f32 %v3539, %v3552
    %v3615 = vadd.f32 %v3540, %v3548
    %v3616 = vadd.f32 %v3541, %v3552
    %v3617 = vadd.f32 %v3542, %v3548
    %v3618 = vadd.f32 %v3543, %v3552
    %v3619 = vmax.f32 %v3555, 0.0
    %v3620 = vmax.f32 %v3556, 0.0
    %v3621 = vmax.f32 %v3557, 0.0
    %v3622 = vmax.f32 %v3558, 0.0
    %v3623 = vmax.f32 %v3559, 0.0
    %v3624 = vmax.f32 %v3560, 0.0
    %v3625 = vmax.f32 %v3561, 0.0
    %v3626 = vmax.f32 %v3562, 0.0
    %v3627 = vmax.f32 %v3563, 0.0
    %v3628 = vmax.f32 %v3564, 0.0
    %v3629 = vmax.f32 %v3565, 0.0
    %v3630 = vmax.f32 %v3566, 0.0
    %v3631 = vmax.f32 %v3567, 0.0
    %v3632 = vmax.f32 %v3568, 0.0
    %v3633 = vmax.f32 %v3569, 0.0
    %v3634 = vmax.f32 %v3570, 0.0
    %v3635 = vmax.f32 %v3571, 0.0
    %v3636 = vmax.f32 %v3572, 0.0
    %v3637 = vmax.f32 %v3573, 0.0
    %v3638 = vmax.f32 %v3574, 0.0
    %v3639 = vmax.f32 %v3575, 0.0
    %v3640 = vmax.f32 %v3576, 0.0
    %v3641 = vmax.f32 %v3577, 0.0
    %v3642 = vmax.f32 %v3578, 0.0
    %v3643 = vmax.f32 %v3579, 0.0
    %v3644 = vmax.f32 %v3580, 0.0
    %v3645 = vmax.f32 %v3581, 0.0
    %v3646 = vmax.f32 %v3582, 0.0
    %v3647 = vmax.f32 %v3583, 0.0
    %v3648 = vmax.f32 %v3584, 0.0
    %v3649 = vmax.f32 %v3585, 0.0
    %v3650 = vmax.f32 %v3586, 0.0
    %v3651 = vmax.f32 %v3587, 0.0
    %v3652 = vmax.f32 %v3588, 0.0
    %v3653 = vmax.f32 %v3589, 0.0
    %v3654 = vmax.f32 %v3590, 0.0
    %v3655 = vmax.f32 %v3591, 0.0
    %v3656 = vmax.f32 %v3592, 0.0
    %v3657 = vmax.f32 %v3593, 0.0
    %v3658 = vmax.f32 %v3594, 0.0
    %v3659 = vmax.f32 %v3595, 0.0
    %v3660 = vmax.f32 %v3596, 0.0
    %v3661 = vmax.f32 %v3597, 0.0
    %v3662 = vmax.f32 %v3598, 0.0
    %v3663 = vmax.f32 %v3599, 0.0
    %v3664 = vmax.f32 %v3600, 0.0
    %v3665 = vmax.f32 %v3601, 0.0
    %v3666 = vmax.f32 %v3602, 0.0
    %v3667 = vmax.f32 %v3603, 0.0
    %v3668 = vmax.f32 %v3604, 0.0
    %v3669 = vmax.f32 %v3605, 0.0
    %v3670 = vmax.f32 %v3606, 0.0
    %v3671 = vmax.f32 %v3607, 0.0
    %v3672 = vmax.f32 %v3608, 0.0
    %v3673 = vmax.f32 %v3609, 0.0
    %v3674 = vmax.f32 %v3610, 0.0
    %v3675 = vmax.f32 %v3611, 0.0
    %v3676 = vmax.f32 %v3612, 0.0
    %v3677 = vmax.f32 %v3613, 0.0
    %v3678 = vmax.f32 %v3614, 0.0
    %v3679 = vmax.f32 %v3615, 0.0
    %v3680 = vmax.f32 %v3616, 0.0
    %v3681 = vmax.f32 %v3617, 0.0
    %v3682 = vmax.f32 %v3618, 0.0
    %v3683 = vpack.c.bf16 %v3621, %v3619
    %v3684 = vpack.c.bf16 %v3622, %v3620
    %v3685 = vpack.c.bf16 %v3625, %v3623
    %v3686 = vpack.c.bf16 %v3626, %v3624
    %v3687 = vpack.c.bf16 %v3629, %v3627
    %v3688 = vpack.c.bf16 %v3630, %v3628
    %v3689 = vpack.c.bf16 %v3633, %v3631
    %v3690 = vpack.c.bf16 %v3634, %v3632
    %v3691 = vpack.c.bf16 %v3637, %v3635
    %v3692 = vpack.c.bf16 %v3638, %v3636
    %v3693 = vpack.c.bf16 %v3641, %v3639
    %v3694 = vpack.c.bf16 %v3642, %v3640
    %v3695 = vpack.c.bf16 %v3645, %v3643
    %v3696 = vpack.c.bf16 %v3646, %v3644
    %v3697 = vpack.c.bf16 %v3649, %v3647
    %v3698 = vpack.c.bf16 %v3650, %v3648
    %v3699 = vpack.c.bf16 %v3653, %v3651
    %v3700 = vpack.c.bf16 %v3654, %v3652
    %v3701 = vpack.c.bf16 %v3657, %v3655
    %v3702 = vpack.c.bf16 %v3658, %v3656
    %v3703 = vpack.c.bf16 %v3661, %v3659
    %v3704 = vpack.c.bf16 %v3662, %v3660
    %v3705 = vpack.c.bf16 %v3665, %v3663
    %v3706 = vpack.c.bf16 %v3666, %v3664
    %v3707 = vpack.c.bf16 %v3669, %v3667
    %v3708 = vpack.c.bf16 %v3670, %v3668
    %v3709 = vpack.c.bf16 %v3673, %v3671
    %v3710 = vpack.c.bf16 %v3674, %v3672
    %v3711 = vpack.c.bf16 %v3677, %v3675
    %v3712 = vpack.c.bf16 %v3678, %v3676
    %v3713 = vpack.c.bf16 %v3681, %v3679
    %v3714 = vpack.c.bf16 %v3682, %v3680
    %v3715 = vld [vmem:[%s3] sm:$0xf]
    %v3716 = vld [vmem:[%s3 + $0x4] sm:$0xf]
    %v3717 = vld [vmem:[%s3 + $0x8] sm:$0xf]
    %v3718 = vld [vmem:[%s3 + $0xc] sm:$0xf]
    %v3719 = vld [vmem:[%s3 + $0x10] sm:$0xf]
    %v3720 = vld [vmem:[%s3 + $0x14] sm:$0xf]
    %v3721 = vld [vmem:[%s3 + $0x18] sm:$0xf]
    %v3722 = vld [vmem:[%s3 + $0x1c] sm:$0xf]
    %v3723 = vld [vmem:[%s3 + $0x20] sm:$0xf]
    %v3724 = vld [vmem:[%s3 + $0x24] sm:$0xf]
    %v3725 = vld [vmem:[%s3 + $0x28] sm:$0xf]
    %v3726 = vld [vmem:[%s3 + $0x2c] sm:$0xf]
    %v3727 = vld [vmem:[%s3 + $0x30] sm:$0xf]
    %v3728 = vld [vmem:[%s3 + $0x34] sm:$0xf]
    %v3729 = vld [vmem:[%s3 + $0x38] sm:$0xf]
    %v3730 = vld [vmem:[%s3 + $0x3c] sm:$0xf]
    %v3731 = vld [vmem:[%s3 + $0x40] sm:$0xf]
    %v3732 = vld [vmem:[%s3 + $0x44] sm:$0xf]
    %v3733 = vld [vmem:[%s3 + $0x48] sm:$0xf]
    %v3734 = vld [vmem:[%s3 + $0x4c] sm:$0xf]
    %v3735 = vld [vmem:[%s3 + $0x50] sm:$0xf]
    %v3736 = vld [vmem:[%s3 + $0x54] sm:$0xf]
    %v3737 = vld [vmem:[%s3 + $0x58] sm:$0xf]
    %v3738 = vld [vmem:[%s3 + $0x5c] sm:$0xf]
    %v3739 = vld [vmem:[%s3 + $0x60] sm:$0xf]
    %v3740 = vld [vmem:[%s3 + $0x64] sm:$0xf]
    %v3741 = vld [vmem:[%s3 + $0x68] sm:$0xf]
    %v3742 = vld [vmem:[%s3 + $0x6c] sm:$0xf]
    %v3743 = vld [vmem:[%s3 + $0x70] sm:$0xf]
    %v3744 = vld [vmem:[%s3 + $0x74] sm:$0xf]
    %v3745 = vld [vmem:[%s3 + $0x78] sm:$0xf]
    %v3746 = vld [vmem:[%s3 + $0x7c] sm:$0xf]
    %v3747 = vld [vmem:[%s7 + $0x18] sm:$0x1]
    %v3748 = vlaneseq
    %v3749 = vshrl.u32 %v3748, 7
    %v3750 = vsub.s32 0, %v3749
    %v3751 = vrot.slane %v3747, %v3750
    %v3784 = vunpack.c.l.b16 %v3715
    %v3785 = vunpack.c.l.b16 %v3716
    %v3786 = vunpack.c.l.b16 %v3717
    %v3787 = vunpack.c.l.b16 %v3718
    %v3788 = vunpack.c.l.b16 %v3719
    %v3789 = vunpack.c.l.b16 %v3720
    %v3790 = vunpack.c.l.b16 %v3721
    %v3791 = vunpack.c.l.b16 %v3722
    %v3792 = vunpack.c.l.b16 %v3723
    %v3793 = vunpack.c.l.b16 %v3724
    %v3794 = vunpack.c.l.b16 %v3725
    %v3795 = vunpack.c.l.b16 %v3726
    %v3796 = vunpack.c.l.b16 %v3727
    %v3797 = vunpack.c.l.b16 %v3728
    %v3798 = vunpack.c.l.b16 %v3729
    %v3799 = vunpack.c.l.b16 %v3730
    %v3800 = vunpack.c.l.b16 %v3731
    %v3801 = vunpack.c.l.b16 %v3732
    %v3802 = vunpack.c.l.b16 %v3733
    %v3803 = vunpack.c.l.b16 %v3734
    %v3804 = vunpack.c.l.b16 %v3735
    %v3805 = vunpack.c.l.b16 %v3736
    %v3806 = vunpack.c.l.b16 %v3737
    %v3807 = vunpack.c.l.b16 %v3738
    %v3808 = vunpack.c.l.b16 %v3739
    %v3809 = vunpack.c.l.b16 %v3740
    %v3810 = vunpack.c.l.b16 %v3741
    %v3811 = vunpack.c.l.b16 %v3742
    %v3812 = vunpack.c.l.b16 %v3743
    %v3813 = vunpack.c.l.b16 %v3744
    %v3814 = vunpack.c.l.b16 %v3745
    %v3815 = vunpack.c.l.b16 %v3746
    %v3816 = vpack.c.b16 %v3785, %v3784
    %v3817 = vpack.c.b16 %v3787, %v3786
    %v3818 = vpack.c.b16 %v3789, %v3788
    %v3819 = vpack.c.b16 %v3791, %v3790
    %v3820 = vpack.c.b16 %v3793, %v3792
    %v3821 = vpack.c.b16 %v3795, %v3794
    %v3822 = vpack.c.b16 %v3797, %v3796
    %v3823 = vpack.c.b16 %v3799, %v3798
    %v3824 = vpack.c.b16 %v3801, %v3800
    %v3825 = vpack.c.b16 %v3803, %v3802
    %v3826 = vpack.c.b16 %v3805, %v3804
    %v3827 = vpack.c.b16 %v3807, %v3806
    %v3828 = vpack.c.b16 %v3809, %v3808
    %v3829 = vpack.c.b16 %v3811, %v3810
    %v3830 = vpack.c.b16 %v3813, %v3812
    %v3831 = vpack.c.b16 %v3815, %v3814
    %3848 = vmatprep.subr.bf16.mxu0 0
    %3849 = vmatpush1.bf16.msra.mxu0 %v3816
    %3850 = vmatprep.subr.bf16.mxu0 0
    %3851 = vmatpush1.bf16.msra.mxu0 %v3817
    %3852 = vmatprep.subr.bf16.mxu0 0
    %3853 = vmatpush1.bf16.msra.mxu0 %v3818
    %3854 = vmatprep.subr.bf16.mxu0 0
    %3855 = vmatpush1.bf16.msra.mxu0 %v3819
    %3856 = vmatprep.subr.bf16.mxu0 0
    %3857 = vmatpush1.bf16.msra.mxu0 %v3820
    %3858 = vmatprep.subr.bf16.mxu0 0
    %3859 = vmatpush1.bf16.msra.mxu0 %v3821
    %3860 = vmatprep.subr.bf16.mxu0 0
    %3861 = vmatpush1.bf16.msra.mxu0 %v3822
    %3862 = vmatprep.subr.bf16.mxu0 0
    %3863 = vmatpush1.bf16.msra.mxu0 %v3823
    %3864 = vmatprep.subr.bf16.mxu0 0
    %3865 = vmatpush1.bf16.msra.mxu0 %v3824
    %3866 = vmatprep.subr.bf16.mxu0 0
    %3867 = vmatpush1.bf16.msra.mxu0 %v3825
    %3868 = vmatprep.subr.bf16.mxu0 0
    %3869 = vmatpush1.bf16.msra.mxu0 %v3826
    %3870 = vmatprep.subr.bf16.mxu0 0
    %3871 = vmatpush1.bf16.msra.mxu0 %v3827
    %3872 = vmatprep.subr.bf16.mxu0 0
    %3873 = vmatpush1.bf16.msra.mxu0 %v3828
    %3874 = vmatprep.subr.bf16.mxu0 0
    %3875 = vmatpush1.bf16.msra.mxu0 %v3829
    %3876 = vmatprep.subr.bf16.mxu0 0
    %3877 = vmatpush1.bf16.msra.mxu0 %v3830
    %3878 = vmatprep.subr.bf16.mxu0 0
    %3879 = vmatpush1.bf16.msra.mxu0 %v3831
    %3880 = vmatprep.mubr.bf16.mxu0 %v3684
    %3881 = vmatmul.mubr.bf16.gmra.mrb[0].mxu0 %v3683
    %v3882 = vpop.f32.mrb[0].mxu0
    %v3883 = vadd.f32 %v3751, %v3882
    %v3884 = vpop.f32.mrb[0].mxu0
    %v3885 = vpop.f32.mrb[0].mxu0
    %v3886 = vadd.f32 %v3751, %v3885
    %v3887 = vpop.f32.mrb[0].mxu0
    %3888 = vmatprep.mubr.bf16.mxu0 %v3686
    %3889 = vmatmul.mubr.bf16.gmra.mrb[0].mxu0 %v3685
    %v3890 = vpop.f32.mrb[0].mxu0
    %v3891 = vadd.f32 %v3751, %v3890
    %v3892 = vpop.f32.mrb[0].mxu0
    %v3893 = vpop.f32.mrb[0].mxu0
    %v3894 = vadd.f32 %v3751, %v3893
    %v3895 = vpop.f32.mrb[0].mxu0
    %3896 = vmatprep.mubr.bf16.mxu0 %v3688
    %3897 = vmatmul.mubr.bf16.gmra.mrb[0].mxu0 %v3687
    %v3898 = vpop.f32.mrb[0].mxu0
    %v3899 = vadd.f32 %v3751, %v3898
    %v3900 = vpop.f32.mrb[0].mxu0
    %v3901 = vpop.f32.mrb[0].mxu0
    %v3902 = vadd.f32 %v3751, %v3901
    %v3903 = vpop.f32.mrb[0].mxu0
    %3904 = vmatprep.mubr.bf16.mxu0 %v3690
    %3905 = vmatmul.mubr.bf16.gmra.mrb[0].mxu0 %v3689
    %v3906 = vpop.f32.mrb[0].mxu0
    %v3907 = vadd.f32 %v3751, %v3906
    %v3908 = vpop.f32.mrb[0].mxu0
    %v3909 = vpop.f32.mrb[0].mxu0
    %v3910 = vadd.f32 %v3751, %v3909
    %v3911 = vpop.f32.mrb[0].mxu0
    %3912 = vmatprep.mubr.bf16.mxu0 %v3692
    %3913 = vmatmul.mubr.bf16.gmra.mrb[0].mxu0 %v3691
    %v3914 = vpop.f32.mrb[0].mxu0
    %v3915 = vadd.f32 %v3751, %v3914
    %v3916 = vpop.f32.mrb[0].mxu0
    %v3917 = vpop.f32.mrb[0].mxu0
    %v3918 = vadd.f32 %v3751, %v3917
    %v3919 = vpop.f32.mrb[0].mxu0
    %3920 = vmatprep.mubr.bf16.mxu0 %v3694
    %3921 = vmatmul.mubr.bf16.gmra.mrb[0].mxu0 %v3693
    %v3922 = vpop.f32.mrb[0].mxu0
    %v3923 = vadd.f32 %v3751, %v3922
    %v3924 = vpop.f32.mrb[0].mxu0
    %v3925 = vpop.f32.mrb[0].mxu0
    %v3926 = vadd.f32 %v3751, %v3925
    %v3927 = vpop.f32.mrb[0].mxu0
    %3928 = vmatprep.mubr.bf16.mxu0 %v3696
    %3929 = vmatmul.mubr.bf16.gmra.mrb[0].mxu0 %v3695
    %v3930 = vpop.f32.mrb[0].mxu0
    %v3931 = vadd.f32 %v3751, %v3930
    %v3932 = vpop.f32.mrb[0].mxu0
    %v3933 = vpop.f32.mrb[0].mxu0
    %v3934 = vadd.f32 %v3751, %v3933
    %v3935 = vpop.f32.mrb[0].mxu0
    %3936 = vmatprep.mubr.bf16.mxu0 %v3698
    %3937 = vmatmul.mubr.bf16.gmra.mrb[0].mxu0 %v3697
    %v3938 = vpop.f32.mrb[0].mxu0
    %v3939 = vadd.f32 %v3751, %v3938
    %v3940 = vpop.f32.mrb[0].mxu0
    %v3941 = vpop.f32.mrb[0].mxu0
    %v3942 = vadd.f32 %v3751, %v3941
    %v3943 = vpop.f32.mrb[0].mxu0
    %3944 = vmatprep.mubr.bf16.mxu0 %v3700
    %3945 = vmatmul.mubr.bf16.gmra.mrb[0].mxu0 %v3699
    %v3946 = vpop.f32.mrb[0].mxu0
    %v3947 = vadd.f32 %v3751, %v3946
    %v3948 = vpop.f32.mrb[0].mxu0
    %v3949 = vpop.f32.mrb[0].mxu0
    %v3950 = vadd.f32 %v3751, %v3949
    %v3951 = vpop.f32.mrb[0].mxu0
    %3952 = vmatprep.mubr.bf16.mxu0 %v3702
    %3953 = vmatmul.mubr.bf16.gmra.mrb[0].mxu0 %v3701
    %v3954 = vpop.f32.mrb[0].mxu0
    %v3955 = vadd.f32 %v3751, %v3954
    %v3956 = vpop.f32.mrb[0].mxu0
    %v3957 = vpop.f32.mrb[0].mxu0
    %v3958 = vadd.f32 %v3751, %v3957
    %v3959 = vpop.f32.mrb[0].mxu0
    %3960 = vmatprep.mubr.bf16.mxu0 %v3704
    %3961 = vmatmul.mubr.bf16.gmra.mrb[0].mxu0 %v3703
    %v3962 = vpop.f32.mrb[0].mxu0
    %v3963 = vadd.f32 %v3751, %v3962
    %v3964 = vpop.f32.mrb[0].mxu0
    %v3965 = vpop.f32.mrb[0].mxu0
    %v3966 = vadd.f32 %v3751, %v3965
    %v3967 = vpop.f32.mrb[0].mxu0
    %3968 = vmatprep.mubr.bf16.mxu0 %v3706
    %3969 = vmatmul.mubr.bf16.gmra.mrb[0].mxu0 %v3705
    %v3970 = vpop.f32.mrb[0].mxu0
    %v3971 = vadd.f32 %v3751, %v3970
    %v3972 = vpop.f32.mrb[0].mxu0
    %v3973 = vpop.f32.mrb[0].mxu0
    %v3974 = vadd.f32 %v3751, %v3973
    %v3975 = vpop.f32.mrb[0].mxu0
    %3976 = vmatprep.mubr.bf16.mxu0 %v3708
    %3977 = vmatmul.mubr.bf16.gmra.mrb[0].mxu0 %v3707
    %v3978 = vpop.f32.mrb[0].mxu0
    %v3979 = vadd.f32 %v3751, %v3978
    %v3980 = vpop.f32.mrb[0].mxu0
    %v3981 = vpop.f32.mrb[0].mxu0
    %v3982 = vadd.f32 %v3751, %v3981
    %v3983 = vpop.f32.mrb[0].mxu0
    %3984 = vmatprep.mubr.bf16.mxu0 %v3710
    %3985 = vmatmul.mubr.bf16.gmra.mrb[0].mxu0 %v3709
    %v3986 = vpop.f32.mrb[0].mxu0
    %v3987 = vadd.f32 %v3751, %v3986
    %v3988 = vpop.f32.mrb[0].mxu0
    %v3989 = vpop.f32.mrb[0].mxu0
    %v3990 = vadd.f32 %v3751, %v3989
    %v3991 = vpop.f32.mrb[0].mxu0
    %3992 = vmatprep.mubr.bf16.mxu0 %v3712
    %3993 = vmatmul.mubr.bf16.gmra.mrb[0].mxu0 %v3711
    %v3994 = vpop.f32.mrb[0].mxu0
    %v3995 = vadd.f32 %v3751, %v3994
    %v3996 = vpop.f32.mrb[0].mxu0
    %v3997 = vpop.f32.mrb[0].mxu0
    %v3998 = vadd.f32 %v3751, %v3997
    %v3999 = vpop.f32.mrb[0].mxu0
    %4000 = vmatprep.mubr.bf16.mxu0 %v3714
    %4001 = vmatmul.mubr.bf16.gmra.mrb[0].mxu0 %v3713
    %v4002 = vpop.f32.mrb[0].mxu0
    %v4003 = vadd.f32 %v3751, %v4002
    %v4004 = vpop.f32.mrb[0].mxu0
    %v4005 = vpop.f32.mrb[0].mxu0
    %v4006 = vadd.f32 %v3751, %v4005
    %v4007 = vpop.f32.mrb[0].mxu0
    %4008 = vdwg.mxu0
    %4009 = vadd.xlane.f32.xlu0 %v3883
    %v4010 = vpop.xlane.xlu0 %4009
    %4011 = vadd.xlane.f32.xlu0 %v3886
    %v4012 = vpop.xlane.xlu0 %4011
    %4013 = vadd.xlane.f32.xlu0 %v3891
    %v4014 = vpop.xlane.xlu0 %4013
    %4015 = vadd.xlane.f32.xlu0 %v3894
    %v4016 = vpop.xlane.xlu0 %4015
    %4017 = vadd.xlane.f32.xlu0 %v3899
    %v4018 = vpop.xlane.xlu0 %4017
    %4019 = vadd.xlane.f32.xlu0 %v3902
    %v4020 = vpop.xlane.xlu0 %4019
    %4021 = vadd.xlane.f32.xlu0 %v3907
    %v4022 = vpop.xlane.xlu0 %4021
    %4023 = vadd.xlane.f32.xlu0 %v3910
    %v4024 = vpop.xlane.xlu0 %4023
    %4025 = vadd.xlane.f32.xlu0 %v3915
    %v4026 = vpop.xlane.xlu0 %4025
    %4027 = vadd.xlane.f32.xlu0 %v3918
    %v4028 = vpop.xlane.xlu0 %4027
    %4029 = vadd.xlane.f32.xlu0 %v3923
    %v4030 = vpop.xlane.xlu0 %4029
    %4031 = vadd.xlane.f32.xlu0 %v3926
    %v4032 = vpop.xlane.xlu0 %4031
    %4033 = vadd.xlane.f32.xlu0 %v3931
    %v4034 = vpop.xlane.xlu0 %4033
    %4035 = vadd.xlane.f32.xlu0 %v3934
    %v4036 = vpop.xlane.xlu0 %4035
    %4037 = vadd.xlane.f32.xlu0 %v3939
    %v4038 = vpop.xlane.xlu0 %4037
    %4039 = vadd.xlane.f32.xlu0 %v3942
    %v4040 = vpop.xlane.xlu0 %4039
    %4041 = vadd.xlane.f32.xlu0 %v3947
    %v4042 = vpop.xlane.xlu0 %4041
    %4043 = vadd.xlane.f32.xlu0 %v3950
    %v4044 = vpop.xlane.xlu0 %4043
    %4045 = vadd.xlane.f32.xlu0 %v3955
    %v4046 = vpop.xlane.xlu0 %4045
    %4047 = vadd.xlane.f32.xlu0 %v3958
    %v4048 = vpop.xlane.xlu0 %4047
    %4049 = vadd.xlane.f32.xlu0 %v3963
    %v4050 = vpop.xlane.xlu0 %4049
    %4051 = vadd.xlane.f32.xlu0 %v3966
    %v4052 = vpop.xlane.xlu0 %4051
    %4053 = vadd.xlane.f32.xlu0 %v3971
    %v4054 = vpop.xlane.xlu0 %4053
    %4055 = vadd.xlane.f32.xlu0 %v3974
    %v4056 = vpop.xlane.xlu0 %4055
    %4057 = vadd.xlane.f32.xlu0 %v3979
    %v4058 = vpop.xlane.xlu0 %4057
    %4059 = vadd.xlane.f32.xlu0 %v3982
    %v4060 = vpop.xlane.xlu0 %4059
    %4061 = vadd.xlane.f32.xlu0 %v3987
    %v4062 = vpop.xlane.xlu0 %4061
    %4063 = vadd.xlane.f32.xlu0 %v3990
    %v4064 = vpop.xlane.xlu0 %4063
    %4065 = vadd.xlane.f32.xlu0 %v3995
    %v4066 = vpop.xlane.xlu0 %4065
    %4067 = vadd.xlane.f32.xlu0 %v3998
    %v4068 = vpop.xlane.xlu0 %4067
    %4069 = vadd.xlane.f32.xlu0 %v4003
    %v4070 = vpop.xlane.xlu0 %4069
    %4071 = vadd.xlane.f32.xlu0 %v4006
    %v4072 = vpop.xlane.xlu0 %4071
    %v4073 = vmul.f32 %v4010, 0.0078125
    %v4074 = vmul.f32 %v4012, 0.0078125
    %v4075 = vmul.f32 %v4014, 0.0078125
    %v4076 = vmul.f32 %v4016, 0.0078125
    %v4077 = vmul.f32 %v4018, 0.0078125
    %v4078 = vmul.f32 %v4020, 0.0078125
    %v4079 = vmul.f32 %v4022, 0.0078125
    %v4080 = vmul.f32 %v4024, 0.0078125
    %v4081 = vmul.f32 %v4026, 0.0078125
    %v4082 = vmul.f32 %v4028, 0.0078125
    %v4083 = vmul.f32 %v4030, 0.0078125
    %v4084 = vmul.f32 %v4032, 0.0078125
    %v4085 = vmul.f32 %v4034, 0.0078125
    %v4086 = vmul.f32 %v4036, 0.0078125
    %v4087 = vmul.f32 %v4038, 0.0078125
    %v4088 = vmul.f32 %v4040, 0.0078125
    %v4089 = vmul.f32 %v4042, 0.0078125
    %v4090 = vmul.f32 %v4044, 0.0078125
    %v4091 = vmul.f32 %v4046, 0.0078125
    %v4092 = vmul.f32 %v4048, 0.0078125
    %v4093 = vmul.f32 %v4050, 0.0078125
    %v4094 = vmul.f32 %v4052, 0.0078125
    %v4095 = vmul.f32 %v4054, 0.0078125
    %v4096 = vmul.f32 %v4056, 0.0078125
    %v4097 = vmul.f32 %v4058, 0.0078125
    %v4098 = vmul.f32 %v4060, 0.0078125
    %v4099 = vmul.f32 %v4062, 0.0078125
    %v4100 = vmul.f32 %v4064, 0.0078125
    %v4101 = vmul.f32 %v4066, 0.0078125
    %v4102 = vmul.f32 %v4068, 0.0078125
    %v4103 = vmul.f32 %v4070, 0.0078125
    %v4104 = vmul.f32 %v4072, 0.0078125
    %v4105 = vmul.f32 %v3883, %v3883
    %v4106 = vmul.f32 %v3886, %v3886
    %v4107 = vmul.f32 %v3891, %v3891
    %v4108 = vmul.f32 %v3894, %v3894
    %v4109 = vmul.f32 %v3899, %v3899
    %v4110 = vmul.f32 %v3902, %v3902
    %v4111 = vmul.f32 %v3907, %v3907
    %v4112 = vmul.f32 %v3910, %v3910
    %v4113 = vmul.f32 %v3915, %v3915
    %v4114 = vmul.f32 %v3918, %v3918
    %v4115 = vmul.f32 %v3923, %v3923
    %v4116 = vmul.f32 %v3926, %v3926
    %v4117 = vmul.f32 %v3931, %v3931
    %v4118 = vmul.f32 %v3934, %v3934
    %v4119 = vmul.f32 %v3939, %v3939
    %v4120 = vmul.f32 %v3942, %v3942
    %v4121 = vmul.f32 %v3947, %v3947
    %v4122 = vmul.f32 %v3950, %v3950
    %v4123 = vmul.f32 %v3955, %v3955
    %v4124 = vmul.f32 %v3958, %v3958
    %v4125 = vmul.f32 %v3963, %v3963
    %v4126 = vmul.f32 %v3966, %v3966
    %v4127 = vmul.f32 %v3971, %v3971
    %v4128 = vmul.f32 %v3974, %v3974
    %v4129 = vmul.f32 %v3979, %v3979
    %v4130 = vmul.f32 %v3982, %v3982
    %v4131 = vmul.f32 %v3987, %v3987
    %v4132 = vmul.f32 %v3990, %v3990
    %v4133 = vmul.f32 %v3995, %v3995
    %v4134 = vmul.f32 %v3998, %v3998
    %v4135 = vmul.f32 %v4003, %v4003
    %v4136 = vmul.f32 %v4006, %v4006
    %4137 = vadd.xlane.f32.xlu0 %v4105
    %v4138 = vpop.xlane.xlu0 %4137
    %4139 = vadd.xlane.f32.xlu0 %v4106
    %v4140 = vpop.xlane.xlu0 %4139
    %4141 = vadd.xlane.f32.xlu0 %v4107
    %v4142 = vpop.xlane.xlu0 %4141
    %4143 = vadd.xlane.f32.xlu0 %v4108
    %v4144 = vpop.xlane.xlu0 %4143
    %4145 = vadd.xlane.f32.xlu0 %v4109
    %v4146 = vpop.xlane.xlu0 %4145
    %4147 = vadd.xlane.f32.xlu0 %v4110
    %v4148 = vpop.xlane.xlu0 %4147
    %4149 = vadd.xlane.f32.xlu0 %v4111
    %v4150 = vpop.xlane.xlu0 %4149
    %4151 = vadd.xlane.f32.xlu0 %v4112
    %v4152 = vpop.xlane.xlu0 %4151
    %4153 = vadd.xlane.f32.xlu0 %v4113
    %v4154 = vpop.xlane.xlu0 %4153
    %4155 = vadd.xlane.f32.xlu0 %v4114
    %v4156 = vpop.xlane.xlu0 %4155
    %4157 = vadd.xlane.f32.xlu0 %v4115
    %v4158 = vpop.xlane.xlu0 %4157
    %4159 = vadd.xlane.f32.xlu0 %v4116
    %v4160 = vpop.xlane.xlu0 %4159
    %4161 = vadd.xlane.f32.xlu0 %v4117
    %v4162 = vpop.xlane.xlu0 %4161
    %4163 = vadd.xlane.f32.xlu0 %v4118
    %v4164 = vpop.xlane.xlu0 %4163
    %4165 = vadd.xlane.f32.xlu0 %v4119
    %v4166 = vpop.xlane.xlu0 %4165
    %4167 = vadd.xlane.f32.xlu0 %v4120
    %v4168 = vpop.xlane.xlu0 %4167
    %4169 = vadd.xlane.f32.xlu0 %v4121
    %v4170 = vpop.xlane.xlu0 %4169
    %4171 = vadd.xlane.f32.xlu0 %v4122
    %v4172 = vpop.xlane.xlu0 %4171
    %4173 = vadd.xlane.f32.xlu0 %v4123
    %v4174 = vpop.xlane.xlu0 %4173
    %4175 = vadd.xlane.f32.xlu0 %v4124
    %v4176 = vpop.xlane.xlu0 %4175
    %4177 = vadd.xlane.f32.xlu0 %v4125
    %v4178 = vpop.xlane.xlu0 %4177
    %4179 = vadd.xlane.f32.xlu0 %v4126
    %v4180 = vpop.xlane.xlu0 %4179
    %4181 = vadd.xlane.f32.xlu0 %v4127
    %v4182 = vpop.xlane.xlu0 %4181
    %4183 = vadd.xlane.f32.xlu0 %v4128
    %v4184 = vpop.xlane.xlu0 %4183
    %4185 = vadd.xlane.f32.xlu0 %v4129
    %v4186 = vpop.xlane.xlu0 %4185
    %4187 = vadd.xlane.f32.xlu0 %v4130
    %v4188 = vpop.xlane.xlu0 %4187
    %4189 = vadd.xlane.f32.xlu0 %v4131
    %v4190 = vpop.xlane.xlu0 %4189
    %4191 = vadd.xlane.f32.xlu0 %v4132
    %v4192 = vpop.xlane.xlu0 %4191
    %4193 = vadd.xlane.f32.xlu0 %v4133
    %v4194 = vpop.xlane.xlu0 %4193
    %4195 = vadd.xlane.f32.xlu0 %v4134
    %v4196 = vpop.xlane.xlu0 %4195
    %4197 = vadd.xlane.f32.xlu0 %v4135
    %v4198 = vpop.xlane.xlu0 %4197
    %4199 = vadd.xlane.f32.xlu0 %v4136
    %v4200 = vpop.xlane.xlu0 %4199
    %v4201 = vmul.f32 %v4138, 0.0078125
    %v4202 = vmul.f32 %v4140, 0.0078125
    %v4203 = vmul.f32 %v4142, 0.0078125
    %v4204 = vmul.f32 %v4144, 0.0078125
    %v4205 = vmul.f32 %v4146, 0.0078125
    %v4206 = vmul.f32 %v4148, 0.0078125
    %v4207 = vmul.f32 %v4150, 0.0078125
    %v4208 = vmul.f32 %v4152, 0.0078125
    %v4209 = vmul.f32 %v4154, 0.0078125
    %v4210 = vmul.f32 %v4156, 0.0078125
    %v4211 = vmul.f32 %v4158, 0.0078125
    %v4212 = vmul.f32 %v4160, 0.0078125
    %v4213 = vmul.f32 %v4162, 0.0078125
    %v4214 = vmul.f32 %v4164, 0.0078125
    %v4215 = vmul.f32 %v4166, 0.0078125
    %v4216 = vmul.f32 %v4168, 0.0078125
    %v4217 = vmul.f32 %v4170, 0.0078125
    %v4218 = vmul.f32 %v4172, 0.0078125
    %v4219 = vmul.f32 %v4174, 0.0078125
    %v4220 = vmul.f32 %v4176, 0.0078125
    %v4221 = vmul.f32 %v4178, 0.0078125
    %v4222 = vmul.f32 %v4180, 0.0078125
    %v4223 = vmul.f32 %v4182, 0.0078125
    %v4224 = vmul.f32 %v4184, 0.0078125
    %v4225 = vmul.f32 %v4186, 0.0078125
    %v4226 = vmul.f32 %v4188, 0.0078125
    %v4227 = vmul.f32 %v4190, 0.0078125
    %v4228 = vmul.f32 %v4192, 0.0078125
    %v4229 = vmul.f32 %v4194, 0.0078125
    %v4230 = vmul.f32 %v4196, 0.0078125
    %v4231 = vmul.f32 %v4198, 0.0078125
    %v4232 = vmul.f32 %v4200, 0.0078125
    %v4233 = vmul.f32 %v4073, %v4073
    %v4234 = vmul.f32 %v4074, %v4074
    %v4235 = vmul.f32 %v4075, %v4075
    %v4236 = vmul.f32 %v4076, %v4076
    %v4237 = vmul.f32 %v4077, %v4077
    %v4238 = vmul.f32 %v4078, %v4078
    %v4239 = vmul.f32 %v4079, %v4079
    %v4240 = vmul.f32 %v4080, %v4080
    %v4241 = vmul.f32 %v4081, %v4081
    %v4242 = vmul.f32 %v4082, %v4082
    %v4243 = vmul.f32 %v4083, %v4083
    %v4244 = vmul.f32 %v4084, %v4084
    %v4245 = vmul.f32 %v4085, %v4085
    %v4246 = vmul.f32 %v4086, %v4086
    %v4247 = vmul.f32 %v4087, %v4087
    %v4248 = vmul.f32 %v4088, %v4088
    %v4249 = vmul.f32 %v4089, %v4089
    %v4250 = vmul.f32 %v4090, %v4090
    %v4251 = vmul.f32 %v4091, %v4091
    %v4252 = vmul.f32 %v4092, %v4092
    %v4253 = vmul.f32 %v4093, %v4093
    %v4254 = vmul.f32 %v4094, %v4094
    %v4255 = vmul.f32 %v4095, %v4095
    %v4256 = vmul.f32 %v4096, %v4096
    %v4257 = vmul.f32 %v4097, %v4097
    %v4258 = vmul.f32 %v4098, %v4098
    %v4259 = vmul.f32 %v4099, %v4099
    %v4260 = vmul.f32 %v4100, %v4100
    %v4261 = vmul.f32 %v4101, %v4101
    %v4262 = vmul.f32 %v4102, %v4102
    %v4263 = vmul.f32 %v4103, %v4103
    %v4264 = vmul.f32 %v4104, %v4104
    %v4265 = vsub.f32 %v4201, %v4233
    %v4266 = vsub.f32 %v4202, %v4234
    %v4267 = vsub.f32 %v4203, %v4235
    %v4268 = vsub.f32 %v4204, %v4236
    %v4269 = vsub.f32 %v4205, %v4237
    %v4270 = vsub.f32 %v4206, %v4238
    %v4271 = vsub.f32 %v4207, %v4239
    %v4272 = vsub.f32 %v4208, %v4240
    %v4273 = vsub.f32 %v4209, %v4241
    %v4274 = vsub.f32 %v4210, %v4242
    %v4275 = vsub.f32 %v4211, %v4243
    %v4276 = vsub.f32 %v4212, %v4244
    %v4277 = vsub.f32 %v4213, %v4245
    %v4278 = vsub.f32 %v4214, %v4246
    %v4279 = vsub.f32 %v4215, %v4247
    %v4280 = vsub.f32 %v4216, %v4248
    %v4281 = vsub.f32 %v4217, %v4249
    %v4282 = vsub.f32 %v4218, %v4250
    %v4283 = vsub.f32 %v4219, %v4251
    %v4284 = vsub.f32 %v4220, %v4252
    %v4285 = vsub.f32 %v4221, %v4253
    %v4286 = vsub.f32 %v4222, %v4254
    %v4287 = vsub.f32 %v4223, %v4255
    %v4288 = vsub.f32 %v4224, %v4256
    %v4289 = vsub.f32 %v4225, %v4257
    %v4290 = vsub.f32 %v4226, %v4258
    %v4291 = vsub.f32 %v4227, %v4259
    %v4292 = vsub.f32 %v4228, %v4260
    %v4293 = vsub.f32 %v4229, %v4261
    %v4294 = vsub.f32 %v4230, %v4262
    %v4295 = vsub.f32 %v4231, %v4263
    %v4296 = vsub.f32 %v4232, %v4264
    %v4297 = vadd.f32 %v4265, 1e-05
    %v4298 = vadd.f32 %v4266, 1e-05
    %v4299 = vadd.f32 %v4267, 1e-05
    %v4300 = vadd.f32 %v4268, 1e-05
    %v4301 = vadd.f32 %v4269, 1e-05
    %v4302 = vadd.f32 %v4270, 1e-05
    %v4303 = vadd.f32 %v4271, 1e-05
    %v4304 = vadd.f32 %v4272, 1e-05
    %v4305 = vadd.f32 %v4273, 1e-05
    %v4306 = vadd.f32 %v4274, 1e-05
    %v4307 = vadd.f32 %v4275, 1e-05
    %v4308 = vadd.f32 %v4276, 1e-05
    %v4309 = vadd.f32 %v4277, 1e-05
    %v4310 = vadd.f32 %v4278, 1e-05
    %v4311 = vadd.f32 %v4279, 1e-05
    %v4312 = vadd.f32 %v4280, 1e-05
    %v4313 = vadd.f32 %v4281, 1e-05
    %v4314 = vadd.f32 %v4282, 1e-05
    %v4315 = vadd.f32 %v4283, 1e-05
    %v4316 = vadd.f32 %v4284, 1e-05
    %v4317 = vadd.f32 %v4285, 1e-05
    %v4318 = vadd.f32 %v4286, 1e-05
    %v4319 = vadd.f32 %v4287, 1e-05
    %v4320 = vadd.f32 %v4288, 1e-05
    %v4321 = vadd.f32 %v4289, 1e-05
    %v4322 = vadd.f32 %v4290, 1e-05
    %v4323 = vadd.f32 %v4291, 1e-05
    %v4324 = vadd.f32 %v4292, 1e-05
    %v4325 = vadd.f32 %v4293, 1e-05
    %v4326 = vadd.f32 %v4294, 1e-05
    %v4327 = vadd.f32 %v4295, 1e-05
    %v4328 = vadd.f32 %v4296, 1e-05
    %v4329 = vrsqrt.pop %v4297
    %v4330 = vrsqrt.pop %v4298
    %v4331 = vrsqrt.pop %v4299
    %v4332 = vrsqrt.pop %v4300
    %v4333 = vrsqrt.pop %v4301
    %v4334 = vrsqrt.pop %v4302
    %v4335 = vrsqrt.pop %v4303
    %v4336 = vrsqrt.pop %v4304
    %v4337 = vrsqrt.pop %v4305
    %v4338 = vrsqrt.pop %v4306
    %v4339 = vrsqrt.pop %v4307
    %v4340 = vrsqrt.pop %v4308
    %v4341 = vrsqrt.pop %v4309
    %v4342 = vrsqrt.pop %v4310
    %v4343 = vrsqrt.pop %v4311
    %v4344 = vrsqrt.pop %v4312
    %v4345 = vrsqrt.pop %v4313
    %v4346 = vrsqrt.pop %v4314
    %v4347 = vrsqrt.pop %v4315
    %v4348 = vrsqrt.pop %v4316
    %v4349 = vrsqrt.pop %v4317
    %v4350 = vrsqrt.pop %v4318
    %v4351 = vrsqrt.pop %v4319
    %v4352 = vrsqrt.pop %v4320
    %v4353 = vrsqrt.pop %v4321
    %v4354 = vrsqrt.pop %v4322
    %v4355 = vrsqrt.pop %v4323
    %v4356 = vrsqrt.pop %v4324
    %v4357 = vrsqrt.pop %v4325
    %v4358 = vrsqrt.pop %v4326
    %v4359 = vrsqrt.pop %v4327
    %v4360 = vrsqrt.pop %v4328
    %v4361 = vsub.f32 %v3883, %v4073
    %v4362 = vsub.f32 %v3886, %v4074
    %v4363 = vsub.f32 %v3891, %v4075
    %v4364 = vsub.f32 %v3894, %v4076
    %v4365 = vsub.f32 %v3899, %v4077
    %v4366 = vsub.f32 %v3902, %v4078
    %v4367 = vsub.f32 %v3907, %v4079
    %v4368 = vsub.f32 %v3910, %v4080
    %v4369 = vsub.f32 %v3915, %v4081
    %v4370 = vsub.f32 %v3918, %v4082
    %v4371 = vsub.f32 %v3923, %v4083
    %v4372 = vsub.f32 %v3926, %v4084
    %v4373 = vsub.f32 %v3931, %v4085
    %v4374 = vsub.f32 %v3934, %v4086
    %v4375 = vsub.f32 %v3939, %v4087
    %v4376 = vsub.f32 %v3942, %v4088
    %v4377 = vsub.f32 %v3947, %v4089
    %v4378 = vsub.f32 %v3950, %v4090
    %v4379 = vsub.f32 %v3955, %v4091
    %v4380 = vsub.f32 %v3958, %v4092
    %v4381 = vsub.f32 %v3963, %v4093
    %v4382 = vsub.f32 %v3966, %v4094
    %v4383 = vsub.f32 %v3971, %v4095
    %v4384 = vsub.f32 %v3974, %v4096
    %v4385 = vsub.f32 %v3979, %v4097
    %v4386 = vsub.f32 %v3982, %v4098
    %v4387 = vsub.f32 %v3987, %v4099
    %v4388 = vsub.f32 %v3990, %v4100
    %v4389 = vsub.f32 %v3995, %v4101
    %v4390 = vsub.f32 %v3998, %v4102
    %v4391 = vsub.f32 %v4003, %v4103
    %v4392 = vsub.f32 %v4006, %v4104
    %v4393 = vmul.f32 %v4361, %v4329
    %v4394 = vmul.f32 %v4362, %v4330
    %v4395 = vmul.f32 %v4363, %v4331
    %v4396 = vmul.f32 %v4364, %v4332
    %v4397 = vmul.f32 %v4365, %v4333
    %v4398 = vmul.f32 %v4366, %v4334
    %v4399 = vmul.f32 %v4367, %v4335
    %v4400 = vmul.f32 %v4368, %v4336
    %v4401 = vmul.f32 %v4369, %v4337
    %v4402 = vmul.f32 %v4370, %v4338
    %v4403 = vmul.f32 %v4371, %v4339
    %v4404 = vmul.f32 %v4372, %v4340
    %v4405 = vmul.f32 %v4373, %v4341
    %v4406 = vmul.f32 %v4374, %v4342
    %v4407 = vmul.f32 %v4375, %v4343
    %v4408 = vmul.f32 %v4376, %v4344
    %v4409 = vmul.f32 %v4377, %v4345
    %v4410 = vmul.f32 %v4378, %v4346
    %v4411 = vmul.f32 %v4379, %v4347
    %v4412 = vmul.f32 %v4380, %v4348
    %v4413 = vmul.f32 %v4381, %v4349
    %v4414 = vmul.f32 %v4382, %v4350
    %v4415 = vmul.f32 %v4383, %v4351
    %v4416 = vmul.f32 %v4384, %v4352
    %v4417 = vmul.f32 %v4385, %v4353
    %v4418 = vmul.f32 %v4386, %v4354
    %v4419 = vmul.f32 %v4387, %v4355
    %v4420 = vmul.f32 %v4388, %v4356
    %v4421 = vmul.f32 %v4389, %v4357
    %v4422 = vmul.f32 %v4390, %v4358
    %v4423 = vmul.f32 %v4391, %v4359
    %v4424 = vmul.f32 %v4392, %v4360
    %v4425 = vld [vmem:[%s7 + $0x19] sm:$0x1]
    %v4426 = vld [vmem:[%s7 + $0x1a] sm:$0x1]
    %v4427 = vlaneseq
    %v4428 = vshrl.u32 %v4427, 7
    %v4429 = vsub.s32 0, %v4428
    %v4430 = vrot.slane %v4425, %v4429
    %v4431 = vmul.f32 %v4393, %v4430
    %v4432 = vmul.f32 %v4394, %v4430
    %v4433 = vmul.f32 %v4395, %v4430
    %v4434 = vmul.f32 %v4396, %v4430
    %v4435 = vmul.f32 %v4397, %v4430
    %v4436 = vmul.f32 %v4398, %v4430
    %v4437 = vmul.f32 %v4399, %v4430
    %v4438 = vmul.f32 %v4400, %v4430
    %v4439 = vmul.f32 %v4401, %v4430
    %v4440 = vmul.f32 %v4402, %v4430
    %v4441 = vmul.f32 %v4403, %v4430
    %v4442 = vmul.f32 %v4404, %v4430
    %v4443 = vmul.f32 %v4405, %v4430
    %v4444 = vmul.f32 %v4406, %v4430
    %v4445 = vmul.f32 %v4407, %v4430
    %v4446 = vmul.f32 %v4408, %v4430
    %v4447 = vmul.f32 %v4409, %v4430
    %v4448 = vmul.f32 %v4410, %v4430
    %v4449 = vmul.f32 %v4411, %v4430
    %v4450 = vmul.f32 %v4412, %v4430
    %v4451 = vmul.f32 %v4413, %v4430
    %v4452 = vmul.f32 %v4414, %v4430
    %v4453 = vmul.f32 %v4415, %v4430
    %v4454 = vmul.f32 %v4416, %v4430
    %v4455 = vmul.f32 %v4417, %v4430
    %v4456 = vmul.f32 %v4418, %v4430
    %v4457 = vmul.f32 %v4419, %v4430
    %v4458 = vmul.f32 %v4420, %v4430
    %v4459 = vmul.f32 %v4421, %v4430
    %v4460 = vmul.f32 %v4422, %v4430
    %v4461 = vmul.f32 %v4423, %v4430
    %v4462 = vmul.f32 %v4424, %v4430
    %v4463 = vlaneseq
    %v4464 = vshrl.u32 %v4463, 7
    %v4465 = vsub.s32 0, %v4464
    %v4466 = vrot.slane %v4426, %v4465
    %v4467 = vadd.f32 %v4431, %v4466
    %v4468 = vadd.f32 %v4432, %v4466
    %v4469 = vadd.f32 %v4433, %v4466
    %v4470 = vadd.f32 %v4434, %v4466
    %v4471 = vadd.f32 %v4435, %v4466
    %v4472 = vadd.f32 %v4436, %v4466
    %v4473 = vadd.f32 %v4437, %v4466
    %v4474 = vadd.f32 %v4438, %v4466
    %v4475 = vadd.f32 %v4439, %v4466
    %v4476 = vadd.f32 %v4440, %v4466
    %v4477 = vadd.f32 %v4441, %v4466
    %v4478 = vadd.f32 %v4442, %v4466
    %v4479 = vadd.f32 %v4443, %v4466
    %v4480 = vadd.f32 %v4444, %v4466
    %v4481 = vadd.f32 %v4445, %v4466
    %v4482 = vadd.f32 %v4446, %v4466
    %v4483 = vadd.f32 %v4447, %v4466
    %v4484 = vadd.f32 %v4448, %v4466
    %v4485 = vadd.f32 %v4449, %v4466
    %v4486 = vadd.f32 %v4450, %v4466
    %v4487 = vadd.f32 %v4451, %v4466
    %v4488 = vadd.f32 %v4452, %v4466
    %v4489 = vadd.f32 %v4453, %v4466
    %v4490 = vadd.f32 %v4454, %v4466
    %v4491 = vadd.f32 %v4455, %v4466
    %v4492 = vadd.f32 %v4456, %v4466
    %v4493 = vadd.f32 %v4457, %v4466
    %v4494 = vadd.f32 %v4458, %v4466
    %v4495 = vadd.f32 %v4459, %v4466
    %v4496 = vadd.f32 %v4460, %v4466
    %v4497 = vadd.f32 %v4461, %v4466
    %v4498 = vadd.f32 %v4462, %v4466
    %v4499 = vmax.f32 %v4467, 0.0
    %v4500 = vmax.f32 %v4468, 0.0
    %v4501 = vmax.f32 %v4469, 0.0
    %v4502 = vmax.f32 %v4470, 0.0
    %v4503 = vmax.f32 %v4471, 0.0
    %v4504 = vmax.f32 %v4472, 0.0
    %v4505 = vmax.f32 %v4473, 0.0
    %v4506 = vmax.f32 %v4474, 0.0
    %v4507 = vmax.f32 %v4475, 0.0
    %v4508 = vmax.f32 %v4476, 0.0
    %v4509 = vmax.f32 %v4477, 0.0
    %v4510 = vmax.f32 %v4478, 0.0
    %v4511 = vmax.f32 %v4479, 0.0
    %v4512 = vmax.f32 %v4480, 0.0
    %v4513 = vmax.f32 %v4481, 0.0
    %v4514 = vmax.f32 %v4482, 0.0
    %v4515 = vmax.f32 %v4483, 0.0
    %v4516 = vmax.f32 %v4484, 0.0
    %v4517 = vmax.f32 %v4485, 0.0
    %v4518 = vmax.f32 %v4486, 0.0
    %v4519 = vmax.f32 %v4487, 0.0
    %v4520 = vmax.f32 %v4488, 0.0
    %v4521 = vmax.f32 %v4489, 0.0
    %v4522 = vmax.f32 %v4490, 0.0
    %v4523 = vmax.f32 %v4491, 0.0
    %v4524 = vmax.f32 %v4492, 0.0
    %v4525 = vmax.f32 %v4493, 0.0
    %v4526 = vmax.f32 %v4494, 0.0
    %v4527 = vmax.f32 %v4495, 0.0
    %v4528 = vmax.f32 %v4496, 0.0
    %v4529 = vmax.f32 %v4497, 0.0
    %v4530 = vmax.f32 %v4498, 0.0
    %v4531 = vpack.c.bf16 %v4500, %v4499
    %v4532 = vpack.c.bf16 %v4502, %v4501
    %v4533 = vpack.c.bf16 %v4504, %v4503
    %v4534 = vpack.c.bf16 %v4506, %v4505
    %v4535 = vpack.c.bf16 %v4508, %v4507
    %v4536 = vpack.c.bf16 %v4510, %v4509
    %v4537 = vpack.c.bf16 %v4512, %v4511
    %v4538 = vpack.c.bf16 %v4514, %v4513
    %v4539 = vpack.c.bf16 %v4516, %v4515
    %v4540 = vpack.c.bf16 %v4518, %v4517
    %v4541 = vpack.c.bf16 %v4520, %v4519
    %v4542 = vpack.c.bf16 %v4522, %v4521
    %v4543 = vpack.c.bf16 %v4524, %v4523
    %v4544 = vpack.c.bf16 %v4526, %v4525
    %v4545 = vpack.c.bf16 %v4528, %v4527
    %v4546 = vpack.c.bf16 %v4530, %v4529
    %v4547 = vld [vmem:[#allocation7] sm:$0xf]
    %v4548 = vld [vmem:[#allocation7 + $0x4] sm:$0xf]
    %v4549 = vld [vmem:[#allocation7 + $0x8] sm:$0xf]
    %v4550 = vld [vmem:[#allocation7 + $0xc] sm:$0xf]
    %v4551 = vld [vmem:[#allocation7 + $0x10] sm:$0xf]
    %v4552 = vld [vmem:[#allocation7 + $0x14] sm:$0xf]
    %v4553 = vld [vmem:[#allocation7 + $0x18] sm:$0xf]
    %v4554 = vld [vmem:[#allocation7 + $0x1c] sm:$0xf]
    %v4555 = vld [vmem:[#allocation7 + $0x20] sm:$0xf]
    %v4556 = vld [vmem:[#allocation7 + $0x24] sm:$0xf]
    %v4557 = vld [vmem:[#allocation7 + $0x28] sm:$0xf]
    %v4558 = vld [vmem:[#allocation7 + $0x2c] sm:$0xf]
    %v4559 = vld [vmem:[#allocation7 + $0x30] sm:$0xf]
    %v4560 = vld [vmem:[#allocation7 + $0x34] sm:$0xf]
    %v4561 = vld [vmem:[#allocation7 + $0x38] sm:$0xf]
    %v4562 = vld [vmem:[#allocation7 + $0x3c] sm:$0xf]
    %v4563 = vld [vmem:[%s7 + $0x1c] sm:$0x1]
    %v4564 = vlaneseq
    %v4565 = vshrl.u32 %v4564, 7
    %v4566 = vsub.s32 0, %v4565
    %v4567 = vrot.slane %v4563, %v4566
    %v4584 = vunpack.c.l.b16 %v4547
    %v4585 = vunpack.c.l.b16 %v4548
    %v4586 = vunpack.c.l.b16 %v4549
    %v4587 = vunpack.c.l.b16 %v4550
    %v4588 = vunpack.c.l.b16 %v4551
    %v4589 = vunpack.c.l.b16 %v4552
    %v4590 = vunpack.c.l.b16 %v4553
    %v4591 = vunpack.c.l.b16 %v4554
    %v4592 = vunpack.c.l.b16 %v4555
    %v4593 = vunpack.c.l.b16 %v4556
    %v4594 = vunpack.c.l.b16 %v4557
    %v4595 = vunpack.c.l.b16 %v4558
    %v4596 = vunpack.c.l.b16 %v4559
    %v4597 = vunpack.c.l.b16 %v4560
    %v4598 = vunpack.c.l.b16 %v4561
    %v4599 = vunpack.c.l.b16 %v4562
    %v4600 = vpack.c.b16 %v4585, %v4584
    %v4601 = vpack.c.b16 %v4587, %v4586
    %v4602 = vpack.c.b16 %v4589, %v4588
    %v4603 = vpack.c.b16 %v4591, %v4590
    %v4604 = vpack.c.b16 %v4593, %v4592
    %v4605 = vpack.c.b16 %v4595, %v4594
    %v4606 = vpack.c.b16 %v4597, %v4596
    %v4607 = vpack.c.b16 %v4599, %v4598
    %4616 = vmatprep.subr.bf16.mxu0 0
    %4617 = vmatpush1.bf16.msra.mxu0 %v4600
    %4618 = vmatprep.subr.bf16.mxu0 0
    %4619 = vmatpush1.bf16.msra.mxu0 %v4601
    %4620 = vmatprep.subr.bf16.mxu0 0
    %4621 = vmatpush1.bf16.msra.mxu0 %v4602
    %4622 = vmatprep.subr.bf16.mxu0 0
    %4623 = vmatpush1.bf16.msra.mxu0 %v4603
    %4624 = vmatprep.subr.bf16.mxu0 0
    %4625 = vmatpush1.bf16.msra.mxu0 %v4604
    %4626 = vmatprep.subr.bf16.mxu0 0
    %4627 = vmatpush1.bf16.msra.mxu0 %v4605
    %4628 = vmatprep.subr.bf16.mxu0 0
    %4629 = vmatpush1.bf16.msra.mxu0 %v4606
    %4630 = vmatprep.subr.bf16.mxu0 0
    %4631 = vmatpush1.bf16.msra.mxu0 %v4607
    %4632 = vmatprep.subr.bf16.mxu0 0
    %4633 = vmatpush1.bf16.msra.mxu0 0
    %4634 = vmatprep.subr.bf16.mxu0 0
    %4635 = vmatpush1.bf16.msra.mxu0 0
    %4636 = vmatprep.subr.bf16.mxu0 0
    %4637 = vmatpush1.bf16.msra.mxu0 0
    %4638 = vmatprep.subr.bf16.mxu0 0
    %4639 = vmatpush1.bf16.msra.mxu0 0
    %4640 = vmatprep.subr.bf16.mxu0 0
    %4641 = vmatpush1.bf16.msra.mxu0 0
    %4642 = vmatprep.subr.bf16.mxu0 0
    %4643 = vmatpush1.bf16.msra.mxu0 0
    %4644 = vmatprep.subr.bf16.mxu0 0
    %4645 = vmatpush1.bf16.msra.mxu0 0
    %4646 = vmatprep.subr.bf16.mxu0 0
    %4647 = vmatpush1.bf16.msra.mxu0 0
    %4648 = vmatprep.mubr.bf16.mxu0 0
    %4649 = vmatmul.mubr.bf16.gmra.mrb[0].mxu0 %v4531
    %v4650 = vpop.f32.mrb[0].mxu0
    %v4651 = vadd.f32 %v4567, %v4650
    %v4652 = vpop.f32.mrb[0].mxu0
    %v4653 = vpop.f32.mrb[0].mxu0
    %v4654 = vadd.f32 %v4567, %v4653
    %v4655 = vpop.f32.mrb[0].mxu0
    %4656 = vmatprep.mubr.bf16.mxu0 0
    %4657 = vmatmul.mubr.bf16.gmra.mrb[0].mxu0 %v4532
    %v4658 = vpop.f32.mrb[0].mxu0
    %v4659 = vadd.f32 %v4567, %v4658
    %v4660 = vpop.f32.mrb[0].mxu0
    %v4661 = vpop.f32.mrb[0].mxu0
    %v4662 = vadd.f32 %v4567, %v4661
    %v4663 = vpop.f32.mrb[0].mxu0
    %4664 = vmatprep.mubr.bf16.mxu0 0
    %4665 = vmatmul.mubr.bf16.gmra.mrb[0].mxu0 %v4533
    %v4666 = vpop.f32.mrb[0].mxu0
    %v4667 = vadd.f32 %v4567, %v4666
    %v4668 = vpop.f32.mrb[0].mxu0
    %v4669 = vpop.f32.mrb[0].mxu0
    %v4670 = vadd.f32 %v4567, %v4669
    %v4671 = vpop.f32.mrb[0].mxu0
    %4672 = vmatprep.mubr.bf16.mxu0 0
    %4673 = vmatmul.mubr.bf16.gmra.mrb[0].mxu0 %v4534
    %v4674 = vpop.f32.mrb[0].mxu0
    %v4675 = vadd.f32 %v4567, %v4674
    %v4676 = vpop.f32.mrb[0].mxu0
    %v4677 = vpop.f32.mrb[0].mxu0
    %v4678 = vadd.f32 %v4567, %v4677
    %v4679 = vpop.f32.mrb[0].mxu0
    %4680 = vmatprep.mubr.bf16.mxu0 0
    %4681 = vmatmul.mubr.bf16.gmra.mrb[0].mxu0 %v4535
    %v4682 = vpop.f32.mrb[0].mxu0
    %v4683 = vadd.f32 %v4567, %v4682
    %v4684 = vpop.f32.mrb[0].mxu0
    %v4685 = vpop.f32.mrb[0].mxu0
    %v4686 = vadd.f32 %v4567, %v4685
    %v4687 = vpop.f32.mrb[0].mxu0
    %4688 = vmatprep.mubr.bf16.mxu0 0
    %4689 = vmatmul.mubr.bf16.gmra.mrb[0].mxu0 %v4536
    %v4690 = vpop.f32.mrb[0].mxu0
    %v4691 = vadd.f32 %v4567, %v4690
    %v4692 = vpop.f32.mrb[0].mxu0
    %v4693 = vpop.f32.mrb[0].mxu0
    %v4694 = vadd.f32 %v4567, %v4693
    %v4695 = vpop.f32.mrb[0].mxu0
    %4696 = vmatprep.mubr.bf16.mxu0 0
    %4697 = vmatmul.mubr.bf16.gmra.mrb[0].mxu0 %v4537
    %v4698 = vpop.f32.mrb[0].mxu0
    %v4699 = vadd.f32 %v4567, %v4698
    %v4700 = vpop.f32.mrb[0].mxu0
    %v4701 = vpop.f32.mrb[0].mxu0
    %v4702 = vadd.f32 %v4567, %v4701
    %v4703 = vpop.f32.mrb[0].mxu0
    %4704 = vmatprep.mubr.bf16.mxu0 0
    %4705 = vmatmul.mubr.bf16.gmra.mrb[0].mxu0 %v4538
    %v4706 = vpop.f32.mrb[0].mxu0
    %v4707 = vadd.f32 %v4567, %v4706
    %v4708 = vpop.f32.mrb[0].mxu0
    %v4709 = vpop.f32.mrb[0].mxu0
    %v4710 = vadd.f32 %v4567, %v4709
    %v4711 = vpop.f32.mrb[0].mxu0
    %4712 = vmatprep.mubr.bf16.mxu0 0
    %4713 = vmatmul.mubr.bf16.gmra.mrb[0].mxu0 %v4539
    %v4714 = vpop.f32.mrb[0].mxu0
    %v4715 = vadd.f32 %v4567, %v4714
    %v4716 = vpop.f32.mrb[0].mxu0
    %v4717 = vpop.f32.mrb[0].mxu0
    %v4718 = vadd.f32 %v4567, %v4717
    %v4719 = vpop.f32.mrb[0].mxu0
    %4720 = vmatprep.mubr.bf16.mxu0 0
    %4721 = vmatmul.mubr.bf16.gmra.mrb[0].mxu0 %v4540
    %v4722 = vpop.f32.mrb[0].mxu0
    %v4723 = vadd.f32 %v4567, %v4722
    %v4724 = vpop.f32.mrb[0].mxu0
    %v4725 = vpop.f32.mrb[0].mxu0
    %v4726 = vadd.f32 %v4567, %v4725
    %v4727 = vpop.f32.mrb[0].mxu0
    %4728 = vmatprep.mubr.bf16.mxu0 0
    %4729 = vmatmul.mubr.bf16.gmra.mrb[0].mxu0 %v4541
    %v4730 = vpop.f32.mrb[0].mxu0
    %v4731 = vadd.f32 %v4567, %v4730
    %v4732 = vpop.f32.mrb[0].mxu0
    %v4733 = vpop.f32.mrb[0].mxu0
    %v4734 = vadd.f32 %v4567, %v4733
    %v4735 = vpop.f32.mrb[0].mxu0
    %4736 = vmatprep.mubr.bf16.mxu0 0
    %4737 = vmatmul.mubr.bf16.gmra.mrb[0].mxu0 %v4542
    %v4738 = vpop.f32.mrb[0].mxu0
    %v4739 = vadd.f32 %v4567, %v4738
    %v4740 = vpop.f32.mrb[0].mxu0
    %v4741 = vpop.f32.mrb[0].mxu0
    %v4742 = vadd.f32 %v4567, %v4741
    %v4743 = vpop.f32.mrb[0].mxu0
    %4744 = vmatprep.mubr.bf16.mxu0 0
    %4745 = vmatmul.mubr.bf16.gmra.mrb[0].mxu0 %v4543
    %v4746 = vpop.f32.mrb[0].mxu0
    %v4747 = vadd.f32 %v4567, %v4746
    %v4748 = vpop.f32.mrb[0].mxu0
    %v4749 = vpop.f32.mrb[0].mxu0
    %v4750 = vadd.f32 %v4567, %v4749
    %v4751 = vpop.f32.mrb[0].mxu0
    %4752 = vmatprep.mubr.bf16.mxu0 0
    %4753 = vmatmul.mubr.bf16.gmra.mrb[0].mxu0 %v4544
    %v4754 = vpop.f32.mrb[0].mxu0
    %v4755 = vadd.f32 %v4567, %v4754
    %v4756 = vpop.f32.mrb[0].mxu0
    %v4757 = vpop.f32.mrb[0].mxu0
    %v4758 = vadd.f32 %v4567, %v4757
    %v4759 = vpop.f32.mrb[0].mxu0
    %4760 = vmatprep.mubr.bf16.mxu0 0
    %4761 = vmatmul.mubr.bf16.gmra.mrb[0].mxu0 %v4545
    %v4762 = vpop.f32.mrb[0].mxu0
    %v4763 = vadd.f32 %v4567, %v4762
    %v4764 = vpop.f32.mrb[0].mxu0
    %v4765 = vpop.f32.mrb[0].mxu0
    %v4766 = vadd.f32 %v4567, %v4765
    %v4767 = vpop.f32.mrb[0].mxu0
    %4768 = vmatprep.mubr.bf16.mxu0 0
    %4769 = vmatmul.mubr.bf16.gmra.mrb[0].mxu0 %v4546
    %v4770 = vpop.f32.mrb[0].mxu0
    %v4771 = vadd.f32 %v4567, %v4770
    %v4772 = vpop.f32.mrb[0].mxu0
    %v4773 = vpop.f32.mrb[0].mxu0
    %v4774 = vadd.f32 %v4567, %v4773
    %v4775 = vpop.f32.mrb[0].mxu0
    %4776 = vdwg.mxu0
    %4777 = vadd.xlane.f32.xlu0 %v4651
    %v4778 = vpop.xlane.xlu0 %4777
    %4779 = vadd.xlane.f32.xlu0 %v4654
    %v4780 = vpop.xlane.xlu0 %4779
    %4781 = vadd.xlane.f32.xlu0 %v4659
    %v4782 = vpop.xlane.xlu0 %4781
    %4783 = vadd.xlane.f32.xlu0 %v4662
    %v4784 = vpop.xlane.xlu0 %4783
    %4785 = vadd.xlane.f32.xlu0 %v4667
    %v4786 = vpop.xlane.xlu0 %4785
    %4787 = vadd.xlane.f32.xlu0 %v4670
    %v4788 = vpop.xlane.xlu0 %4787
    %4789 = vadd.xlane.f32.xlu0 %v4675
    %v4790 = vpop.xlane.xlu0 %4789
    %4791 = vadd.xlane.f32.xlu0 %v4678
    %v4792 = vpop.xlane.xlu0 %4791
    %4793 = vadd.xlane.f32.xlu0 %v4683
    %v4794 = vpop.xlane.xlu0 %4793
    %4795 = vadd.xlane.f32.xlu0 %v4686
    %v4796 = vpop.xlane.xlu0 %4795
    %4797 = vadd.xlane.f32.xlu0 %v4691
    %v4798 = vpop.xlane.xlu0 %4797
    %4799 = vadd.xlane.f32.xlu0 %v4694
    %v4800 = vpop.xlane.xlu0 %4799
    %4801 = vadd.xlane.f32.xlu0 %v4699
    %v4802 = vpop.xlane.xlu0 %4801
    %4803 = vadd.xlane.f32.xlu0 %v4702
    %v4804 = vpop.xlane.xlu0 %4803
    %4805 = vadd.xlane.f32.xlu0 %v4707
    %v4806 = vpop.xlane.xlu0 %4805
    %4807 = vadd.xlane.f32.xlu0 %v4710
    %v4808 = vpop.xlane.xlu0 %4807
    %4809 = vadd.xlane.f32.xlu0 %v4715
    %v4810 = vpop.xlane.xlu0 %4809
    %4811 = vadd.xlane.f32.xlu0 %v4718
    %v4812 = vpop.xlane.xlu0 %4811
    %4813 = vadd.xlane.f32.xlu0 %v4723
    %v4814 = vpop.xlane.xlu0 %4813
    %4815 = vadd.xlane.f32.xlu0 %v4726
    %v4816 = vpop.xlane.xlu0 %4815
    %4817 = vadd.xlane.f32.xlu0 %v4731
    %v4818 = vpop.xlane.xlu0 %4817
    %4819 = vadd.xlane.f32.xlu0 %v4734
    %v4820 = vpop.xlane.xlu0 %4819
    %4821 = vadd.xlane.f32.xlu0 %v4739
    %v4822 = vpop.xlane.xlu0 %4821
    %4823 = vadd.xlane.f32.xlu0 %v4742
    %v4824 = vpop.xlane.xlu0 %4823
    %4825 = vadd.xlane.f32.xlu0 %v4747
    %v4826 = vpop.xlane.xlu0 %4825
    %4827 = vadd.xlane.f32.xlu0 %v4750
    %v4828 = vpop.xlane.xlu0 %4827
    %4829 = vadd.xlane.f32.xlu0 %v4755
    %v4830 = vpop.xlane.xlu0 %4829
    %4831 = vadd.xlane.f32.xlu0 %v4758
    %v4832 = vpop.xlane.xlu0 %4831
    %4833 = vadd.xlane.f32.xlu0 %v4763
    %v4834 = vpop.xlane.xlu0 %4833
    %4835 = vadd.xlane.f32.xlu0 %v4766
    %v4836 = vpop.xlane.xlu0 %4835
    %4837 = vadd.xlane.f32.xlu0 %v4771
    %v4838 = vpop.xlane.xlu0 %4837
    %4839 = vadd.xlane.f32.xlu0 %v4774
    %v4840 = vpop.xlane.xlu0 %4839
    %v4841 = vmul.f32 %v4778, 0.015625
    %v4842 = vmul.f32 %v4780, 0.015625
    %v4843 = vmul.f32 %v4782, 0.015625
    %v4844 = vmul.f32 %v4784, 0.015625
    %v4845 = vmul.f32 %v4786, 0.015625
    %v4846 = vmul.f32 %v4788, 0.015625
    %v4847 = vmul.f32 %v4790, 0.015625
    %v4848 = vmul.f32 %v4792, 0.015625
    %v4849 = vmul.f32 %v4794, 0.015625
    %v4850 = vmul.f32 %v4796, 0.015625
    %v4851 = vmul.f32 %v4798, 0.015625
    %v4852 = vmul.f32 %v4800, 0.015625
    %v4853 = vmul.f32 %v4802, 0.015625
    %v4854 = vmul.f32 %v4804, 0.015625
    %v4855 = vmul.f32 %v4806, 0.015625
    %v4856 = vmul.f32 %v4808, 0.015625
    %v4857 = vmul.f32 %v4810, 0.015625
    %v4858 = vmul.f32 %v4812, 0.015625
    %v4859 = vmul.f32 %v4814, 0.015625
    %v4860 = vmul.f32 %v4816, 0.015625
    %v4861 = vmul.f32 %v4818, 0.015625
    %v4862 = vmul.f32 %v4820, 0.015625
    %v4863 = vmul.f32 %v4822, 0.015625
    %v4864 = vmul.f32 %v4824, 0.015625
    %v4865 = vmul.f32 %v4826, 0.015625
    %v4866 = vmul.f32 %v4828, 0.015625
    %v4867 = vmul.f32 %v4830, 0.015625
    %v4868 = vmul.f32 %v4832, 0.015625
    %v4869 = vmul.f32 %v4834, 0.015625
    %v4870 = vmul.f32 %v4836, 0.015625
    %v4871 = vmul.f32 %v4838, 0.015625
    %v4872 = vmul.f32 %v4840, 0.015625
    %v4873 = vmul.f32 %v4651, %v4651
    %v4874 = vmul.f32 %v4654, %v4654
    %v4875 = vmul.f32 %v4659, %v4659
    %v4876 = vmul.f32 %v4662, %v4662
    %v4877 = vmul.f32 %v4667, %v4667
    %v4878 = vmul.f32 %v4670, %v4670
    %v4879 = vmul.f32 %v4675, %v4675
    %v4880 = vmul.f32 %v4678, %v4678
    %v4881 = vmul.f32 %v4683, %v4683
    %v4882 = vmul.f32 %v4686, %v4686
    %v4883 = vmul.f32 %v4691, %v4691
    %v4884 = vmul.f32 %v4694, %v4694
    %v4885 = vmul.f32 %v4699, %v4699
    %v4886 = vmul.f32 %v4702, %v4702
    %v4887 = vmul.f32 %v4707, %v4707
    %v4888 = vmul.f32 %v4710, %v4710
    %v4889 = vmul.f32 %v4715, %v4715
    %v4890 = vmul.f32 %v4718, %v4718
    %v4891 = vmul.f32 %v4723, %v4723
    %v4892 = vmul.f32 %v4726, %v4726
    %v4893 = vmul.f32 %v4731, %v4731
    %v4894 = vmul.f32 %v4734, %v4734
    %v4895 = vmul.f32 %v4739, %v4739
    %v4896 = vmul.f32 %v4742, %v4742
    %v4897 = vmul.f32 %v4747, %v4747
    %v4898 = vmul.f32 %v4750, %v4750
    %v4899 = vmul.f32 %v4755, %v4755
    %v4900 = vmul.f32 %v4758, %v4758
    %v4901 = vmul.f32 %v4763, %v4763
    %v4902 = vmul.f32 %v4766, %v4766
    %v4903 = vmul.f32 %v4771, %v4771
    %v4904 = vmul.f32 %v4774, %v4774
    %4905 = vadd.xlane.f32.xlu0 %v4873
    %v4906 = vpop.xlane.xlu0 %4905
    %4907 = vadd.xlane.f32.xlu0 %v4874
    %v4908 = vpop.xlane.xlu0 %4907
    %4909 = vadd.xlane.f32.xlu0 %v4875
    %v4910 = vpop.xlane.xlu0 %4909
    %4911 = vadd.xlane.f32.xlu0 %v4876
    %v4912 = vpop.xlane.xlu0 %4911
    %4913 = vadd.xlane.f32.xlu0 %v4877
    %v4914 = vpop.xlane.xlu0 %4913
    %4915 = vadd.xlane.f32.xlu0 %v4878
    %v4916 = vpop.xlane.xlu0 %4915
    %4917 = vadd.xlane.f32.xlu0 %v4879
    %v4918 = vpop.xlane.xlu0 %4917
    %4919 = vadd.xlane.f32.xlu0 %v4880
    %v4920 = vpop.xlane.xlu0 %4919
    %4921 = vadd.xlane.f32.xlu0 %v4881
    %v4922 = vpop.xlane.xlu0 %4921
    %4923 = vadd.xlane.f32.xlu0 %v4882
    %v4924 = vpop.xlane.xlu0 %4923
    %4925 = vadd.xlane.f32.xlu0 %v4883
    %v4926 = vpop.xlane.xlu0 %4925
    %4927 = vadd.xlane.f32.xlu0 %v4884
    %v4928 = vpop.xlane.xlu0 %4927
    %4929 = vadd.xlane.f32.xlu0 %v4885
    %v4930 = vpop.xlane.xlu0 %4929
    %4931 = vadd.xlane.f32.xlu0 %v4886
    %v4932 = vpop.xlane.xlu0 %4931
    %4933 = vadd.xlane.f32.xlu0 %v4887
    %v4934 = vpop.xlane.xlu0 %4933
    %4935 = vadd.xlane.f32.xlu0 %v4888
    %v4936 = vpop.xlane.xlu0 %4935
    %4937 = vadd.xlane.f32.xlu0 %v4889
    %v4938 = vpop.xlane.xlu0 %4937
    %4939 = vadd.xlane.f32.xlu0 %v4890
    %v4940 = vpop.xlane.xlu0 %4939
    %4941 = vadd.xlane.f32.xlu0 %v4891
    %v4942 = vpop.xlane.xlu0 %4941
    %4943 = vadd.xlane.f32.xlu0 %v4892
    %v4944 = vpop.xlane.xlu0 %4943
    %4945 = vadd.xlane.f32.xlu0 %v4893
    %v4946 = vpop.xlane.xlu0 %4945
    %4947 = vadd.xlane.f32.xlu0 %v4894
    %v4948 = vpop.xlane.xlu0 %4947
    %4949 = vadd.xlane.f32.xlu0 %v4895
    %v4950 = vpop.xlane.xlu0 %4949
    %4951 = vadd.xlane.f32.xlu0 %v4896
    %v4952 = vpop.xlane.xlu0 %4951
    %4953 = vadd.xlane.f32.xlu0 %v4897
    %v4954 = vpop.xlane.xlu0 %4953
    %4955 = vadd.xlane.f32.xlu0 %v4898
    %v4956 = vpop.xlane.xlu0 %4955
    %4957 = vadd.xlane.f32.xlu0 %v4899
    %v4958 = vpop.xlane.xlu0 %4957
    %4959 = vadd.xlane.f32.xlu0 %v4900
    %v4960 = vpop.xlane.xlu0 %4959
    %4961 = vadd.xlane.f32.xlu0 %v4901
    %v4962 = vpop.xlane.xlu0 %4961
    %4963 = vadd.xlane.f32.xlu0 %v4902
    %v4964 = vpop.xlane.xlu0 %4963
    %4965 = vadd.xlane.f32.xlu0 %v4903
    %v4966 = vpop.xlane.xlu0 %4965
    %4967 = vadd.xlane.f32.xlu0 %v4904
    %v4968 = vpop.xlane.xlu0 %4967
    %v4969 = vmul.f32 %v4906, 0.015625
    %v4970 = vmul.f32 %v4908, 0.015625
    %v4971 = vmul.f32 %v4910, 0.015625
    %v4972 = vmul.f32 %v4912, 0.015625
    %v4973 = vmul.f32 %v4914, 0.015625
    %v4974 = vmul.f32 %v4916, 0.015625
    %v4975 = vmul.f32 %v4918, 0.015625
    %v4976 = vmul.f32 %v4920, 0.015625
    %v4977 = vmul.f32 %v4922, 0.015625
    %v4978 = vmul.f32 %v4924, 0.015625
    %v4979 = vmul.f32 %v4926, 0.015625
    %v4980 = vmul.f32 %v4928, 0.015625
    %v4981 = vmul.f32 %v4930, 0.015625
    %v4982 = vmul.f32 %v4932, 0.015625
    %v4983 = vmul.f32 %v4934, 0.015625
    %v4984 = vmul.f32 %v4936, 0.015625
    %v4985 = vmul.f32 %v4938, 0.015625
    %v4986 = vmul.f32 %v4940, 0.015625
    %v4987 = vmul.f32 %v4942, 0.015625
    %v4988 = vmul.f32 %v4944, 0.015625
    %v4989 = vmul.f32 %v4946, 0.015625
    %v4990 = vmul.f32 %v4948, 0.015625
    %v4991 = vmul.f32 %v4950, 0.015625
    %v4992 = vmul.f32 %v4952, 0.015625
    %v4993 = vmul.f32 %v4954, 0.015625
    %v4994 = vmul.f32 %v4956, 0.015625
    %v4995 = vmul.f32 %v4958, 0.015625
    %v4996 = vmul.f32 %v4960, 0.015625
    %v4997 = vmul.f32 %v4962, 0.015625
    %v4998 = vmul.f32 %v4964, 0.015625
    %v4999 = vmul.f32 %v4966, 0.015625
    %v5000 = vmul.f32 %v4968, 0.015625
    %v5001 = vmul.f32 %v4841, %v4841
    %v5002 = vmul.f32 %v4842, %v4842
    %v5003 = vmul.f32 %v4843, %v4843
    %v5004 = vmul.f32 %v4844, %v4844
    %v5005 = vmul.f32 %v4845, %v4845
    %v5006 = vmul.f32 %v4846, %v4846
    %v5007 = vmul.f32 %v4847, %v4847
    %v5008 = vmul.f32 %v4848, %v4848
    %v5009 = vmul.f32 %v4849, %v4849
    %v5010 = vmul.f32 %v4850, %v4850
    %v5011 = vmul.f32 %v4851, %v4851
    %v5012 = vmul.f32 %v4852, %v4852
    %v5013 = vmul.f32 %v4853, %v4853
    %v5014 = vmul.f32 %v4854, %v4854
    %v5015 = vmul.f32 %v4855, %v4855
    %v5016 = vmul.f32 %v4856, %v4856
    %v5017 = vmul.f32 %v4857, %v4857
    %v5018 = vmul.f32 %v4858, %v4858
    %v5019 = vmul.f32 %v4859, %v4859
    %v5020 = vmul.f32 %v4860, %v4860
    %v5021 = vmul.f32 %v4861, %v4861
    %v5022 = vmul.f32 %v4862, %v4862
    %v5023 = vmul.f32 %v4863, %v4863
    %v5024 = vmul.f32 %v4864, %v4864
    %v5025 = vmul.f32 %v4865, %v4865
    %v5026 = vmul.f32 %v4866, %v4866
    %v5027 = vmul.f32 %v4867, %v4867
    %v5028 = vmul.f32 %v4868, %v4868
    %v5029 = vmul.f32 %v4869, %v4869
    %v5030 = vmul.f32 %v4870, %v4870
    %v5031 = vmul.f32 %v4871, %v4871
    %v5032 = vmul.f32 %v4872, %v4872
    %v5033 = vsub.f32 %v4969, %v5001
    %v5034 = vsub.f32 %v4970, %v5002
    %v5035 = vsub.f32 %v4971, %v5003
    %v5036 = vsub.f32 %v4972, %v5004
    %v5037 = vsub.f32 %v4973, %v5005
    %v5038 = vsub.f32 %v4974, %v5006
    %v5039 = vsub.f32 %v4975, %v5007
    %v5040 = vsub.f32 %v4976, %v5008
    %v5041 = vsub.f32 %v4977, %v5009
    %v5042 = vsub.f32 %v4978, %v5010
    %v5043 = vsub.f32 %v4979, %v5011
    %v5044 = vsub.f32 %v4980, %v5012
    %v5045 = vsub.f32 %v4981, %v5013
    %v5046 = vsub.f32 %v4982, %v5014
    %v5047 = vsub.f32 %v4983, %v5015
    %v5048 = vsub.f32 %v4984, %v5016
    %v5049 = vsub.f32 %v4985, %v5017
    %v5050 = vsub.f32 %v4986, %v5018
    %v5051 = vsub.f32 %v4987, %v5019
    %v5052 = vsub.f32 %v4988, %v5020
    %v5053 = vsub.f32 %v4989, %v5021
    %v5054 = vsub.f32 %v4990, %v5022
    %v5055 = vsub.f32 %v4991, %v5023
    %v5056 = vsub.f32 %v4992, %v5024
    %v5057 = vsub.f32 %v4993, %v5025
    %v5058 = vsub.f32 %v4994, %v5026
    %v5059 = vsub.f32 %v4995, %v5027
    %v5060 = vsub.f32 %v4996, %v5028
    %v5061 = vsub.f32 %v4997, %v5029
    %v5062 = vsub.f32 %v4998, %v5030
    %v5063 = vsub.f32 %v4999, %v5031
    %v5064 = vsub.f32 %v5000, %v5032
    %v5065 = vadd.f32 %v5033, 1e-05
    %v5066 = vadd.f32 %v5034, 1e-05
    %v5067 = vadd.f32 %v5035, 1e-05
    %v5068 = vadd.f32 %v5036, 1e-05
    %v5069 = vadd.f32 %v5037, 1e-05
    %v5070 = vadd.f32 %v5038, 1e-05
    %v5071 = vadd.f32 %v5039, 1e-05
    %v5072 = vadd.f32 %v5040, 1e-05
    %v5073 = vadd.f32 %v5041, 1e-05
    %v5074 = vadd.f32 %v5042, 1e-05
    %v5075 = vadd.f32 %v5043, 1e-05
    %v5076 = vadd.f32 %v5044, 1e-05
    %v5077 = vadd.f32 %v5045, 1e-05
    %v5078 = vadd.f32 %v5046, 1e-05
    %v5079 = vadd.f32 %v5047, 1e-05
    %v5080 = vadd.f32 %v5048, 1e-05
    %v5081 = vadd.f32 %v5049, 1e-05
    %v5082 = vadd.f32 %v5050, 1e-05
    %v5083 = vadd.f32 %v5051, 1e-05
    %v5084 = vadd.f32 %v5052, 1e-05
    %v5085 = vadd.f32 %v5053, 1e-05
    %v5086 = vadd.f32 %v5054, 1e-05
    %v5087 = vadd.f32 %v5055, 1e-05
    %v5088 = vadd.f32 %v5056, 1e-05
    %v5089 = vadd.f32 %v5057, 1e-05
    %v5090 = vadd.f32 %v5058, 1e-05
    %v5091 = vadd.f32 %v5059, 1e-05
    %v5092 = vadd.f32 %v5060, 1e-05
    %v5093 = vadd.f32 %v5061, 1e-05
    %v5094 = vadd.f32 %v5062, 1e-05
    %v5095 = vadd.f32 %v5063, 1e-05
    %v5096 = vadd.f32 %v5064, 1e-05
    %v5097 = vrsqrt.pop %v5065
    %v5098 = vrsqrt.pop %v5066
    %v5099 = vrsqrt.pop %v5067
    %v5100 = vrsqrt.pop %v5068
    %v5101 = vrsqrt.pop %v5069
    %v5102 = vrsqrt.pop %v5070
    %v5103 = vrsqrt.pop %v5071
    %v5104 = vrsqrt.pop %v5072
    %v5105 = vrsqrt.pop %v5073
    %v5106 = vrsqrt.pop %v5074
    %v5107 = vrsqrt.pop %v5075
    %v5108 = vrsqrt.pop %v5076
    %v5109 = vrsqrt.pop %v5077
    %v5110 = vrsqrt.pop %v5078
    %v5111 = vrsqrt.pop %v5079
    %v5112 = vrsqrt.pop %v5080
    %v5113 = vrsqrt.pop %v5081
    %v5114 = vrsqrt.pop %v5082
    %v5115 = vrsqrt.pop %v5083
    %v5116 = vrsqrt.pop %v5084
    %v5117 = vrsqrt.pop %v5085
    %v5118 = vrsqrt.pop %v5086
    %v5119 = vrsqrt.pop %v5087
    %v5120 = vrsqrt.pop %v5088
    %v5121 = vrsqrt.pop %v5089
    %v5122 = vrsqrt.pop %v5090
    %v5123 = vrsqrt.pop %v5091
    %v5124 = vrsqrt.pop %v5092
    %v5125 = vrsqrt.pop %v5093
    %v5126 = vrsqrt.pop %v5094
    %v5127 = vrsqrt.pop %v5095
    %v5128 = vrsqrt.pop %v5096
    %v5129 = vsub.f32 %v4651, %v4841
    %v5130 = vsub.f32 %v4654, %v4842
    %v5131 = vsub.f32 %v4659, %v4843
    %v5132 = vsub.f32 %v4662, %v4844
    %v5133 = vsub.f32 %v4667, %v4845
    %v5134 = vsub.f32 %v4670, %v4846
    %v5135 = vsub.f32 %v4675, %v4847
    %v5136 = vsub.f32 %v4678, %v4848
    %v5137 = vsub.f32 %v4683, %v4849
    %v5138 = vsub.f32 %v4686, %v4850
    %v5139 = vsub.f32 %v4691, %v4851
    %v5140 = vsub.f32 %v4694, %v4852
    %v5141 = vsub.f32 %v4699, %v4853
    %v5142 = vsub.f32 %v4702, %v4854
    %v5143 = vsub.f32 %v4707, %v4855
    %v5144 = vsub.f32 %v4710, %v4856
    %v5145 = vsub.f32 %v4715, %v4857
    %v5146 = vsub.f32 %v4718, %v4858
    %v5147 = vsub.f32 %v4723, %v4859
    %v5148 = vsub.f32 %v4726, %v4860
    %v5149 = vsub.f32 %v4731, %v4861
    %v5150 = vsub.f32 %v4734, %v4862
    %v5151 = vsub.f32 %v4739, %v4863
    %v5152 = vsub.f32 %v4742, %v4864
    %v5153 = vsub.f32 %v4747, %v4865
    %v5154 = vsub.f32 %v4750, %v4866
    %v5155 = vsub.f32 %v4755, %v4867
    %v5156 = vsub.f32 %v4758, %v4868
    %v5157 = vsub.f32 %v4763, %v4869
    %v5158 = vsub.f32 %v4766, %v4870
    %v5159 = vsub.f32 %v4771, %v4871
    %v5160 = vsub.f32 %v4774, %v4872
    %v5161 = vmul.f32 %v5129, %v5097
    %v5162 = vmul.f32 %v5130, %v5098
    %v5163 = vmul.f32 %v5131, %v5099
    %v5164 = vmul.f32 %v5132, %v5100
    %v5165 = vmul.f32 %v5133, %v5101
    %v5166 = vmul.f32 %v5134, %v5102
    %v5167 = vmul.f32 %v5135, %v5103
    %v5168 = vmul.f32 %v5136, %v5104
    %v5169 = vmul.f32 %v5137, %v5105
    %v5170 = vmul.f32 %v5138, %v5106
    %v5171 = vmul.f32 %v5139, %v5107
    %v5172 = vmul.f32 %v5140, %v5108
    %v5173 = vmul.f32 %v5141, %v5109
    %v5174 = vmul.f32 %v5142, %v5110
    %v5175 = vmul.f32 %v5143, %v5111
    %v5176 = vmul.f32 %v5144, %v5112
    %v5177 = vmul.f32 %v5145, %v5113
    %v5178 = vmul.f32 %v5146, %v5114
    %v5179 = vmul.f32 %v5147, %v5115
    %v5180 = vmul.f32 %v5148, %v5116
    %v5181 = vmul.f32 %v5149, %v5117
    %v5182 = vmul.f32 %v5150, %v5118
    %v5183 = vmul.f32 %v5151, %v5119
    %v5184 = vmul.f32 %v5152, %v5120
    %v5185 = vmul.f32 %v5153, %v5121
    %v5186 = vmul.f32 %v5154, %v5122
    %v5187 = vmul.f32 %v5155, %v5123
    %v5188 = vmul.f32 %v5156, %v5124
    %v5189 = vmul.f32 %v5157, %v5125
    %v5190 = vmul.f32 %v5158, %v5126
    %v5191 = vmul.f32 %v5159, %v5127
    %v5192 = vmul.f32 %v5160, %v5128
    %v5193 = vld [vmem:[%s7 + $0x1d] sm:$0x1]
    %v5194 = vld [vmem:[%s7 + $0x1e] sm:$0x1]
    %v5195 = vlaneseq
    %v5196 = vshrl.u32 %v5195, 7
    %v5197 = vsub.s32 0, %v5196
    %v5198 = vrot.slane %v5193, %v5197
    %v5199 = vmul.f32 %v5161, %v5198
    %v5200 = vmul.f32 %v5162, %v5198
    %v5201 = vmul.f32 %v5163, %v5198
    %v5202 = vmul.f32 %v5164, %v5198
    %v5203 = vmul.f32 %v5165, %v5198
    %v5204 = vmul.f32 %v5166, %v5198
    %v5205 = vmul.f32 %v5167, %v5198
    %v5206 = vmul.f32 %v5168, %v5198
    %v5207 = vmul.f32 %v5169, %v5198
    %v5208 = vmul.f32 %v5170, %v5198
    %v5209 = vmul.f32 %v5171, %v5198
    %v5210 = vmul.f32 %v5172, %v5198
    %v5211 = vmul.f32 %v5173, %v5198
    %v5212 = vmul.f32 %v5174, %v5198
    %v5213 = vmul.f32 %v5175, %v5198
    %v5214 = vmul.f32 %v5176, %v5198
    %v5215 = vmul.f32 %v5177, %v5198
    %v5216 = vmul.f32 %v5178, %v5198
    %v5217 = vmul.f32 %v5179, %v5198
    %v5218 = vmul.f32 %v5180, %v5198
    %v5219 = vmul.f32 %v5181, %v5198
    %v5220 = vmul.f32 %v5182, %v5198
    %v5221 = vmul.f32 %v5183, %v5198
    %v5222 = vmul.f32 %v5184, %v5198
    %v5223 = vmul.f32 %v5185, %v5198
    %v5224 = vmul.f32 %v5186, %v5198
    %v5225 = vmul.f32 %v5187, %v5198
    %v5226 = vmul.f32 %v5188, %v5198
    %v5227 = vmul.f32 %v5189, %v5198
    %v5228 = vmul.f32 %v5190, %v5198
    %v5229 = vmul.f32 %v5191, %v5198
    %v5230 = vmul.f32 %v5192, %v5198
    %v5231 = vlaneseq
    %v5232 = vshrl.u32 %v5231, 7
    %v5233 = vsub.s32 0, %v5232
    %v5234 = vrot.slane %v5194, %v5233
    %v5235 = vadd.f32 %v5199, %v5234
    %v5236 = vadd.f32 %v5200, %v5234
    %v5237 = vadd.f32 %v5201, %v5234
    %v5238 = vadd.f32 %v5202, %v5234
    %v5239 = vadd.f32 %v5203, %v5234
    %v5240 = vadd.f32 %v5204, %v5234
    %v5241 = vadd.f32 %v5205, %v5234
    %v5242 = vadd.f32 %v5206, %v5234
    %v5243 = vadd.f32 %v5207, %v5234
    %v5244 = vadd.f32 %v5208, %v5234
    %v5245 = vadd.f32 %v5209, %v5234
    %v5246 = vadd.f32 %v5210, %v5234
    %v5247 = vadd.f32 %v5211, %v5234
    %v5248 = vadd.f32 %v5212, %v5234
    %v5249 = vadd.f32 %v5213, %v5234
    %v5250 = vadd.f32 %v5214, %v5234
    %v5251 = vadd.f32 %v5215, %v5234
    %v5252 = vadd.f32 %v5216, %v5234
    %v5253 = vadd.f32 %v5217, %v5234
    %v5254 = vadd.f32 %v5218, %v5234
    %v5255 = vadd.f32 %v5219, %v5234
    %v5256 = vadd.f32 %v5220, %v5234
    %v5257 = vadd.f32 %v5221, %v5234
    %v5258 = vadd.f32 %v5222, %v5234
    %v5259 = vadd.f32 %v5223, %v5234
    %v5260 = vadd.f32 %v5224, %v5234
    %v5261 = vadd.f32 %v5225, %v5234
    %v5262 = vadd.f32 %v5226, %v5234
    %v5263 = vadd.f32 %v5227, %v5234
    %v5264 = vadd.f32 %v5228, %v5234
    %v5265 = vadd.f32 %v5229, %v5234
    %v5266 = vadd.f32 %v5230, %v5234
    %v5267 = vmax.f32 %v5235, 0.0
    %v5268 = vmax.f32 %v5236, 0.0
    %v5269 = vmax.f32 %v5237, 0.0
    %v5270 = vmax.f32 %v5238, 0.0
    %v5271 = vmax.f32 %v5239, 0.0
    %v5272 = vmax.f32 %v5240, 0.0
    %v5273 = vmax.f32 %v5241, 0.0
    %v5274 = vmax.f32 %v5242, 0.0
    %v5275 = vmax.f32 %v5243, 0.0
    %v5276 = vmax.f32 %v5244, 0.0
    %v5277 = vmax.f32 %v5245, 0.0
    %v5278 = vmax.f32 %v5246, 0.0
    %v5279 = vmax.f32 %v5247, 0.0
    %v5280 = vmax.f32 %v5248, 0.0
    %v5281 = vmax.f32 %v5249, 0.0
    %v5282 = vmax.f32 %v5250, 0.0
    %v5283 = vmax.f32 %v5251, 0.0
    %v5284 = vmax.f32 %v5252, 0.0
    %v5285 = vmax.f32 %v5253, 0.0
    %v5286 = vmax.f32 %v5254, 0.0
    %v5287 = vmax.f32 %v5255, 0.0
    %v5288 = vmax.f32 %v5256, 0.0
    %v5289 = vmax.f32 %v5257, 0.0
    %v5290 = vmax.f32 %v5258, 0.0
    %v5291 = vmax.f32 %v5259, 0.0
    %v5292 = vmax.f32 %v5260, 0.0
    %v5293 = vmax.f32 %v5261, 0.0
    %v5294 = vmax.f32 %v5262, 0.0
    %v5295 = vmax.f32 %v5263, 0.0
    %v5296 = vmax.f32 %v5264, 0.0
    %v5297 = vmax.f32 %v5265, 0.0
    %v5298 = vmax.f32 %v5266, 0.0
    %v5299 = vpack.c.bf16 %v5268, %v5267
    %v5300 = vpack.c.bf16 %v5270, %v5269
    %v5301 = vpack.c.bf16 %v5272, %v5271
    %v5302 = vpack.c.bf16 %v5274, %v5273
    %v5303 = vpack.c.bf16 %v5276, %v5275
    %v5304 = vpack.c.bf16 %v5278, %v5277
    %v5305 = vpack.c.bf16 %v5280, %v5279
    %v5306 = vpack.c.bf16 %v5282, %v5281
    %v5307 = vpack.c.bf16 %v5284, %v5283
    %v5308 = vpack.c.bf16 %v5286, %v5285
    %v5309 = vpack.c.bf16 %v5288, %v5287
    %v5310 = vpack.c.bf16 %v5290, %v5289
    %v5311 = vpack.c.bf16 %v5292, %v5291
    %v5312 = vpack.c.bf16 %v5294, %v5293
    %v5313 = vpack.c.bf16 %v5296, %v5295
    %v5314 = vpack.c.bf16 %v5298, %v5297
    %v5315 = vld [vmem:[#allocation8] sm:$0xf]
    %v5316 = vld [vmem:[#allocation8 + $0x4] sm:$0xf]
    %v5317 = vld [vmem:[#allocation8 + $0x8] sm:$0xf]
    %v5318 = vld [vmem:[#allocation8 + $0xc] sm:$0xf]
    %v5319 = vld [vmem:[#allocation8 + $0x10] sm:$0xf]
    %v5320 = vld [vmem:[#allocation8 + $0x14] sm:$0xf]
    %v5321 = vld [vmem:[#allocation8 + $0x18] sm:$0xf]
    %v5322 = vld [vmem:[#allocation8 + $0x1c] sm:$0xf]
    %v5323 = vld [vmem:[#allocation8 + $0x20] sm:$0xf]
    %v5324 = vld [vmem:[#allocation8 + $0x24] sm:$0xf]
    %v5325 = vld [vmem:[#allocation8 + $0x28] sm:$0xf]
    %v5326 = vld [vmem:[#allocation8 + $0x2c] sm:$0xf]
    %v5327 = vld [vmem:[#allocation8 + $0x30] sm:$0xf]
    %v5328 = vld [vmem:[#allocation8 + $0x34] sm:$0xf]
    %v5329 = vld [vmem:[#allocation8 + $0x38] sm:$0xf]
    %v5330 = vld [vmem:[#allocation8 + $0x3c] sm:$0xf]
    %v5331 = vld [vmem:[%s7 + $0x20] sm:$0x1]
    %v5332 = vlaneseq
    %v5333 = vshrl.u32 %v5332, 7
    %v5334 = vsub.s32 0, %v5333
    %v5335 = vrot.slane %v5331, %v5334
    %v5352 = vunpack.c.l.b16 %v5315
    %v5353 = vunpack.c.l.b16 %v5316
    %v5354 = vunpack.c.l.b16 %v5317
    %v5355 = vunpack.c.l.b16 %v5318
    %v5356 = vunpack.c.l.b16 %v5319
    %v5357 = vunpack.c.l.b16 %v5320
    %v5358 = vunpack.c.l.b16 %v5321
    %v5359 = vunpack.c.l.b16 %v5322
    %v5360 = vunpack.c.l.b16 %v5323
    %v5361 = vunpack.c.l.b16 %v5324
    %v5362 = vunpack.c.l.b16 %v5325
    %v5363 = vunpack.c.l.b16 %v5326
    %v5364 = vunpack.c.l.b16 %v5327
    %v5365 = vunpack.c.l.b16 %v5328
    %v5366 = vunpack.c.l.b16 %v5329
    %v5367 = vunpack.c.l.b16 %v5330
    %v5368 = vpack.c.b16 %v5353, %v5352
    %v5369 = vpack.c.b16 %v5355, %v5354
    %v5370 = vpack.c.b16 %v5357, %v5356
    %v5371 = vpack.c.b16 %v5359, %v5358
    %v5372 = vpack.c.b16 %v5361, %v5360
    %v5373 = vpack.c.b16 %v5363, %v5362
    %v5374 = vpack.c.b16 %v5365, %v5364
    %v5375 = vpack.c.b16 %v5367, %v5366
    %5384 = vmatprep.subr.bf16.mxu0 0
    %5385 = vmatpush1.bf16.msra.mxu0 %v5368
    %5386 = vmatprep.subr.bf16.mxu0 0
    %5387 = vmatpush1.bf16.msra.mxu0 %v5369
    %5388 = vmatprep.subr.bf16.mxu0 0
    %5389 = vmatpush1.bf16.msra.mxu0 %v5370
    %5390 = vmatprep.subr.bf16.mxu0 0
    %5391 = vmatpush1.bf16.msra.mxu0 %v5371
    %5392 = vmatprep.subr.bf16.mxu0 0
    %5393 = vmatpush1.bf16.msra.mxu0 %v5372
    %5394 = vmatprep.subr.bf16.mxu0 0
    %5395 = vmatpush1.bf16.msra.mxu0 %v5373
    %5396 = vmatprep.subr.bf16.mxu0 0
    %5397 = vmatpush1.bf16.msra.mxu0 %v5374
    %5398 = vmatprep.subr.bf16.mxu0 0
    %5399 = vmatpush1.bf16.msra.mxu0 %v5375
    %5400 = vmatprep.subr.bf16.mxu0 0
    %5401 = vmatpush1.bf16.msra.mxu0 0
    %5402 = vmatprep.subr.bf16.mxu0 0
    %5403 = vmatpush1.bf16.msra.mxu0 0
    %5404 = vmatprep.subr.bf16.mxu0 0
    %5405 = vmatpush1.bf16.msra.mxu0 0
    %5406 = vmatprep.subr.bf16.mxu0 0
    %5407 = vmatpush1.bf16.msra.mxu0 0
    %5408 = vmatprep.subr.bf16.mxu0 0
    %5409 = vmatpush1.bf16.msra.mxu0 0
    %5410 = vmatprep.subr.bf16.mxu0 0
    %5411 = vmatpush1.bf16.msra.mxu0 0
    %5412 = vmatprep.subr.bf16.mxu0 0
    %5413 = vmatpush1.bf16.msra.mxu0 0
    %5414 = vmatprep.subr.bf16.mxu0 0
    %5415 = vmatpush1.bf16.msra.mxu0 0
    %5416 = vmatprep.mubr.bf16.mxu0 0
    %5417 = vmatmul.mubr.bf16.gmra.mrb[0].mxu0 %v5299
    %v5418 = vpop.f32.mrb[0].mxu0
    %v5419 = vadd.f32 %v5335, %v5418
    %v5420 = vpop.f32.mrb[0].mxu0
    %v5421 = vpop.f32.mrb[0].mxu0
    %v5422 = vadd.f32 %v5335, %v5421
    %v5423 = vpop.f32.mrb[0].mxu0
    %5424 = vmatprep.mubr.bf16.mxu0 0
    %5425 = vmatmul.mubr.bf16.gmra.mrb[0].mxu0 %v5300
    %v5426 = vpop.f32.mrb[0].mxu0
    %v5427 = vadd.f32 %v5335, %v5426
    %v5428 = vpop.f32.mrb[0].mxu0
    %v5429 = vpop.f32.mrb[0].mxu0
    %v5430 = vadd.f32 %v5335, %v5429
    %v5431 = vpop.f32.mrb[0].mxu0
    %5432 = vmatprep.mubr.bf16.mxu0 0
    %5433 = vmatmul.mubr.bf16.gmra.mrb[0].mxu0 %v5301
    %v5434 = vpop.f32.mrb[0].mxu0
    %v5435 = vadd.f32 %v5335, %v5434
    %v5436 = vpop.f32.mrb[0].mxu0
    %v5437 = vpop.f32.mrb[0].mxu0
    %v5438 = vadd.f32 %v5335, %v5437
    %v5439 = vpop.f32.mrb[0].mxu0
    %5440 = vmatprep.mubr.bf16.mxu0 0
    %5441 = vmatmul.mubr.bf16.gmra.mrb[0].mxu0 %v5302
    %v5442 = vpop.f32.mrb[0].mxu0
    %v5443 = vadd.f32 %v5335, %v5442
    %v5444 = vpop.f32.mrb[0].mxu0
    %v5445 = vpop.f32.mrb[0].mxu0
    %v5446 = vadd.f32 %v5335, %v5445
    %v5447 = vpop.f32.mrb[0].mxu0
    %5448 = vmatprep.mubr.bf16.mxu0 0
    %5449 = vmatmul.mubr.bf16.gmra.mrb[0].mxu0 %v5303
    %v5450 = vpop.f32.mrb[0].mxu0
    %v5451 = vadd.f32 %v5335, %v5450
    %v5452 = vpop.f32.mrb[0].mxu0
    %v5453 = vpop.f32.mrb[0].mxu0
    %v5454 = vadd.f32 %v5335, %v5453
    %v5455 = vpop.f32.mrb[0].mxu0
    %5456 = vmatprep.mubr.bf16.mxu0 0
    %5457 = vmatmul.mubr.bf16.gmra.mrb[0].mxu0 %v5304
    %v5458 = vpop.f32.mrb[0].mxu0
    %v5459 = vadd.f32 %v5335, %v5458
    %v5460 = vpop.f32.mrb[0].mxu0
    %v5461 = vpop.f32.mrb[0].mxu0
    %v5462 = vadd.f32 %v5335, %v5461
    %v5463 = vpop.f32.mrb[0].mxu0
    %5464 = vmatprep.mubr.bf16.mxu0 0
    %5465 = vmatmul.mubr.bf16.gmra.mrb[0].mxu0 %v5305
    %v5466 = vpop.f32.mrb[0].mxu0
    %v5467 = vadd.f32 %v5335, %v5466
    %v5468 = vpop.f32.mrb[0].mxu0
    %v5469 = vpop.f32.mrb[0].mxu0
    %v5470 = vadd.f32 %v5335, %v5469
    %v5471 = vpop.f32.mrb[0].mxu0
    %5472 = vmatprep.mubr.bf16.mxu0 0
    %5473 = vmatmul.mubr.bf16.gmra.mrb[0].mxu0 %v5306
    %v5474 = vpop.f32.mrb[0].mxu0
    %v5475 = vadd.f32 %v5335, %v5474
    %v5476 = vpop.f32.mrb[0].mxu0
    %v5477 = vpop.f32.mrb[0].mxu0
    %v5478 = vadd.f32 %v5335, %v5477
    %v5479 = vpop.f32.mrb[0].mxu0
    %5480 = vmatprep.mubr.bf16.mxu0 0
    %5481 = vmatmul.mubr.bf16.gmra.mrb[0].mxu0 %v5307
    %v5482 = vpop.f32.mrb[0].mxu0
    %v5483 = vadd.f32 %v5335, %v5482
    %v5484 = vpop.f32.mrb[0].mxu0
    %v5485 = vpop.f32.mrb[0].mxu0
    %v5486 = vadd.f32 %v5335, %v5485
    %v5487 = vpop.f32.mrb[0].mxu0
    %5488 = vmatprep.mubr.bf16.mxu0 0
    %5489 = vmatmul.mubr.bf16.gmra.mrb[0].mxu0 %v5308
    %v5490 = vpop.f32.mrb[0].mxu0
    %v5491 = vadd.f32 %v5335, %v5490
    %v5492 = vpop.f32.mrb[0].mxu0
    %v5493 = vpop.f32.mrb[0].mxu0
    %v5494 = vadd.f32 %v5335, %v5493
    %v5495 = vpop.f32.mrb[0].mxu0
    %5496 = vmatprep.mubr.bf16.mxu0 0
    %5497 = vmatmul.mubr.bf16.gmra.mrb[0].mxu0 %v5309
    %v5498 = vpop.f32.mrb[0].mxu0
    %v5499 = vadd.f32 %v5335, %v5498
    %v5500 = vpop.f32.mrb[0].mxu0
    %v5501 = vpop.f32.mrb[0].mxu0
    %v5502 = vadd.f32 %v5335, %v5501
    %v5503 = vpop.f32.mrb[0].mxu0
    %5504 = vmatprep.mubr.bf16.mxu0 0
    %5505 = vmatmul.mubr.bf16.gmra.mrb[0].mxu0 %v5310
    %v5506 = vpop.f32.mrb[0].mxu0
    %v5507 = vadd.f32 %v5335, %v5506
    %v5508 = vpop.f32.mrb[0].mxu0
    %v5509 = vpop.f32.mrb[0].mxu0
    %v5510 = vadd.f32 %v5335, %v5509
    %v5511 = vpop.f32.mrb[0].mxu0
    %5512 = vmatprep.mubr.bf16.mxu0 0
    %5513 = vmatmul.mubr.bf16.gmra.mrb[0].mxu0 %v5311
    %v5514 = vpop.f32.mrb[0].mxu0
    %v5515 = vadd.f32 %v5335, %v5514
    %v5516 = vpop.f32.mrb[0].mxu0
    %v5517 = vpop.f32.mrb[0].mxu0
    %v5518 = vadd.f32 %v5335, %v5517
    %v5519 = vpop.f32.mrb[0].mxu0
    %5520 = vmatprep.mubr.bf16.mxu0 0
    %5521 = vmatmul.mubr.bf16.gmra.mrb[0].mxu0 %v5312
    %v5522 = vpop.f32.mrb[0].mxu0
    %v5523 = vadd.f32 %v5335, %v5522
    %v5524 = vpop.f32.mrb[0].mxu0
    %v5525 = vpop.f32.mrb[0].mxu0
    %v5526 = vadd.f32 %v5335, %v5525
    %v5527 = vpop.f32.mrb[0].mxu0
    %5528 = vmatprep.mubr.bf16.mxu0 0
    %5529 = vmatmul.mubr.bf16.gmra.mrb[0].mxu0 %v5313
    %v5530 = vpop.f32.mrb[0].mxu0
    %v5531 = vadd.f32 %v5335, %v5530
    %v5532 = vpop.f32.mrb[0].mxu0
    %v5533 = vpop.f32.mrb[0].mxu0
    %v5534 = vadd.f32 %v5335, %v5533
    %v5535 = vpop.f32.mrb[0].mxu0
    %5536 = vmatprep.mubr.bf16.mxu0 0
    %5537 = vmatmul.mubr.bf16.gmra.mrb[0].mxu0 %v5314
    %v5538 = vpop.f32.mrb[0].mxu0
    %v5539 = vadd.f32 %v5335, %v5538
    %v5540 = vpop.f32.mrb[0].mxu0
    %v5541 = vpop.f32.mrb[0].mxu0
    %v5542 = vadd.f32 %v5335, %v5541
    %v5543 = vpop.f32.mrb[0].mxu0
    %5544 = vdwg.mxu0
    %5545 = vadd.xlane.f32.xlu0 %v5419
    %v5546 = vpop.xlane.xlu0 %5545
    %5547 = vadd.xlane.f32.xlu0 %v5422
    %v5548 = vpop.xlane.xlu0 %5547
    %5549 = vadd.xlane.f32.xlu0 %v5427
    %v5550 = vpop.xlane.xlu0 %5549
    %5551 = vadd.xlane.f32.xlu0 %v5430
    %v5552 = vpop.xlane.xlu0 %5551
    %5553 = vadd.xlane.f32.xlu0 %v5435
    %v5554 = vpop.xlane.xlu0 %5553
    %5555 = vadd.xlane.f32.xlu0 %v5438
    %v5556 = vpop.xlane.xlu0 %5555
    %5557 = vadd.xlane.f32.xlu0 %v5443
    %v5558 = vpop.xlane.xlu0 %5557
    %5559 = vadd.xlane.f32.xlu0 %v5446
    %v5560 = vpop.xlane.xlu0 %5559
    %5561 = vadd.xlane.f32.xlu0 %v5451
    %v5562 = vpop.xlane.xlu0 %5561
    %5563 = vadd.xlane.f32.xlu0 %v5454
    %v5564 = vpop.xlane.xlu0 %5563
    %5565 = vadd.xlane.f32.xlu0 %v5459
    %v5566 = vpop.xlane.xlu0 %5565
    %5567 = vadd.xlane.f32.xlu0 %v5462
    %v5568 = vpop.xlane.xlu0 %5567
    %5569 = vadd.xlane.f32.xlu0 %v5467
    %v5570 = vpop.xlane.xlu0 %5569
    %5571 = vadd.xlane.f32.xlu0 %v5470
    %v5572 = vpop.xlane.xlu0 %5571
    %5573 = vadd.xlane.f32.xlu0 %v5475
    %v5574 = vpop.xlane.xlu0 %5573
    %5575 = vadd.xlane.f32.xlu0 %v5478
    %v5576 = vpop.xlane.xlu0 %5575
    %5577 = vadd.xlane.f32.xlu0 %v5483
    %v5578 = vpop.xlane.xlu0 %5577
    %5579 = vadd.xlane.f32.xlu0 %v5486
    %v5580 = vpop.xlane.xlu0 %5579
    %5581 = vadd.xlane.f32.xlu0 %v5491
    %v5582 = vpop.xlane.xlu0 %5581
    %5583 = vadd.xlane.f32.xlu0 %v5494
    %v5584 = vpop.xlane.xlu0 %5583
    %5585 = vadd.xlane.f32.xlu0 %v5499
    %v5586 = vpop.xlane.xlu0 %5585
    %5587 = vadd.xlane.f32.xlu0 %v5502
    %v5588 = vpop.xlane.xlu0 %5587
    %5589 = vadd.xlane.f32.xlu0 %v5507
    %v5590 = vpop.xlane.xlu0 %5589
    %5591 = vadd.xlane.f32.xlu0 %v5510
    %v5592 = vpop.xlane.xlu0 %5591
    %5593 = vadd.xlane.f32.xlu0 %v5515
    %v5594 = vpop.xlane.xlu0 %5593
    %5595 = vadd.xlane.f32.xlu0 %v5518
    %v5596 = vpop.xlane.xlu0 %5595
    %5597 = vadd.xlane.f32.xlu0 %v5523
    %v5598 = vpop.xlane.xlu0 %5597
    %5599 = vadd.xlane.f32.xlu0 %v5526
    %v5600 = vpop.xlane.xlu0 %5599
    %5601 = vadd.xlane.f32.xlu0 %v5531
    %v5602 = vpop.xlane.xlu0 %5601
    %5603 = vadd.xlane.f32.xlu0 %v5534
    %v5604 = vpop.xlane.xlu0 %5603
    %5605 = vadd.xlane.f32.xlu0 %v5539
    %v5606 = vpop.xlane.xlu0 %5605
    %5607 = vadd.xlane.f32.xlu0 %v5542
    %v5608 = vpop.xlane.xlu0 %5607
    %v5609 = vmul.f32 %v5546, 0.03125
    %v5610 = vmul.f32 %v5548, 0.03125
    %v5611 = vmul.f32 %v5550, 0.03125
    %v5612 = vmul.f32 %v5552, 0.03125
    %v5613 = vmul.f32 %v5554, 0.03125
    %v5614 = vmul.f32 %v5556, 0.03125
    %v5615 = vmul.f32 %v5558, 0.03125
    %v5616 = vmul.f32 %v5560, 0.03125
    %v5617 = vmul.f32 %v5562, 0.03125
    %v5618 = vmul.f32 %v5564, 0.03125
    %v5619 = vmul.f32 %v5566, 0.03125
    %v5620 = vmul.f32 %v5568, 0.03125
    %v5621 = vmul.f32 %v5570, 0.03125
    %v5622 = vmul.f32 %v5572, 0.03125
    %v5623 = vmul.f32 %v5574, 0.03125
    %v5624 = vmul.f32 %v5576, 0.03125
    %v5625 = vmul.f32 %v5578, 0.03125
    %v5626 = vmul.f32 %v5580, 0.03125
    %v5627 = vmul.f32 %v5582, 0.03125
    %v5628 = vmul.f32 %v5584, 0.03125
    %v5629 = vmul.f32 %v5586, 0.03125
    %v5630 = vmul.f32 %v5588, 0.03125
    %v5631 = vmul.f32 %v5590, 0.03125
    %v5632 = vmul.f32 %v5592, 0.03125
    %v5633 = vmul.f32 %v5594, 0.03125
    %v5634 = vmul.f32 %v5596, 0.03125
    %v5635 = vmul.f32 %v5598, 0.03125
    %v5636 = vmul.f32 %v5600, 0.03125
    %v5637 = vmul.f32 %v5602, 0.03125
    %v5638 = vmul.f32 %v5604, 0.03125
    %v5639 = vmul.f32 %v5606, 0.03125
    %v5640 = vmul.f32 %v5608, 0.03125
    %v5641 = vmul.f32 %v5419, %v5419
    %v5642 = vmul.f32 %v5422, %v5422
    %v5643 = vmul.f32 %v5427, %v5427
    %v5644 = vmul.f32 %v5430, %v5430
    %v5645 = vmul.f32 %v5435, %v5435
    %v5646 = vmul.f32 %v5438, %v5438
    %v5647 = vmul.f32 %v5443, %v5443
    %v5648 = vmul.f32 %v5446, %v5446
    %v5649 = vmul.f32 %v5451, %v5451
    %v5650 = vmul.f32 %v5454, %v5454
    %v5651 = vmul.f32 %v5459, %v5459
    %v5652 = vmul.f32 %v5462, %v5462
    %v5653 = vmul.f32 %v5467, %v5467
    %v5654 = vmul.f32 %v5470, %v5470
    %v5655 = vmul.f32 %v5475, %v5475
    %v5656 = vmul.f32 %v5478, %v5478
    %v5657 = vmul.f32 %v5483, %v5483
    %v5658 = vmul.f32 %v5486, %v5486
    %v5659 = vmul.f32 %v5491, %v5491
    %v5660 = vmul.f32 %v5494, %v5494
    %v5661 = vmul.f32 %v5499, %v5499
    %v5662 = vmul.f32 %v5502, %v5502
    %v5663 = vmul.f32 %v5507, %v5507
    %v5664 = vmul.f32 %v5510, %v5510
    %v5665 = vmul.f32 %v5515, %v5515
    %v5666 = vmul.f32 %v5518, %v5518
    %v5667 = vmul.f32 %v5523, %v5523
    %v5668 = vmul.f32 %v5526, %v5526
    %v5669 = vmul.f32 %v5531, %v5531
    %v5670 = vmul.f32 %v5534, %v5534
    %v5671 = vmul.f32 %v5539, %v5539
    %v5672 = vmul.f32 %v5542, %v5542
    %5673 = vadd.xlane.f32.xlu0 %v5641
    %v5674 = vpop.xlane.xlu0 %5673
    %5675 = vadd.xlane.f32.xlu0 %v5642
    %v5676 = vpop.xlane.xlu0 %5675
    %5677 = vadd.xlane.f32.xlu0 %v5643
    %v5678 = vpop.xlane.xlu0 %5677
    %5679 = vadd.xlane.f32.xlu0 %v5644
    %v5680 = vpop.xlane.xlu0 %5679
    %5681 = vadd.xlane.f32.xlu0 %v5645
    %v5682 = vpop.xlane.xlu0 %5681
    %5683 = vadd.xlane.f32.xlu0 %v5646
    %v5684 = vpop.xlane.xlu0 %5683
    %5685 = vadd.xlane.f32.xlu0 %v5647
    %v5686 = vpop.xlane.xlu0 %5685
    %5687 = vadd.xlane.f32.xlu0 %v5648
    %v5688 = vpop.xlane.xlu0 %5687
    %5689 = vadd.xlane.f32.xlu0 %v5649
    %v5690 = vpop.xlane.xlu0 %5689
    %5691 = vadd.xlane.f32.xlu0 %v5650
    %v5692 = vpop.xlane.xlu0 %5691
    %5693 = vadd.xlane.f32.xlu0 %v5651
    %v5694 = vpop.xlane.xlu0 %5693
    %5695 = vadd.xlane.f32.xlu0 %v5652
    %v5696 = vpop.xlane.xlu0 %5695
    %5697 = vadd.xlane.f32.xlu0 %v5653
    %v5698 = vpop.xlane.xlu0 %5697
    %5699 = vadd.xlane.f32.xlu0 %v5654
    %v5700 = vpop.xlane.xlu0 %5699
    %5701 = vadd.xlane.f32.xlu0 %v5655
    %v5702 = vpop.xlane.xlu0 %5701
    %5703 = vadd.xlane.f32.xlu0 %v5656
    %v5704 = vpop.xlane.xlu0 %5703
    %5705 = vadd.xlane.f32.xlu0 %v5657
    %v5706 = vpop.xlane.xlu0 %5705
    %5707 = vadd.xlane.f32.xlu0 %v5658
    %v5708 = vpop.xlane.xlu0 %5707
    %5709 = vadd.xlane.f32.xlu0 %v5659
    %v5710 = vpop.xlane.xlu0 %5709
    %5711 = vadd.xlane.f32.xlu0 %v5660
    %v5712 = vpop.xlane.xlu0 %5711
    %5713 = vadd.xlane.f32.xlu0 %v5661
    %v5714 = vpop.xlane.xlu0 %5713
    %5715 = vadd.xlane.f32.xlu0 %v5662
    %v5716 = vpop.xlane.xlu0 %5715
    %5717 = vadd.xlane.f32.xlu0 %v5663
    %v5718 = vpop.xlane.xlu0 %5717
    %5719 = vadd.xlane.f32.xlu0 %v5664
    %v5720 = vpop.xlane.xlu0 %5719
    %5721 = vadd.xlane.f32.xlu0 %v5665
    %v5722 = vpop.xlane.xlu0 %5721
    %5723 = vadd.xlane.f32.xlu0 %v5666
    %v5724 = vpop.xlane.xlu0 %5723
    %5725 = vadd.xlane.f32.xlu0 %v5667
    %v5726 = vpop.xlane.xlu0 %5725
    %5727 = vadd.xlane.f32.xlu0 %v5668
    %v5728 = vpop.xlane.xlu0 %5727
    %5729 = vadd.xlane.f32.xlu0 %v5669
    %v5730 = vpop.xlane.xlu0 %5729
    %5731 = vadd.xlane.f32.xlu0 %v5670
    %v5732 = vpop.xlane.xlu0 %5731
    %5733 = vadd.xlane.f32.xlu0 %v5671
    %v5734 = vpop.xlane.xlu0 %5733
    %5735 = vadd.xlane.f32.xlu0 %v5672
    %v5736 = vpop.xlane.xlu0 %5735
    %v5737 = vmul.f32 %v5674, 0.03125
    %v5738 = vmul.f32 %v5676, 0.03125
    %v5739 = vmul.f32 %v5678, 0.03125
    %v5740 = vmul.f32 %v5680, 0.03125
    %v5741 = vmul.f32 %v5682, 0.03125
    %v5742 = vmul.f32 %v5684, 0.03125
    %v5743 = vmul.f32 %v5686, 0.03125
    %v5744 = vmul.f32 %v5688, 0.03125
    %v5745 = vmul.f32 %v5690, 0.03125
    %v5746 = vmul.f32 %v5692, 0.03125
    %v5747 = vmul.f32 %v5694, 0.03125
    %v5748 = vmul.f32 %v5696, 0.03125
    %v5749 = vmul.f32 %v5698, 0.03125
    %v5750 = vmul.f32 %v5700, 0.03125
    %v5751 = vmul.f32 %v5702, 0.03125
    %v5752 = vmul.f32 %v5704, 0.03125
    %v5753 = vmul.f32 %v5706, 0.03125
    %v5754 = vmul.f32 %v5708, 0.03125
    %v5755 = vmul.f32 %v5710, 0.03125
    %v5756 = vmul.f32 %v5712, 0.03125
    %v5757 = vmul.f32 %v5714, 0.03125
    %v5758 = vmul.f32 %v5716, 0.03125
    %v5759 = vmul.f32 %v5718, 0.03125
    %v5760 = vmul.f32 %v5720, 0.03125
    %v5761 = vmul.f32 %v5722, 0.03125
    %v5762 = vmul.f32 %v5724, 0.03125
    %v5763 = vmul.f32 %v5726, 0.03125
    %v5764 = vmul.f32 %v5728, 0.03125
    %v5765 = vmul.f32 %v5730, 0.03125
    %v5766 = vmul.f32 %v5732, 0.03125
    %v5767 = vmul.f32 %v5734, 0.03125
    %v5768 = vmul.f32 %v5736, 0.03125
    %v5769 = vmul.f32 %v5609, %v5609
    %v5770 = vmul.f32 %v5610, %v5610
    %v5771 = vmul.f32 %v5611, %v5611
    %v5772 = vmul.f32 %v5612, %v5612
    %v5773 = vmul.f32 %v5613, %v5613
    %v5774 = vmul.f32 %v5614, %v5614
    %v5775 = vmul.f32 %v5615, %v5615
    %v5776 = vmul.f32 %v5616, %v5616
    %v5777 = vmul.f32 %v5617, %v5617
    %v5778 = vmul.f32 %v5618, %v5618
    %v5779 = vmul.f32 %v5619, %v5619
    %v5780 = vmul.f32 %v5620, %v5620
    %v5781 = vmul.f32 %v5621, %v5621
    %v5782 = vmul.f32 %v5622, %v5622
    %v5783 = vmul.f32 %v5623, %v5623
    %v5784 = vmul.f32 %v5624, %v5624
    %v5785 = vmul.f32 %v5625, %v5625
    %v5786 = vmul.f32 %v5626, %v5626
    %v5787 = vmul.f32 %v5627, %v5627
    %v5788 = vmul.f32 %v5628, %v5628
    %v5789 = vmul.f32 %v5629, %v5629
    %v5790 = vmul.f32 %v5630, %v5630
    %v5791 = vmul.f32 %v5631, %v5631
    %v5792 = vmul.f32 %v5632, %v5632
    %v5793 = vmul.f32 %v5633, %v5633
    %v5794 = vmul.f32 %v5634, %v5634
    %v5795 = vmul.f32 %v5635, %v5635
    %v5796 = vmul.f32 %v5636, %v5636
    %v5797 = vmul.f32 %v5637, %v5637
    %v5798 = vmul.f32 %v5638, %v5638
    %v5799 = vmul.f32 %v5639, %v5639
    %v5800 = vmul.f32 %v5640, %v5640
    %v5801 = vsub.f32 %v5737, %v5769
    %v5802 = vsub.f32 %v5738, %v5770
    %v5803 = vsub.f32 %v5739, %v5771
    %v5804 = vsub.f32 %v5740, %v5772
    %v5805 = vsub.f32 %v5741, %v5773
    %v5806 = vsub.f32 %v5742, %v5774
    %v5807 = vsub.f32 %v5743, %v5775
    %v5808 = vsub.f32 %v5744, %v5776
    %v5809 = vsub.f32 %v5745, %v5777
    %v5810 = vsub.f32 %v5746, %v5778
    %v5811 = vsub.f32 %v5747, %v5779
    %v5812 = vsub.f32 %v5748, %v5780
    %v5813 = vsub.f32 %v5749, %v5781
    %v5814 = vsub.f32 %v5750, %v5782
    %v5815 = vsub.f32 %v5751, %v5783
    %v5816 = vsub.f32 %v5752, %v5784
    %v5817 = vsub.f32 %v5753, %v5785
    %v5818 = vsub.f32 %v5754, %v5786
    %v5819 = vsub.f32 %v5755, %v5787
    %v5820 = vsub.f32 %v5756, %v5788
    %v5821 = vsub.f32 %v5757, %v5789
    %v5822 = vsub.f32 %v5758, %v5790
    %v5823 = vsub.f32 %v5759, %v5791
    %v5824 = vsub.f32 %v5760, %v5792
    %v5825 = vsub.f32 %v5761, %v5793
    %v5826 = vsub.f32 %v5762, %v5794
    %v5827 = vsub.f32 %v5763, %v5795
    %v5828 = vsub.f32 %v5764, %v5796
    %v5829 = vsub.f32 %v5765, %v5797
    %v5830 = vsub.f32 %v5766, %v5798
    %v5831 = vsub.f32 %v5767, %v5799
    %v5832 = vsub.f32 %v5768, %v5800
    %v5833 = vadd.f32 %v5801, 1e-05
    %v5834 = vadd.f32 %v5802, 1e-05
    %v5835 = vadd.f32 %v5803, 1e-05
    %v5836 = vadd.f32 %v5804, 1e-05
    %v5837 = vadd.f32 %v5805, 1e-05
    %v5838 = vadd.f32 %v5806, 1e-05
    %v5839 = vadd.f32 %v5807, 1e-05
    %v5840 = vadd.f32 %v5808, 1e-05
    %v5841 = vadd.f32 %v5809, 1e-05
    %v5842 = vadd.f32 %v5810, 1e-05
    %v5843 = vadd.f32 %v5811, 1e-05
    %v5844 = vadd.f32 %v5812, 1e-05
    %v5845 = vadd.f32 %v5813, 1e-05
    %v5846 = vadd.f32 %v5814, 1e-05
    %v5847 = vadd.f32 %v5815, 1e-05
    %v5848 = vadd.f32 %v5816, 1e-05
    %v5849 = vadd.f32 %v5817, 1e-05
    %v5850 = vadd.f32 %v5818, 1e-05
    %v5851 = vadd.f32 %v5819, 1e-05
    %v5852 = vadd.f32 %v5820, 1e-05
    %v5853 = vadd.f32 %v5821, 1e-05
    %v5854 = vadd.f32 %v5822, 1e-05
    %v5855 = vadd.f32 %v5823, 1e-05
    %v5856 = vadd.f32 %v5824, 1e-05
    %v5857 = vadd.f32 %v5825, 1e-05
    %v5858 = vadd.f32 %v5826, 1e-05
    %v5859 = vadd.f32 %v5827, 1e-05
    %v5860 = vadd.f32 %v5828, 1e-05
    %v5861 = vadd.f32 %v5829, 1e-05
    %v5862 = vadd.f32 %v5830, 1e-05
    %v5863 = vadd.f32 %v5831, 1e-05
    %v5864 = vadd.f32 %v5832, 1e-05
    %v5865 = vrsqrt.pop %v5833
    %v5866 = vrsqrt.pop %v5834
    %v5867 = vrsqrt.pop %v5835
    %v5868 = vrsqrt.pop %v5836
    %v5869 = vrsqrt.pop %v5837
    %v5870 = vrsqrt.pop %v5838
    %v5871 = vrsqrt.pop %v5839
    %v5872 = vrsqrt.pop %v5840
    %v5873 = vrsqrt.pop %v5841
    %v5874 = vrsqrt.pop %v5842
    %v5875 = vrsqrt.pop %v5843
    %v5876 = vrsqrt.pop %v5844
    %v5877 = vrsqrt.pop %v5845
    %v5878 = vrsqrt.pop %v5846
    %v5879 = vrsqrt.pop %v5847
    %v5880 = vrsqrt.pop %v5848
    %v5881 = vrsqrt.pop %v5849
    %v5882 = vrsqrt.pop %v5850
    %v5883 = vrsqrt.pop %v5851
    %v5884 = vrsqrt.pop %v5852
    %v5885 = vrsqrt.pop %v5853
    %v5886 = vrsqrt.pop %v5854
    %v5887 = vrsqrt.pop %v5855
    %v5888 = vrsqrt.pop %v5856
    %v5889 = vrsqrt.pop %v5857
    %v5890 = vrsqrt.pop %v5858
    %v5891 = vrsqrt.pop %v5859
    %v5892 = vrsqrt.pop %v5860
    %v5893 = vrsqrt.pop %v5861
    %v5894 = vrsqrt.pop %v5862
    %v5895 = vrsqrt.pop %v5863
    %v5896 = vrsqrt.pop %v5864
    %v5897 = vsub.f32 %v5419, %v5609
    %v5898 = vsub.f32 %v5422, %v5610
    %v5899 = vsub.f32 %v5427, %v5611
    %v5900 = vsub.f32 %v5430, %v5612
    %v5901 = vsub.f32 %v5435, %v5613
    %v5902 = vsub.f32 %v5438, %v5614
    %v5903 = vsub.f32 %v5443, %v5615
    %v5904 = vsub.f32 %v5446, %v5616
    %v5905 = vsub.f32 %v5451, %v5617
    %v5906 = vsub.f32 %v5454, %v5618
    %v5907 = vsub.f32 %v5459, %v5619
    %v5908 = vsub.f32 %v5462, %v5620
    %v5909 = vsub.f32 %v5467, %v5621
    %v5910 = vsub.f32 %v5470, %v5622
    %v5911 = vsub.f32 %v5475, %v5623
    %v5912 = vsub.f32 %v5478, %v5624
    %v5913 = vsub.f32 %v5483, %v5625
    %v5914 = vsub.f32 %v5486, %v5626
    %v5915 = vsub.f32 %v5491, %v5627
    %v5916 = vsub.f32 %v5494, %v5628
    %v5917 = vsub.f32 %v5499, %v5629
    %v5918 = vsub.f32 %v5502, %v5630
    %v5919 = vsub.f32 %v5507, %v5631
    %v5920 = vsub.f32 %v5510, %v5632
    %v5921 = vsub.f32 %v5515, %v5633
    %v5922 = vsub.f32 %v5518, %v5634
    %v5923 = vsub.f32 %v5523, %v5635
    %v5924 = vsub.f32 %v5526, %v5636
    %v5925 = vsub.f32 %v5531, %v5637
    %v5926 = vsub.f32 %v5534, %v5638
    %v5927 = vsub.f32 %v5539, %v5639
    %v5928 = vsub.f32 %v5542, %v5640
    %v5929 = vmul.f32 %v5897, %v5865
    %v5930 = vmul.f32 %v5898, %v5866
    %v5931 = vmul.f32 %v5899, %v5867
    %v5932 = vmul.f32 %v5900, %v5868
    %v5933 = vmul.f32 %v5901, %v5869
    %v5934 = vmul.f32 %v5902, %v5870
    %v5935 = vmul.f32 %v5903, %v5871
    %v5936 = vmul.f32 %v5904, %v5872
    %v5937 = vmul.f32 %v5905, %v5873
    %v5938 = vmul.f32 %v5906, %v5874
    %v5939 = vmul.f32 %v5907, %v5875
    %v5940 = vmul.f32 %v5908, %v5876
    %v5941 = vmul.f32 %v5909, %v5877
    %v5942 = vmul.f32 %v5910, %v5878
    %v5943 = vmul.f32 %v5911, %v5879
    %v5944 = vmul.f32 %v5912, %v5880
    %v5945 = vmul.f32 %v5913, %v5881
    %v5946 = vmul.f32 %v5914, %v5882
    %v5947 = vmul.f32 %v5915, %v5883
    %v5948 = vmul.f32 %v5916, %v5884
    %v5949 = vmul.f32 %v5917, %v5885
    %v5950 = vmul.f32 %v5918, %v5886
    %v5951 = vmul.f32 %v5919, %v5887
    %v5952 = vmul.f32 %v5920, %v5888
    %v5953 = vmul.f32 %v5921, %v5889
    %v5954 = vmul.f32 %v5922, %v5890
    %v5955 = vmul.f32 %v5923, %v5891
    %v5956 = vmul.f32 %v5924, %v5892
    %v5957 = vmul.f32 %v5925, %v5893
    %v5958 = vmul.f32 %v5926, %v5894
    %v5959 = vmul.f32 %v5927, %v5895
    %v5960 = vmul.f32 %v5928, %v5896
    %v5961 = vld [vmem:[%s7 + $0x21] sm:$0x1]
    %v5962 = vld [vmem:[%s7 + $0x22] sm:$0x1]
    %v5963 = vlaneseq
    %v5964 = vshrl.u32 %v5963, 7
    %v5965 = vsub.s32 0, %v5964
    %v5966 = vrot.slane %v5961, %v5965
    %v5967 = vmul.f32 %v5929, %v5966
    %v5968 = vmul.f32 %v5930, %v5966
    %v5969 = vmul.f32 %v5931, %v5966
    %v5970 = vmul.f32 %v5932, %v5966
    %v5971 = vmul.f32 %v5933, %v5966
    %v5972 = vmul.f32 %v5934, %v5966
    %v5973 = vmul.f32 %v5935, %v5966
    %v5974 = vmul.f32 %v5936, %v5966
    %v5975 = vmul.f32 %v5937, %v5966
    %v5976 = vmul.f32 %v5938, %v5966
    %v5977 = vmul.f32 %v5939, %v5966
    %v5978 = vmul.f32 %v5940, %v5966
    %v5979 = vmul.f32 %v5941, %v5966
    %v5980 = vmul.f32 %v5942, %v5966
    %v5981 = vmul.f32 %v5943, %v5966
    %v5982 = vmul.f32 %v5944, %v5966
    %v5983 = vmul.f32 %v5945, %v5966
    %v5984 = vmul.f32 %v5946, %v5966
    %v5985 = vmul.f32 %v5947, %v5966
    %v5986 = vmul.f32 %v5948, %v5966
    %v5987 = vmul.f32 %v5949, %v5966
    %v5988 = vmul.f32 %v5950, %v5966
    %v5989 = vmul.f32 %v5951, %v5966
    %v5990 = vmul.f32 %v5952, %v5966
    %v5991 = vmul.f32 %v5953, %v5966
    %v5992 = vmul.f32 %v5954, %v5966
    %v5993 = vmul.f32 %v5955, %v5966
    %v5994 = vmul.f32 %v5956, %v5966
    %v5995 = vmul.f32 %v5957, %v5966
    %v5996 = vmul.f32 %v5958, %v5966
    %v5997 = vmul.f32 %v5959, %v5966
    %v5998 = vmul.f32 %v5960, %v5966
    %v5999 = vlaneseq
    %v6000 = vshrl.u32 %v5999, 7
    %v6001 = vsub.s32 0, %v6000
    %v6002 = vrot.slane %v5962, %v6001
    %v6003 = vadd.f32 %v5967, %v6002
    %v6004 = vadd.f32 %v5968, %v6002
    %v6005 = vadd.f32 %v5969, %v6002
    %v6006 = vadd.f32 %v5970, %v6002
    %v6007 = vadd.f32 %v5971, %v6002
    %v6008 = vadd.f32 %v5972, %v6002
    %v6009 = vadd.f32 %v5973, %v6002
    %v6010 = vadd.f32 %v5974, %v6002
    %v6011 = vadd.f32 %v5975, %v6002
    %v6012 = vadd.f32 %v5976, %v6002
    %v6013 = vadd.f32 %v5977, %v6002
    %v6014 = vadd.f32 %v5978, %v6002
    %v6015 = vadd.f32 %v5979, %v6002
    %v6016 = vadd.f32 %v5980, %v6002
    %v6017 = vadd.f32 %v5981, %v6002
    %v6018 = vadd.f32 %v5982, %v6002
    %v6019 = vadd.f32 %v5983, %v6002
    %v6020 = vadd.f32 %v5984, %v6002
    %v6021 = vadd.f32 %v5985, %v6002
    %v6022 = vadd.f32 %v5986, %v6002
    %v6023 = vadd.f32 %v5987, %v6002
    %v6024 = vadd.f32 %v5988, %v6002
    %v6025 = vadd.f32 %v5989, %v6002
    %v6026 = vadd.f32 %v5990, %v6002
    %v6027 = vadd.f32 %v5991, %v6002
    %v6028 = vadd.f32 %v5992, %v6002
    %v6029 = vadd.f32 %v5993, %v6002
    %v6030 = vadd.f32 %v5994, %v6002
    %v6031 = vadd.f32 %v5995, %v6002
    %v6032 = vadd.f32 %v5996, %v6002
    %v6033 = vadd.f32 %v5997, %v6002
    %v6034 = vadd.f32 %v5998, %v6002
    %v6035 = vmax.f32 %v6003, 0.0
    %v6036 = vmax.f32 %v6004, 0.0
    %v6037 = vmax.f32 %v6005, 0.0
    %v6038 = vmax.f32 %v6006, 0.0
    %v6039 = vmax.f32 %v6007, 0.0
    %v6040 = vmax.f32 %v6008, 0.0
    %v6041 = vmax.f32 %v6009, 0.0
    %v6042 = vmax.f32 %v6010, 0.0
    %v6043 = vmax.f32 %v6011, 0.0
    %v6044 = vmax.f32 %v6012, 0.0
    %v6045 = vmax.f32 %v6013, 0.0
    %v6046 = vmax.f32 %v6014, 0.0
    %v6047 = vmax.f32 %v6015, 0.0
    %v6048 = vmax.f32 %v6016, 0.0
    %v6049 = vmax.f32 %v6017, 0.0
    %v6050 = vmax.f32 %v6018, 0.0
    %v6051 = vmax.f32 %v6019, 0.0
    %v6052 = vmax.f32 %v6020, 0.0
    %v6053 = vmax.f32 %v6021, 0.0
    %v6054 = vmax.f32 %v6022, 0.0
    %v6055 = vmax.f32 %v6023, 0.0
    %v6056 = vmax.f32 %v6024, 0.0
    %v6057 = vmax.f32 %v6025, 0.0
    %v6058 = vmax.f32 %v6026, 0.0
    %v6059 = vmax.f32 %v6027, 0.0
    %v6060 = vmax.f32 %v6028, 0.0
    %v6061 = vmax.f32 %v6029, 0.0
    %v6062 = vmax.f32 %v6030, 0.0
    %v6063 = vmax.f32 %v6031, 0.0
    %v6064 = vmax.f32 %v6032, 0.0
    %v6065 = vmax.f32 %v6033, 0.0
    %v6066 = vmax.f32 %v6034, 0.0
    %v6067 = vpack.c.bf16 %v6036, %v6035
    %v6068 = vpack.c.bf16 %v6038, %v6037
    %v6069 = vpack.c.bf16 %v6040, %v6039
    %v6070 = vpack.c.bf16 %v6042, %v6041
    %v6071 = vpack.c.bf16 %v6044, %v6043
    %v6072 = vpack.c.bf16 %v6046, %v6045
    %v6073 = vpack.c.bf16 %v6048, %v6047
    %v6074 = vpack.c.bf16 %v6050, %v6049
    %v6075 = vpack.c.bf16 %v6052, %v6051
    %v6076 = vpack.c.bf16 %v6054, %v6053
    %v6077 = vpack.c.bf16 %v6056, %v6055
    %v6078 = vpack.c.bf16 %v6058, %v6057
    %v6079 = vpack.c.bf16 %v6060, %v6059
    %v6080 = vpack.c.bf16 %v6062, %v6061
    %v6081 = vpack.c.bf16 %v6064, %v6063
    %v6082 = vpack.c.bf16 %v6066, %v6065
    %v6083 = vld [vmem:[#allocation10] sm:$0xf]
    %v6084 = vld [vmem:[#allocation10 + $0x4] sm:$0xf]
    %v6085 = vld [vmem:[#allocation10 + $0x8] sm:$0xf]
    %v6086 = vld [vmem:[#allocation10 + $0xc] sm:$0xf]
    %v6087 = vld [vmem:[#allocation10 + $0x10] sm:$0xf]
    %v6088 = vld [vmem:[#allocation10 + $0x14] sm:$0xf]
    %v6089 = vld [vmem:[#allocation10 + $0x18] sm:$0xf]
    %v6090 = vld [vmem:[#allocation10 + $0x1c] sm:$0xf]
    %v6091 = vld [vmem:[#allocation10 + $0x20] sm:$0xf]
    %v6092 = vld [vmem:[#allocation10 + $0x24] sm:$0xf]
    %v6093 = vld [vmem:[#allocation10 + $0x28] sm:$0xf]
    %v6094 = vld [vmem:[#allocation10 + $0x2c] sm:$0xf]
    %v6095 = vld [vmem:[#allocation10 + $0x30] sm:$0xf]
    %v6096 = vld [vmem:[#allocation10 + $0x34] sm:$0xf]
    %v6097 = vld [vmem:[#allocation10 + $0x38] sm:$0xf]
    %v6098 = vld [vmem:[#allocation10 + $0x3c] sm:$0xf]
    %v6099 = vld [vmem:[%s7 + $0x24] sm:$0x1]
    %v6100 = vlaneseq
    %v6101 = vshrl.u32 %v6100, 7
    %v6102 = vsub.s32 0, %v6101
    %v6103 = vrot.slane %v6099, %v6102
    %v6120 = vunpack.c.l.b16 %v6083
    %v6121 = vunpack.c.l.b16 %v6084
    %v6122 = vunpack.c.l.b16 %v6085
    %v6123 = vunpack.c.l.b16 %v6086
    %v6124 = vunpack.c.l.b16 %v6087
    %v6125 = vunpack.c.l.b16 %v6088
    %v6126 = vunpack.c.l.b16 %v6089
    %v6127 = vunpack.c.l.b16 %v6090
    %v6128 = vunpack.c.l.b16 %v6091
    %v6129 = vunpack.c.l.b16 %v6092
    %v6130 = vunpack.c.l.b16 %v6093
    %v6131 = vunpack.c.l.b16 %v6094
    %v6132 = vunpack.c.l.b16 %v6095
    %v6133 = vunpack.c.l.b16 %v6096
    %v6134 = vunpack.c.l.b16 %v6097
    %v6135 = vunpack.c.l.b16 %v6098
    %v6136 = vpack.c.b16 %v6121, %v6120
    %v6137 = vpack.c.b16 %v6123, %v6122
    %v6138 = vpack.c.b16 %v6125, %v6124
    %v6139 = vpack.c.b16 %v6127, %v6126
    %v6140 = vpack.c.b16 %v6129, %v6128
    %v6141 = vpack.c.b16 %v6131, %v6130
    %v6142 = vpack.c.b16 %v6133, %v6132
    %v6143 = vpack.c.b16 %v6135, %v6134
    %6152 = vmatprep.subr.bf16.mxu0 0
    %6153 = vmatpush1.bf16.msra.mxu0 %v6136
    %6154 = vmatprep.subr.bf16.mxu0 0
    %6155 = vmatpush1.bf16.msra.mxu0 %v6137
    %6156 = vmatprep.subr.bf16.mxu0 0
    %6157 = vmatpush1.bf16.msra.mxu0 %v6138
    %6158 = vmatprep.subr.bf16.mxu0 0
    %6159 = vmatpush1.bf16.msra.mxu0 %v6139
    %6160 = vmatprep.subr.bf16.mxu0 0
    %6161 = vmatpush1.bf16.msra.mxu0 %v6140
    %6162 = vmatprep.subr.bf16.mxu0 0
    %6163 = vmatpush1.bf16.msra.mxu0 %v6141
    %6164 = vmatprep.subr.bf16.mxu0 0
    %6165 = vmatpush1.bf16.msra.mxu0 %v6142
    %6166 = vmatprep.subr.bf16.mxu0 0
    %6167 = vmatpush1.bf16.msra.mxu0 %v6143
    %6168 = vmatprep.subr.bf16.mxu0 0
    %6169 = vmatpush1.bf16.msra.mxu0 0
    %6170 = vmatprep.subr.bf16.mxu0 0
    %6171 = vmatpush1.bf16.msra.mxu0 0
    %6172 = vmatprep.subr.bf16.mxu0 0
    %6173 = vmatpush1.bf16.msra.mxu0 0
    %6174 = vmatprep.subr.bf16.mxu0 0
    %6175 = vmatpush1.bf16.msra.mxu0 0
    %6176 = vmatprep.subr.bf16.mxu0 0
    %6177 = vmatpush1.bf16.msra.mxu0 0
    %6178 = vmatprep.subr.bf16.mxu0 0
    %6179 = vmatpush1.bf16.msra.mxu0 0
    %6180 = vmatprep.subr.bf16.mxu0 0
    %6181 = vmatpush1.bf16.msra.mxu0 0
    %6182 = vmatprep.subr.bf16.mxu0 0
    %6183 = vmatpush1.bf16.msra.mxu0 0
    %6184 = vmatprep.mubr.bf16.mxu0 0
    %6185 = vmatmul.mubr.bf16.gmra.mrb[0].mxu0 %v6067
    %v6186 = vpop.f32.mrb[0].mxu0
    %v6187 = vadd.f32 %v6103, %v6186
    %v6188 = vpop.f32.mrb[0].mxu0
    %v6189 = vpop.f32.mrb[0].mxu0
    %v6190 = vadd.f32 %v6103, %v6189
    %v6191 = vpop.f32.mrb[0].mxu0
    %6192 = vmatprep.mubr.bf16.mxu0 0
    %6193 = vmatmul.mubr.bf16.gmra.mrb[0].mxu0 %v6068
    %v6194 = vpop.f32.mrb[0].mxu0
    %v6195 = vadd.f32 %v6103, %v6194
    %v6196 = vpop.f32.mrb[0].mxu0
    %v6197 = vpop.f32.mrb[0].mxu0
    %v6198 = vadd.f32 %v6103, %v6197
    %v6199 = vpop.f32.mrb[0].mxu0
    %6200 = vmatprep.mubr.bf16.mxu0 0
    %6201 = vmatmul.mubr.bf16.gmra.mrb[0].mxu0 %v6069
    %v6202 = vpop.f32.mrb[0].mxu0
    %v6203 = vadd.f32 %v6103, %v6202
    %v6204 = vpop.f32.mrb[0].mxu0
    %v6205 = vpop.f32.mrb[0].mxu0
    %v6206 = vadd.f32 %v6103, %v6205
    %v6207 = vpop.f32.mrb[0].mxu0
    %6208 = vmatprep.mubr.bf16.mxu0 0
    %6209 = vmatmul.mubr.bf16.gmra.mrb[0].mxu0 %v6070
    %v6210 = vpop.f32.mrb[0].mxu0
    %v6211 = vadd.f32 %v6103, %v6210
    %v6212 = vpop.f32.mrb[0].mxu0
    %v6213 = vpop.f32.mrb[0].mxu0
    %v6214 = vadd.f32 %v6103, %v6213
    %v6215 = vpop.f32.mrb[0].mxu0
    %6216 = vmatprep.mubr.bf16.mxu0 0
    %6217 = vmatmul.mubr.bf16.gmra.mrb[0].mxu0 %v6071
    %v6218 = vpop.f32.mrb[0].mxu0
    %v6219 = vadd.f32 %v6103, %v6218
    %v6220 = vpop.f32.mrb[0].mxu0
    %v6221 = vpop.f32.mrb[0].mxu0
    %v6222 = vadd.f32 %v6103, %v6221
    %v6223 = vpop.f32.mrb[0].mxu0
    %6224 = vmatprep.mubr.bf16.mxu0 0
    %6225 = vmatmul.mubr.bf16.gmra.mrb[0].mxu0 %v6072
    %v6226 = vpop.f32.mrb[0].mxu0
    %v6227 = vadd.f32 %v6103, %v6226
    %v6228 = vpop.f32.mrb[0].mxu0
    %v6229 = vpop.f32.mrb[0].mxu0
    %v6230 = vadd.f32 %v6103, %v6229
    %v6231 = vpop.f32.mrb[0].mxu0
    %6232 = vmatprep.mubr.bf16.mxu0 0
    %6233 = vmatmul.mubr.bf16.gmra.mrb[0].mxu0 %v6073
    %v6234 = vpop.f32.mrb[0].mxu0
    %v6235 = vadd.f32 %v6103, %v6234
    %v6236 = vpop.f32.mrb[0].mxu0
    %v6237 = vpop.f32.mrb[0].mxu0
    %v6238 = vadd.f32 %v6103, %v6237
    %v6239 = vpop.f32.mrb[0].mxu0
    %6240 = vmatprep.mubr.bf16.mxu0 0
    %6241 = vmatmul.mubr.bf16.gmra.mrb[0].mxu0 %v6074
    %v6242 = vpop.f32.mrb[0].mxu0
    %v6243 = vadd.f32 %v6103, %v6242
    %v6244 = vpop.f32.mrb[0].mxu0
    %v6245 = vpop.f32.mrb[0].mxu0
    %v6246 = vadd.f32 %v6103, %v6245
    %v6247 = vpop.f32.mrb[0].mxu0
    %6248 = vmatprep.mubr.bf16.mxu0 0
    %6249 = vmatmul.mubr.bf16.gmra.mrb[0].mxu0 %v6075
    %v6250 = vpop.f32.mrb[0].mxu0
    %v6251 = vadd.f32 %v6103, %v6250
    %v6252 = vpop.f32.mrb[0].mxu0
    %v6253 = vpop.f32.mrb[0].mxu0
    %v6254 = vadd.f32 %v6103, %v6253
    %v6255 = vpop.f32.mrb[0].mxu0
    %6256 = vmatprep.mubr.bf16.mxu0 0
    %6257 = vmatmul.mubr.bf16.gmra.mrb[0].mxu0 %v6076
    %v6258 = vpop.f32.mrb[0].mxu0
    %v6259 = vadd.f32 %v6103, %v6258
    %v6260 = vpop.f32.mrb[0].mxu0
    %v6261 = vpop.f32.mrb[0].mxu0
    %v6262 = vadd.f32 %v6103, %v6261
    %v6263 = vpop.f32.mrb[0].mxu0
    %6264 = vmatprep.mubr.bf16.mxu0 0
    %6265 = vmatmul.mubr.bf16.gmra.mrb[0].mxu0 %v6077
    %v6266 = vpop.f32.mrb[0].mxu0
    %v6267 = vadd.f32 %v6103, %v6266
    %v6268 = vpop.f32.mrb[0].mxu0
    %v6269 = vpop.f32.mrb[0].mxu0
    %v6270 = vadd.f32 %v6103, %v6269
    %v6271 = vpop.f32.mrb[0].mxu0
    %6272 = vmatprep.mubr.bf16.mxu0 0
    %6273 = vmatmul.mubr.bf16.gmra.mrb[0].mxu0 %v6078
    %v6274 = vpop.f32.mrb[0].mxu0
    %v6275 = vadd.f32 %v6103, %v6274
    %v6276 = vpop.f32.mrb[0].mxu0
    %v6277 = vpop.f32.mrb[0].mxu0
    %v6278 = vadd.f32 %v6103, %v6277
    %v6279 = vpop.f32.mrb[0].mxu0
    %6280 = vmatprep.mubr.bf16.mxu0 0
    %6281 = vmatmul.mubr.bf16.gmra.mrb[0].mxu0 %v6079
    %v6282 = vpop.f32.mrb[0].mxu0
    %v6283 = vadd.f32 %v6103, %v6282
    %v6284 = vpop.f32.mrb[0].mxu0
    %v6285 = vpop.f32.mrb[0].mxu0
    %v6286 = vadd.f32 %v6103, %v6285
    %v6287 = vpop.f32.mrb[0].mxu0
    %6288 = vmatprep.mubr.bf16.mxu0 0
    %6289 = vmatmul.mubr.bf16.gmra.mrb[0].mxu0 %v6080
    %v6290 = vpop.f32.mrb[0].mxu0
    %v6291 = vadd.f32 %v6103, %v6290
    %v6292 = vpop.f32.mrb[0].mxu0
    %v6293 = vpop.f32.mrb[0].mxu0
    %v6294 = vadd.f32 %v6103, %v6293
    %v6295 = vpop.f32.mrb[0].mxu0
    %6296 = vmatprep.mubr.bf16.mxu0 0
    %6297 = vmatmul.mubr.bf16.gmra.mrb[0].mxu0 %v6081
    %v6298 = vpop.f32.mrb[0].mxu0
    %v6299 = vadd.f32 %v6103, %v6298
    %v6300 = vpop.f32.mrb[0].mxu0
    %v6301 = vpop.f32.mrb[0].mxu0
    %v6302 = vadd.f32 %v6103, %v6301
    %v6303 = vpop.f32.mrb[0].mxu0
    %6304 = vmatprep.mubr.bf16.mxu0 0
    %6305 = vmatmul.mubr.bf16.gmra.mrb[0].mxu0 %v6082
    %v6306 = vpop.f32.mrb[0].mxu0
    %v6307 = vadd.f32 %v6103, %v6306
    %v6308 = vpop.f32.mrb[0].mxu0
    %v6309 = vpop.f32.mrb[0].mxu0
    %v6310 = vadd.f32 %v6103, %v6309
    %v6311 = vpop.f32.mrb[0].mxu0
    %6312 = vdwg.mxu0
    %6313 = vst [vmem:[#allocation11] sm:$0xff] %v6187
    %6314 = vst [vmem:[#allocation11 + $0x8] sm:$0xff] %v6190
    %6315 = vst [vmem:[#allocation11 + $0x10] sm:$0xff] %v6195
    %6316 = vst [vmem:[#allocation11 + $0x18] sm:$0xff] %v6198
    %6317 = vst [vmem:[#allocation11 + $0x20] sm:$0xff] %v6203
    %6318 = vst [vmem:[#allocation11 + $0x28] sm:$0xff] %v6206
    %6319 = vst [vmem:[#allocation11 + $0x30] sm:$0xff] %v6211
    %6320 = vst [vmem:[#allocation11 + $0x38] sm:$0xff] %v6214
    %6321 = vst [vmem:[#allocation11 + $0x40] sm:$0xff] %v6219
    %6322 = vst [vmem:[#allocation11 + $0x48] sm:$0xff] %v6222
    %6323 = vst [vmem:[#allocation11 + $0x50] sm:$0xff] %v6227
    %6324 = vst [vmem:[#allocation11 + $0x58] sm:$0xff] %v6230
    %6325 = vst [vmem:[#allocation11 + $0x60] sm:$0xff] %v6235
    %6326 = vst [vmem:[#allocation11 + $0x68] sm:$0xff] %v6238
    %6327 = vst [vmem:[#allocation11 + $0x70] sm:$0xff] %v6243
    %6328 = vst [vmem:[#allocation11 + $0x78] sm:$0xff] %v6246
    %6329 = vst [vmem:[#allocation11 + $0x80] sm:$0xff] %v6251
    %6330 = vst [vmem:[#allocation11 + $0x88] sm:$0xff] %v6254
    %6331 = vst [vmem:[#allocation11 + $0x90] sm:$0xff] %v6259
    %6332 = vst [vmem:[#allocation11 + $0x98] sm:$0xff] %v6262
    %6333 = vst [vmem:[#allocation11 + $0xa0] sm:$0xff] %v6267
    %6334 = vst [vmem:[#allocation11 + $0xa8] sm:$0xff] %v6270
    %6335 = vst [vmem:[#allocation11 + $0xb0] sm:$0xff] %v6275
    %6336 = vst [vmem:[#allocation11 + $0xb8] sm:$0xff] %v6278
    %6337 = vst [vmem:[#allocation11 + $0xc0] sm:$0xff] %v6283
    %6338 = vst [vmem:[#allocation11 + $0xc8] sm:$0xff] %v6286
    %6339 = vst [vmem:[#allocation11 + $0xd0] sm:$0xff] %v6291
    %6340 = vst [vmem:[#allocation11 + $0xd8] sm:$0xff] %v6294
    %6341 = vst [vmem:[#allocation11 + $0xe0] sm:$0xff] %v6299
    %6342 = vst [vmem:[#allocation11 + $0xe8] sm:$0xff] %v6302
    %6343 = vst [vmem:[#allocation11 + $0xf0] sm:$0xff] %v6307
    %6344 = vst [vmem:[#allocation11 + $0xf8] sm:$0xff] %v6310
    // Predicated region
    $region54: #{tpu_custom_call.1} parent=1 // pred_check
      _
    $region55: #{tpu_custom_call.1} parent=1 // pred_check_branch
      %6346 = sbr.rel (0) target = $region57
    $region56: #{tpu_custom_call.1} parent=1 // pred_region
      %s6348 = ssub.s32 4096, 4096
      %6349 = vsyncadd [#allocation4], %s6348
      %s6350 = sshll.u32 [#allocation11], 4
      %s6351 = int_to_ptr.vmem [resolvable:$true] %s6350
      %6356 = dma.vmem_to_hbm [thread:$0]  %s6351, 4096, %s8, [#allocation4], 128, 128, 8
    $region57: #{tpu_custom_call.1} parent=1 // pred_fallthru
      _
    // Predicated region
    $region58: #{tpu_custom_call.1} parent=1 // pred_check
      _
    $region59: #{tpu_custom_call.1} parent=1 // pred_check_branch
      %6358 = sbr.rel (0) target = $region61
    $region60: #{tpu_custom_call.1} parent=1 // pred_region
      %6359 = dma.done [#allocation4], 4096
    $region61: #{tpu_custom_call.1} parent=1 // pred_fallthru
      _
    %6360 = vsyncpa [#allocation3], 1
    %6361 = vsyncpa [#allocation6], 1
    %6362 = vsyncpa [#allocation9], 1
    %6363 = vsyncpa [#allocation4], 1

</llo_original>
